<compile_context>
chip_gen: v5e
topology: v5e:2x2
jax: 0.10.0
libtpu: 0.0.40
codegen_flags: <defaults>
</compile_context>

<pallas_src>
import functools

import jax
import jax.numpy as jnp
from jax.experimental import pallas as pl
from jax.experimental.pallas import tpu as pltpu


# ----------------------------- tiling helpers -----------------------------

def _pick_tile_m(M, Kdim, *, elem_bytes=2, budget_bytes=4 << 20):
    """Largest power-of-two M-tile <= 2048 that divides M and keeps the
    double-buffered A^T tile (Kdim x tm) under `budget_bytes`."""
    cap = 2048
    while cap > 128 and Kdim * cap * elem_bytes * 2 > budget_bytes:
        cap //= 2
    tm = min(M, cap)
    while tm > 1 and M % tm != 0:
        tm //= 2
    assert M % tm == 0
    return tm


# ----------------------------- Pallas kernels -----------------------------

def _convt_gemm_kernel(at_ref, bt_ref, bias_ref, *out_refs, act, with_stats):
    """Fused (Cout, tm) = B^T @ A^T tile + bias (+tanh) + partial BN stats.

    at_ref:   (Kdim, tm)   bf16  transposed im2col tile (lane axis = pixels)
    bt_ref:   (Cout, Kdim) bf16  stride-1-equivalent (flipped) conv weight
    bias_ref: (Cout, 1)    f32
    out_refs: y (Cout, tm) f32 [, sum (1, Cout, 1), sumsq (1, Cout, 1)]
    """
    y = jnp.dot(bt_ref[...], at_ref[...], preferred_element_type=jnp.float32)
    y = y + bias_ref[...]
    if act == "tanh":
        y = jnp.tanh(y)                      # EUP slot; co-issues with MXU work
    out_refs[0][...] = y                     # lane-dense (tm-wide) store
    if with_stats:
        # Per-tile partial stats on the f32 accumulator: no second HBM pass
        # over y and no cross-step accumulator, so the grid axis stays
        # "parallel" (v7x 2-TC safe).
        out_refs[1][...] = jnp.sum(y, axis=1, keepdims=True)[None]
        out_refs[2][...] = jnp.sum(y * y, axis=1, keepdims=True)[None]


def convt_gemm(At, Bt, bias_col, *, act, with_stats):
    """Y^T = B^T @ A^T with fused bias (+tanh) and optional partial BN stats.

    At: (Kdim, M) bf16, Bt: (Cout, Kdim) bf16, bias_col: (Cout, 1) f32.
    Returns a tuple: (y (Cout, M) f32 [, psum (G,Cout,1), psumsq (G,Cout,1)]).
    """
    Kdim, M = At.shape
    Cout = Bt.shape[0]
    tm = _pick_tile_m(M, Kdim)               # large lane-dense tiles
    grid = M // tm

    out_shape = [jax.ShapeDtypeStruct((Cout, M), jnp.float32)]
    out_specs = [pl.BlockSpec((Cout, tm), lambda j: (0, j))]
    if with_stats:
        out_shape += [jax.ShapeDtypeStruct((grid, Cout, 1), jnp.float32)] * 2
        out_specs += [pl.BlockSpec((1, Cout, 1), lambda j: (j, 0, 0))] * 2

    return pl.pallas_call(
        functools.partial(_convt_gemm_kernel, act=act, with_stats=with_stats),
        out_shape=tuple(out_shape),
        grid_spec=pltpu.PrefetchScalarGridSpec(
            num_scalar_prefetch=0,
            grid=(grid,),
            in_specs=[
                pl.BlockSpec((Kdim, tm), lambda j: (0, j)),
                pl.BlockSpec((Cout, Kdim), lambda j: (0, 0)),
                pl.BlockSpec((Cout, 1), lambda j: (0, 0)),
            ],
            out_specs=tuple(out_specs),
        ),
        compiler_params=pltpu.CompilerParams(dimension_semantics=("parallel",)),
    )(At, Bt, bias_col)


def _scale_shift_relu_kernel(y_ref, scale_ref, shift_ref, o_ref):
    z = y_ref[...] * scale_ref[...] + shift_ref[...]
    o_ref[...] = jnp.maximum(z, 0.0).astype(o_ref.dtype)


def scale_shift_relu(y, scale, shift):
    """BatchNorm affine + ReLU on channel-major y (C, M); bf16 output."""
    C, M = y.shape
    tm = _pick_tile_m(M, C, elem_bytes=4)
    return pl.pallas_call(
        _scale_shift_relu_kernel,
        out_shape=jax.ShapeDtypeStruct((C, M), jnp.bfloat16),
        grid_spec=pltpu.PrefetchScalarGridSpec(
            num_scalar_prefetch=0,
            grid=(M // tm,),
            in_specs=[
                pl.BlockSpec((C, tm), lambda j: (0, j)),
                pl.BlockSpec((C, 1), lambda j: (0, 0)),
                pl.BlockSpec((C, 1), lambda j: (0, 0)),
            ],
            out_specs=pl.BlockSpec((C, tm), lambda j: (0, j)),
        ),
        compiler_params=pltpu.CompilerParams(dimension_semantics=("parallel",)),
    )(y, scale, shift)


# ----------------------------- JAX glue -----------------------------------

def convt_layer(x_cnhw, w, bias, stride, padding, *, act, with_stats):
    """ConvTranspose2d (PyTorch semantics) on channel-major (Cin, N, H, W).

    Rewritten as a stride-1 convolution over a zero-stuffed / padded input and
    lowered to a single transposed im2col GEMM on the MXU.
    """
    Cin, N, H, W = x_cnhw.shape
    _, Cout, K, _ = w.shape
    # 1) dilate spatially by `stride` (zero-stuff), pad by K-1-padding.
    if stride > 1:
        Hd, Wd = (H - 1) * stride + 1, (W - 1) * stride + 1
        xd = jnp.zeros((Cin, N, Hd, Wd), x_cnhw.dtype)
        xd = xd.at[:, :, ::stride, ::stride].set(x_cnhw)
    else:
        Hd, Wd = H, W
        xd = x_cnhw
    p = K - 1 - padding
    xp = jnp.pad(xd, ((0, 0), (0, 0), (p, p), (p, p)))
    OH, OW = Hd + 2 * p - K + 1, Wd + 2 * p - K + 1
    # 2) transposed im2col: At[(ci,kh,kw), (n,oh,ow)] = xp[ci, n, oh+kh, ow+kw]
    # TODO(synk): pull this overlapping-window gather into the GEMM kernel via
    # manual halo DMA (pl.ANY + make_async_copy); it is not expressible with a
    # plain BlockSpec. At these sizes A^T is <= ~2 MiB, so it stays as one XLA
    # copy feeding the kernel.
    taps = [xp[:, :, kh:kh + OH, kw:kw + OW]
            for kh in range(K) for kw in range(K)]
    At = jnp.stack(taps, axis=1).reshape(Cin * K * K, N * OH * OW)
    # 3) equivalent stride-1 conv weight, transposed for the (Cout, M) GEMM:
    #    Bt[co, (ci, kh, kw)] = w[ci, co, K-1-kh, K-1-kw]
    Bt = jnp.flip(w, axis=(2, 3)).transpose(1, 0, 2, 3).reshape(Cout, Cin * K * K)
    outs = convt_gemm(At.astype(jnp.bfloat16), Bt.astype(jnp.bfloat16),
                      bias.astype(jnp.float32).reshape(Cout, 1),
                      act=act, with_stats=with_stats)
    return outs, (Cout, N, OH, OW)


def generator_forward(params, x, labels):
    # Module boundary: x is NCHW (N, latent_channels, 1, 1); labels (N,) int.
    N = x.shape[0]
    emb = params["embed"][labels]                               # (N, E)
    z = jnp.concatenate([x.reshape(N, -1), emb], axis=1)        # (N, L+E)
    # Channel-major (C, N, H, W) activations throughout; bf16 GEMM operands.
    h = z.T.reshape(-1, N, 1, 1).astype(jnp.bfloat16)

    for i, (stride, padding) in enumerate([(1, 0), (2, 1), (2, 1), (2, 1)]):
        w, b, gamma, beta = params[f"block{i}"]
        (y, psum, psq), (Cout, n, OH, OW) = convt_layer(
            h, w, b, stride, padding, act=None, with_stats=True)
        M = n * OH * OW
        # Training-mode BatchNorm2d (biased batch stats, eps=1e-5) from the
        # fused per-tile partials; clamp var >= 0 against cancellation.
        mean = psum.sum(axis=0)[:, 0] / M
        var = jnp.maximum(psq.sum(axis=0)[:, 0] / M - mean * mean, 0.0)
        inv = jax.lax.rsqrt(var + 1e-5)
        scale = (gamma * inv)[:, None]                          # (Cout, 1)
        shift = (beta - mean * gamma * inv)[:, None]            # (Cout, 1)
        h = scale_shift_relu(y, scale, shift).reshape(Cout, n, OH, OW)

    w, b = params["final"]
    (y,), (Cout, n, OH, OW) = convt_layer(h, w, b, 2, 1, act="tanh",
                                          with_stats=False)
    # Back to NCHW only at the module boundary.
    return y.reshape(Cout, n, OH, OW).transpose(1, 0, 2, 3)


def init_params(key, latent_channels, hidden_channels, img_channels,
                num_classes, embed_size):
    hc = hidden_channels
    chans = [latent_channels + embed_size, hc * 16, hc * 8, hc * 4, hc * 2,
             img_channels]
    params = {}
    keys = jax.random.split(key, 20)
    ki = 0
    for i in range(4):
        cin, cout = chans[i], chans[i + 1]
        w = 0.05 * jax.random.normal(keys[ki], (cin, cout, 4, 4), jnp.float32); ki += 1
        b = 0.05 * jax.random.normal(keys[ki], (cout,), jnp.float32); ki += 1
        g = 1.0 + 0.1 * jax.random.normal(keys[ki], (cout,), jnp.float32); ki += 1
        be = 0.1 * jax.random.normal(keys[ki], (cout,), jnp.float32); ki += 1
        params[f"block{i}"] = (w, b, g, be)
    cin, cout = chans[4], chans[5]
    w = 0.05 * jax.random.normal(keys[ki], (cin, cout, 4, 4), jnp.float32); ki += 1
    b = 0.05 * jax.random.normal(keys[ki], (cout,), jnp.float32); ki += 1
    params["final"] = (w, b)
    params["embed"] = jax.random.normal(keys[ki], (num_classes, embed_size),
                                        jnp.float32)
    return params


if __name__ == "__main__":
    latent_channels, hidden_channels, img_channels = 4, 4, 3
    num_classes, img_size, embed_size = 10, 64, 4
    N = 2

    key = jax.random.PRNGKey(0)
    kp, kx, kl = jax.random.split(key, 3)
    params = init_params(kp, latent_channels, hidden_channels, img_channels,
                         num_classes, embed_size)
    x = jax.random.normal(kx, (N, latent_channels, 1, 1), jnp.float32)
    labels = jax.random.randint(kl, (N,), 0, num_classes)

    out = jax.jit(generator_forward)(params, x, labels)
    out = jax.block_until_ready(out)
    assert out.shape == (N, img_channels, img_size, img_size), out.shape
    assert bool(jnp.all(jnp.isfinite(out)))
    print("KERNEL_OK")
</pallas_src>

<mosaic_0001>
module attributes {stable_mosaic.version = 11 : i64} {
  func.func @_convt_gemm_kernel(%arg0: i32, %arg1: memref<128x32xbf16, #tpu.memory_space<vmem>>, %arg2: memref<64x128xbf16, #tpu.memory_space<vmem>>, %arg3: memref<64x1xf32, #tpu.memory_space<vmem>>, %arg4: memref<64x32xf32, #tpu.memory_space<vmem>>, %arg5: memref<1x64x1xf32, #tpu.memory_space<vmem>>, %arg6: memref<1x64x1xf32, #tpu.memory_space<vmem>>) attributes {dimension_semantics = [#tpu.dimension_semantics<parallel>], iteration_bounds = array<i64: 1>, scalar_prefetch = 0 : i64, scratch_operands = 0 : i64, tpu.core_type = #tpu.core_type<tc>, window_params = [{transform_indices = @transform_0, window_bounds = array<i64: 128, 32>}, {pipeline_mode = #tpu.pipeline_mode<synchronous>, transform_indices = @transform_1, window_bounds = array<i64: 64, 128>}, {pipeline_mode = #tpu.pipeline_mode<synchronous>, transform_indices = @transform_2, window_bounds = array<i64: 64, 1>}, {transform_indices = @transform_3, window_bounds = array<i64: 64, 32>}, {transform_indices = @transform_4, window_bounds = array<i64: 1, 64, 1>}, {transform_indices = @transform_5, window_bounds = array<i64: 1, 64, 1>}]} {
    %c0 = arith.constant 0 : index
    %c0_0 = arith.constant 0 : index
    %0 = vector.load %arg2[%c0, %c0_0] : memref<64x128xbf16, #tpu.memory_space<vmem>>, vector<64x128xbf16>
    %c0_1 = arith.constant 0 : index
    %c0_2 = arith.constant 0 : index
    %1 = vector.load %arg1[%c0_1, %c0_2] : memref<128x32xbf16, #tpu.memory_space<vmem>>, vector<128x32xbf16>
    %cst = arith.constant dense<0.000000e+00> : vector<64x32xf32>
    %2 = tpu.matmul %0, %1, %cst {dimension_numbers = #tpu.dot_dimension_numbers<[1], [0], [0], [1], [0, 0, 1, 1], [], []>} : vector<64x128xbf16>, vector<128x32xbf16>, vector<64x32xf32> -> vector<64x32xf32>
    %c0_3 = arith.constant 0 : index
    %c0_4 = arith.constant 0 : index
    %3 = vector.load %arg3[%c0_3, %c0_4] : memref<64x1xf32, #tpu.memory_space<vmem>>, vector<64x1xf32>
    %4 = vector.broadcast %3 : vector<64x1xf32> to vector<64x32xf32>
    %5 = arith.addf %2, %4 : vector<64x32xf32>
    %c0_5 = arith.constant 0 : index
    %c0_6 = arith.constant 0 : index
    %6 = vector.load %arg4[%c0_5, %c0_6] : memref<64x32xf32, #tpu.memory_space<vmem>>, vector<64x32xf32>
    tpu.vector_store %arg4[%c0_5, %c0_6], %5 {strides = array<i32>} : memref<64x32xf32, #tpu.memory_space<vmem>>, vector<64x32xf32>,
    %cst_7 = arith.constant dense<0.000000e+00> : vector<64xf32>
    %7 = vector.multi_reduction <add>, %5, %cst_7 [1] : vector<64x32xf32> to vector<64xf32>
    %8 = vector.shape_cast %7 : vector<64xf32> to vector<64x1xf32>
    %9 = vector.shape_cast %8 : vector<64x1xf32> to vector<1x64x1xf32>
    %c0_8 = arith.constant 0 : index
    %c0_9 = arith.constant 0 : index
    %c0_10 = arith.constant 0 : index
    %10 = vector.load %arg5[%c0_8, %c0_9, %c0_10] : memref<1x64x1xf32, #tpu.memory_space<vmem>>, vector<1x64x1xf32>
    tpu.vector_store %arg5[%c0_8, %c0_9, %c0_10], %9 {strides = array<i32>} : memref<1x64x1xf32, #tpu.memory_space<vmem>>, vector<1x64x1xf32>,
    %11 = arith.mulf %5, %5 : vector<64x32xf32>
    %cst_11 = arith.constant dense<0.000000e+00> : vector<64xf32>
    %12 = vector.multi_reduction <add>, %11, %cst_11 [1] : vector<64x32xf32> to vector<64xf32>
    %13 = vector.shape_cast %12 : vector<64xf32> to vector<64x1xf32>
    %14 = vector.shape_cast %13 : vector<64x1xf32> to vector<1x64x1xf32>
    %c0_12 = arith.constant 0 : index
    %c0_13 = arith.constant 0 : index
    %c0_14 = arith.constant 0 : index
    %15 = vector.load %arg6[%c0_12, %c0_13, %c0_14] : memref<1x64x1xf32, #tpu.memory_space<vmem>>, vector<1x64x1xf32>
    tpu.vector_store %arg6[%c0_12, %c0_13, %c0_14], %14 {strides = array<i32>} : memref<1x64x1xf32, #tpu.memory_space<vmem>>, vector<1x64x1xf32>,
    return
  }
  func.func @transform_0(%arg0: i32) -> (i32, i32) {
    %c0_i32 = arith.constant 0 : i32
    %c0_i32_0 = arith.constant 0 : i32
    return %c0_i32, %arg0 : i32, i32
  }
  func.func @transform_1(%arg0: i32) -> (i32, i32) {
    %c0_i32 = arith.constant 0 : i32
    %c0_i32_0 = arith.constant 0 : i32
    %c0_i32_1 = arith.constant 0 : i32
    return %c0_i32, %c0_i32_0 : i32, i32
  }
  func.func @transform_2(%arg0: i32) -> (i32, i32) {
    %c0_i32 = arith.constant 0 : i32
    %c0_i32_0 = arith.constant 0 : i32
    %c0_i32_1 = arith.constant 0 : i32
    return %c0_i32, %c0_i32_0 : i32, i32
  }
  func.func @transform_3(%arg0: i32) -> (i32, i32) {
    %c0_i32 = arith.constant 0 : i32
    %c0_i32_0 = arith.constant 0 : i32
    return %c0_i32, %arg0 : i32, i32
  }
  func.func @transform_4(%arg0: i32) -> (i32, i32, i32) {
    %c0_i32 = arith.constant 0 : i32
    %c0_i32_0 = arith.constant 0 : i32
    %c0_i32_1 = arith.constant 0 : i32
    return %arg0, %c0_i32, %c0_i32_0 : i32, i32, i32
  }
  func.func @transform_5(%arg0: i32) -> (i32, i32, i32) {
    %c0_i32 = arith.constant 0 : i32
    %c0_i32_0 = arith.constant 0 : i32
    %c0_i32_1 = arith.constant 0 : i32
    return %arg0, %c0_i32, %c0_i32_0 : i32, i32, i32
  }
}

module attributes {stable_mosaic.version = 11 : i64} {
  func.func @_scale_shift_relu_kernel(%arg0: i32, %arg1: memref<64x32xf32, #tpu.memory_space<vmem>>, %arg2: memref<64x1xf32, #tpu.memory_space<vmem>>, %arg3: memref<64x1xf32, #tpu.memory_space<vmem>>, %arg4: memref<64x32xbf16, #tpu.memory_space<vmem>>) attributes {dimension_semantics = [#tpu.dimension_semantics<parallel>], iteration_bounds = array<i64: 1>, scalar_prefetch = 0 : i64, scratch_operands = 0 : i64, tpu.core_type = #tpu.core_type<tc>, window_params = [{transform_indices = @transform_0, window_bounds = array<i64: 64, 32>}, {pipeline_mode = #tpu.pipeline_mode<synchronous>, transform_indices = @transform_1, window_bounds = array<i64: 64, 1>}, {pipeline_mode = #tpu.pipeline_mode<synchronous>, transform_indices = @transform_2, window_bounds = array<i64: 64, 1>}, {transform_indices = @transform_3, window_bounds = array<i64: 64, 32>}]} {
    %c0 = arith.constant 0 : index
    %c0_0 = arith.constant 0 : index
    %0 = vector.load %arg1[%c0, %c0_0] : memref<64x32xf32, #tpu.memory_space<vmem>>, vector<64x32xf32>
    %c0_1 = arith.constant 0 : index
    %c0_2 = arith.constant 0 : index
    %1 = vector.load %arg2[%c0_1, %c0_2] : memref<64x1xf32, #tpu.memory_space<vmem>>, vector<64x1xf32>
    %2 = vector.broadcast %1 : vector<64x1xf32> to vector<64x32xf32>
    %3 = arith.mulf %0, %2 : vector<64x32xf32>
    %c0_3 = arith.constant 0 : index
    %c0_4 = arith.constant 0 : index
    %4 = vector.load %arg3[%c0_3, %c0_4] : memref<64x1xf32, #tpu.memory_space<vmem>>, vector<64x1xf32>
    %5 = vector.broadcast %4 : vector<64x1xf32> to vector<64x32xf32>
    %6 = arith.addf %3, %5 : vector<64x32xf32>
    %cst = arith.constant 0.000000e+00 : f32
    %7 = vector.broadcast %cst : f32 to vector<64x32xf32>
    %8 = arith.maximumf %6, %7 : vector<64x32xf32>
    %9 = arith.truncf %8 : vector<64x32xf32> to vector<64x32xbf16>
    %c0_5 = arith.constant 0 : index
    %c0_6 = arith.constant 0 : index
    %10 = vector.load %arg4[%c0_5, %c0_6] : memref<64x32xbf16, #tpu.memory_space<vmem>>, vector<64x32xbf16>
    tpu.vector_store %arg4[%c0_5, %c0_6], %9 {strides = array<i32>} : memref<64x32xbf16, #tpu.memory_space<vmem>>, vector<64x32xbf16>,
    return
  }
  func.func @transform_0(%arg0: i32) -> (i32, i32) {
    %c0_i32 = arith.constant 0 : i32
    %c0_i32_0 = arith.constant 0 : i32
    return %c0_i32, %arg0 : i32, i32
  }
  func.func @transform_1(%arg0: i32) -> (i32, i32) {
    %c0_i32 = arith.constant 0 : i32
    %c0_i32_0 = arith.constant 0 : i32
    %c0_i32_1 = arith.constant 0 : i32
    return %c0_i32, %c0_i32_0 : i32, i32
  }
  func.func @transform_2(%arg0: i32) -> (i32, i32) {
    %c0_i32 = arith.constant 0 : i32
    %c0_i32_0 = arith.constant 0 : i32
    %c0_i32_1 = arith.constant 0 : i32
    return %c0_i32, %c0_i32_0 : i32, i32
  }
  func.func @transform_3(%arg0: i32) -> (i32, i32) {
    %c0_i32 = arith.constant 0 : i32
    %c0_i32_0 = arith.constant 0 : i32
    return %c0_i32, %arg0 : i32, i32
  }
}

module attributes {stable_mosaic.version = 11 : i64} {
  func.func @_convt_gemm_kernel(%arg0: i32, %arg1: memref<1024x128xbf16, #tpu.memory_space<vmem>>, %arg2: memref<32x1024xbf16, #tpu.memory_space<vmem>>, %arg3: memref<32x1xf32, #tpu.memory_space<vmem>>, %arg4: memref<32x128xf32, #tpu.memory_space<vmem>>, %arg5: memref<1x32x1xf32, #tpu.memory_space<vmem>>, %arg6: memref<1x32x1xf32, #tpu.memory_space<vmem>>) attributes {dimension_semantics = [#tpu.dimension_semantics<parallel>], iteration_bounds = array<i64: 1>, scalar_prefetch = 0 : i64, scratch_operands = 0 : i64, tpu.core_type = #tpu.core_type<tc>, window_params = [{transform_indices = @transform_0, window_bounds = array<i64: 1024, 128>}, {pipeline_mode = #tpu.pipeline_mode<synchronous>, transform_indices = @transform_1, window_bounds = array<i64: 32, 1024>}, {pipeline_mode = #tpu.pipeline_mode<synchronous>, transform_indices = @transform_2, window_bounds = array<i64: 32, 1>}, {transform_indices = @transform_3, window_bounds = array<i64: 32, 128>}, {transform_indices = @transform_4, window_bounds = array<i64: 1, 32, 1>}, {transform_indices = @transform_5, window_bounds = array<i64: 1, 32, 1>}]} {
    %c0 = arith.constant 0 : index
    %c0_0 = arith.constant 0 : index
    %0 = vector.load %arg2[%c0, %c0_0] : memref<32x1024xbf16, #tpu.memory_space<vmem>>, vector<32x1024xbf16>
    %c0_1 = arith.constant 0 : index
    %c0_2 = arith.constant 0 : index
    %1 = vector.load %arg1[%c0_1, %c0_2] : memref<1024x128xbf16, #tpu.memory_space<vmem>>, vector<1024x128xbf16>
    %cst = arith.constant dense<0.000000e+00> : vector<32x128xf32>
    %2 = tpu.matmul %0, %1, %cst {dimension_numbers = #tpu.dot_dimension_numbers<[1], [0], [0], [1], [0, 0, 1, 1], [], []>} : vector<32x1024xbf16>, vector<1024x128xbf16>, vector<32x128xf32> -> vector<32x128xf32>
    %c0_3 = arith.constant 0 : index
    %c0_4 = arith.constant 0 : index
    %3 = vector.load %arg3[%c0_3, %c0_4] : memref<32x1xf32, #tpu.memory_space<vmem>>, vector<32x1xf32>
    %4 = vector.broadcast %3 : vector<32x1xf32> to vector<32x128xf32>
    %5 = arith.addf %2, %4 : vector<32x128xf32>
    %c0_5 = arith.constant 0 : index
    %c0_6 = arith.constant 0 : index
    %6 = vector.load %arg4[%c0_5, %c0_6] : memref<32x128xf32, #tpu.memory_space<vmem>>, vector<32x128xf32>
    tpu.vector_store %arg4[%c0_5, %c0_6], %5 {strides = array<i32>} : memref<32x128xf32, #tpu.memory_space<vmem>>, vector<32x128xf32>,
    %cst_7 = arith.constant dense<0.000000e+00> : vector<32xf32>
    %7 = vector.multi_reduction <add>, %5, %cst_7 [1] : vector<32x128xf32> to vector<32xf32>
    %8 = vector.shape_cast %7 : vector<32xf32> to vector<32x1xf32>
    %9 = vector.shape_cast %8 : vector<32x1xf32> to vector<1x32x1xf32>
    %c0_8 = arith.constant 0 : index
    %c0_9 = arith.constant 0 : index
    %c0_10 = arith.constant 0 : index
    %10 = vector.load %arg5[%c0_8, %c0_9, %c0_10] : memref<1x32x1xf32, #tpu.memory_space<vmem>>, vector<1x32x1xf32>
    tpu.vector_store %arg5[%c0_8, %c0_9, %c0_10], %9 {strides = array<i32>} : memref<1x32x1xf32, #tpu.memory_space<vmem>>, vector<1x32x1xf32>,
    %11 = arith.mulf %5, %5 : vector<32x128xf32>
    %cst_11 = arith.constant dense<0.000000e+00> : vector<32xf32>
    %12 = vector.multi_reduction <add>, %11, %cst_11 [1] : vector<32x128xf32> to vector<32xf32>
    %13 = vector.shape_cast %12 : vector<32xf32> to vector<32x1xf32>
    %14 = vector.shape_cast %13 : vector<32x1xf32> to vector<1x32x1xf32>
    %c0_12 = arith.constant 0 : index
    %c0_13 = arith.constant 0 : index
    %c0_14 = arith.constant 0 : index
    %15 = vector.load %arg6[%c0_12, %c0_13, %c0_14] : memref<1x32x1xf32, #tpu.memory_space<vmem>>, vector<1x32x1xf32>
    tpu.vector_store %arg6[%c0_12, %c0_13, %c0_14], %14 {strides = array<i32>} : memref<1x32x1xf32, #tpu.memory_space<vmem>>, vector<1x32x1xf32>,
    return
  }
  func.func @transform_0(%arg0: i32) -> (i32, i32) {
    %c0_i32 = arith.constant 0 : i32
    %c0_i32_0 = arith.constant 0 : i32
    return %c0_i32, %arg0 : i32, i32
  }
  func.func @transform_1(%arg0: i32) -> (i32, i32) {
    %c0_i32 = arith.constant 0 : i32
    %c0_i32_0 = arith.constant 0 : i32
    %c0_i32_1 = arith.constant 0 : i32
    return %c0_i32, %c0_i32_0 : i32, i32
  }
  func.func @transform_2(%arg0: i32) -> (i32, i32) {
    %c0_i32 = arith.constant 0 : i32
    %c0_i32_0 = arith.constant 0 : i32
    %c0_i32_1 = arith.constant 0 : i32
    return %c0_i32, %c0_i32_0 : i32, i32
  }
  func.func @transform_3(%arg0: i32) -> (i32, i32) {
    %c0_i32 = arith.constant 0 : i32
    %c0_i32_0 = arith.constant 0 : i32
    return %c0_i32, %arg0 : i32, i32
  }
  func.func @transform_4(%arg0: i32) -> (i32, i32, i32) {
    %c0_i32 = arith.constant 0 : i32
    %c0_i32_0 = arith.constant 0 : i32
    %c0_i32_1 = arith.constant 0 : i32
    return %arg0, %c0_i32, %c0_i32_0 : i32, i32, i32
  }
  func.func @transform_5(%arg0: i32) -> (i32, i32, i32) {
    %c0_i32 = arith.constant 0 : i32
    %c0_i32_0 = arith.constant 0 : i32
    %c0_i32_1 = arith.constant 0 : i32
    return %arg0, %c0_i32, %c0_i32_0 : i32, i32, i32
  }
}

module attributes {stable_mosaic.version = 11 : i64} {
  func.func @_scale_shift_relu_kernel(%arg0: i32, %arg1: memref<32x128xf32, #tpu.memory_space<vmem>>, %arg2: memref<32x1xf32, #tpu.memory_space<vmem>>, %arg3: memref<32x1xf32, #tpu.memory_space<vmem>>, %arg4: memref<32x128xbf16, #tpu.memory_space<vmem>>) attributes {dimension_semantics = [#tpu.dimension_semantics<parallel>], iteration_bounds = array<i64: 1>, scalar_prefetch = 0 : i64, scratch_operands = 0 : i64, tpu.core_type = #tpu.core_type<tc>, window_params = [{transform_indices = @transform_0, window_bounds = array<i64: 32, 128>}, {pipeline_mode = #tpu.pipeline_mode<synchronous>, transform_indices = @transform_1, window_bounds = array<i64: 32, 1>}, {pipeline_mode = #tpu.pipeline_mode<synchronous>, transform_indices = @transform_2, window_bounds = array<i64: 32, 1>}, {transform_indices = @transform_3, window_bounds = array<i64: 32, 128>}]} {
    %c0 = arith.constant 0 : index
    %c0_0 = arith.constant 0 : index
    %0 = vector.load %arg1[%c0, %c0_0] : memref<32x128xf32, #tpu.memory_space<vmem>>, vector<32x128xf32>
    %c0_1 = arith.constant 0 : index
    %c0_2 = arith.constant 0 : index
    %1 = vector.load %arg2[%c0_1, %c0_2] : memref<32x1xf32, #tpu.memory_space<vmem>>, vector<32x1xf32>
    %2 = vector.broadcast %1 : vector<32x1xf32> to vector<32x128xf32>
    %3 = arith.mulf %0, %2 : vector<32x128xf32>
    %c0_3 = arith.constant 0 : index
    %c0_4 = arith.constant 0 : index
    %4 = vector.load %arg3[%c0_3, %c0_4] : memref<32x1xf32, #tpu.memory_space<vmem>>, vector<32x1xf32>
    %5 = vector.broadcast %4 : vector<32x1xf32> to vector<32x128xf32>
    %6 = arith.addf %3, %5 : vector<32x128xf32>
    %cst = arith.constant 0.000000e+00 : f32
    %7 = vector.broadcast %cst : f32 to vector<32x128xf32>
    %8 = arith.maximumf %6, %7 : vector<32x128xf32>
    %9 = arith.truncf %8 : vector<32x128xf32> to vector<32x128xbf16>
    %c0_5 = arith.constant 0 : index
    %c0_6 = arith.constant 0 : index
    %10 = vector.load %arg4[%c0_5, %c0_6] : memref<32x128xbf16, #tpu.memory_space<vmem>>, vector<32x128xbf16>
    tpu.vector_store %arg4[%c0_5, %c0_6], %9 {strides = array<i32>} : memref<32x128xbf16, #tpu.memory_space<vmem>>, vector<32x128xbf16>,
    return
  }
  func.func @transform_0(%arg0: i32) -> (i32, i32) {
    %c0_i32 = arith.constant 0 : i32
    %c0_i32_0 = arith.constant 0 : i32
    return %c0_i32, %arg0 : i32, i32
  }
  func.func @transform_1(%arg0: i32) -> (i32, i32) {
    %c0_i32 = arith.constant 0 : i32
    %c0_i32_0 = arith.constant 0 : i32
    %c0_i32_1 = arith.constant 0 : i32
    return %c0_i32, %c0_i32_0 : i32, i32
  }
  func.func @transform_2(%arg0: i32) -> (i32, i32) {
    %c0_i32 = arith.constant 0 : i32
    %c0_i32_0 = arith.constant 0 : i32
    %c0_i32_1 = arith.constant 0 : i32
    return %c0_i32, %c0_i32_0 : i32, i32
  }
  func.func @transform_3(%arg0: i32) -> (i32, i32) {
    %c0_i32 = arith.constant 0 : i32
    %c0_i32_0 = arith.constant 0 : i32
    return %c0_i32, %arg0 : i32, i32
  }
}

module attributes {stable_mosaic.version = 11 : i64} {
  func.func @_convt_gemm_kernel(%arg0: i32, %arg1: memref<512x512xbf16, #tpu.memory_space<vmem>>, %arg2: memref<16x512xbf16, #tpu.memory_space<vmem>>, %arg3: memref<16x1xf32, #tpu.memory_space<vmem>>, %arg4: memref<16x512xf32, #tpu.memory_space<vmem>>, %arg5: memref<1x16x1xf32, #tpu.memory_space<vmem>>, %arg6: memref<1x16x1xf32, #tpu.memory_space<vmem>>) attributes {dimension_semantics = [#tpu.dimension_semantics<parallel>], iteration_bounds = array<i64: 1>, scalar_prefetch = 0 : i64, scratch_operands = 0 : i64, tpu.core_type = #tpu.core_type<tc>, window_params = [{transform_indices = @transform_0, window_bounds = array<i64: 512, 512>}, {pipeline_mode = #tpu.pipeline_mode<synchronous>, transform_indices = @transform_1, window_bounds = array<i64: 16, 512>}, {pipeline_mode = #tpu.pipeline_mode<synchronous>, transform_indices = @transform_2, window_bounds = array<i64: 16, 1>}, {transform_indices = @transform_3, window_bounds = array<i64: 16, 512>}, {transform_indices = @transform_4, window_bounds = array<i64: 1, 16, 1>}, {transform_indices = @transform_5, window_bounds = array<i64: 1, 16, 1>}]} {
    %c0 = arith.constant 0 : index
    %c0_0 = arith.constant 0 : index
    %0 = vector.load %arg2[%c0, %c0_0] : memref<16x512xbf16, #tpu.memory_space<vmem>>, vector<16x512xbf16>
    %c0_1 = arith.constant 0 : index
    %c0_2 = arith.constant 0 : index
    %1 = vector.load %arg1[%c0_1, %c0_2] : memref<512x512xbf16, #tpu.memory_space<vmem>>, vector<512x512xbf16>
    %cst = arith.constant dense<0.000000e+00> : vector<16x512xf32>
    %2 = tpu.matmul %0, %1, %cst {dimension_numbers = #tpu.dot_dimension_numbers<[1], [0], [0], [1], [0, 0, 1, 1], [], []>} : vector<16x512xbf16>, vector<512x512xbf16>, vector<16x512xf32> -> vector<16x512xf32>
    %c0_3 = arith.constant 0 : index
    %c0_4 = arith.constant 0 : index
    %3 = vector.load %arg3[%c0_3, %c0_4] : memref<16x1xf32, #tpu.memory_space<vmem>>, vector<16x1xf32>
    %4 = vector.broadcast %3 : vector<16x1xf32> to vector<16x512xf32>
    %5 = arith.addf %2, %4 : vector<16x512xf32>
    %c0_5 = arith.constant 0 : index
    %c0_6 = arith.constant 0 : index
    %6 = vector.load %arg4[%c0_5, %c0_6] : memref<16x512xf32, #tpu.memory_space<vmem>>, vector<16x512xf32>
    tpu.vector_store %arg4[%c0_5, %c0_6], %5 {strides = array<i32>} : memref<16x512xf32, #tpu.memory_space<vmem>>, vector<16x512xf32>,
    %cst_7 = arith.constant dense<0.000000e+00> : vector<16xf32>
    %7 = vector.multi_reduction <add>, %5, %cst_7 [1] : vector<16x512xf32> to vector<16xf32>
    %8 = vector.shape_cast %7 : vector<16xf32> to vector<16x1xf32>
    %9 = vector.shape_cast %8 : vector<16x1xf32> to vector<1x16x1xf32>
    %c0_8 = arith.constant 0 : index
    %c0_9 = arith.constant 0 : index
    %c0_10 = arith.constant 0 : index
    %10 = vector.load %arg5[%c0_8, %c0_9, %c0_10] : memref<1x16x1xf32, #tpu.memory_space<vmem>>, vector<1x16x1xf32>
    tpu.vector_store %arg5[%c0_8, %c0_9, %c0_10], %9 {strides = array<i32>} : memref<1x16x1xf32, #tpu.memory_space<vmem>>, vector<1x16x1xf32>,
    %11 = arith.mulf %5, %5 : vector<16x512xf32>
    %cst_11 = arith.constant dense<0.000000e+00> : vector<16xf32>
    %12 = vector.multi_reduction <add>, %11, %cst_11 [1] : vector<16x512xf32> to vector<16xf32>
    %13 = vector.shape_cast %12 : vector<16xf32> to vector<16x1xf32>
    %14 = vector.shape_cast %13 : vector<16x1xf32> to vector<1x16x1xf32>
    %c0_12 = arith.constant 0 : index
    %c0_13 = arith.constant 0 : index
    %c0_14 = arith.constant 0 : index
    %15 = vector.load %arg6[%c0_12, %c0_13, %c0_14] : memref<1x16x1xf32, #tpu.memory_space<vmem>>, vector<1x16x1xf32>
    tpu.vector_store %arg6[%c0_12, %c0_13, %c0_14], %14 {strides = array<i32>} : memref<1x16x1xf32, #tpu.memory_space<vmem>>, vector<1x16x1xf32>,
    return
  }
  func.func @transform_0(%arg0: i32) -> (i32, i32) {
    %c0_i32 = arith.constant 0 : i32
    %c0_i32_0 = arith.constant 0 : i32
    return %c0_i32, %arg0 : i32, i32
  }
  func.func @transform_1(%arg0: i32) -> (i32, i32) {
    %c0_i32 = arith.constant 0 : i32
    %c0_i32_0 = arith.constant 0 : i32
    %c0_i32_1 = arith.constant 0 : i32
    return %c0_i32, %c0_i32_0 : i32, i32
  }
  func.func @transform_2(%arg0: i32) -> (i32, i32) {
    %c0_i32 = arith.constant 0 : i32
    %c0_i32_0 = arith.constant 0 : i32
    %c0_i32_1 = arith.constant 0 : i32
    return %c0_i32, %c0_i32_0 : i32, i32
  }
  func.func @transform_3(%arg0: i32) -> (i32, i32) {
    %c0_i32 = arith.constant 0 : i32
    %c0_i32_0 = arith.constant 0 : i32
    return %c0_i32, %arg0 : i32, i32
  }
  func.func @transform_4(%arg0: i32) -> (i32, i32, i32) {
    %c0_i32 = arith.constant 0 : i32
    %c0_i32_0 = arith.constant 0 : i32
    %c0_i32_1 = arith.constant 0 : i32
    return %arg0, %c0_i32, %c0_i32_0 : i32, i32, i32
  }
  func.func @transform_5(%arg0: i32) -> (i32, i32, i32) {
    %c0_i32 = arith.constant 0 : i32
    %c0_i32_0 = arith.constant 0 : i32
    %c0_i32_1 = arith.constant 0 : i32
    return %arg0, %c0_i32, %c0_i32_0 : i32, i32, i32
  }
}

module attributes {stable_mosaic.version = 11 : i64} {
  func.func @_scale_shift_relu_kernel(%arg0: i32, %arg1: memref<16x512xf32, #tpu.memory_space<vmem>>, %arg2: memref<16x1xf32, #tpu.memory_space<vmem>>, %arg3: memref<16x1xf32, #tpu.memory_space<vmem>>, %arg4: memref<16x512xbf16, #tpu.memory_space<vmem>>) attributes {dimension_semantics = [#tpu.dimension_semantics<parallel>], iteration_bounds = array<i64: 1>, scalar_prefetch = 0 : i64, scratch_operands = 0 : i64, tpu.core_type = #tpu.core_type<tc>, window_params = [{transform_indices = @transform_0, window_bounds = array<i64: 16, 512>}, {pipeline_mode = #tpu.pipeline_mode<synchronous>, transform_indices = @transform_1, window_bounds = array<i64: 16, 1>}, {pipeline_mode = #tpu.pipeline_mode<synchronous>, transform_indices = @transform_2, window_bounds = array<i64: 16, 1>}, {transform_indices = @transform_3, window_bounds = array<i64: 16, 512>}]} {
    %c0 = arith.constant 0 : index
    %c0_0 = arith.constant 0 : index
    %0 = vector.load %arg1[%c0, %c0_0] : memref<16x512xf32, #tpu.memory_space<vmem>>, vector<16x512xf32>
    %c0_1 = arith.constant 0 : index
    %c0_2 = arith.constant 0 : index
    %1 = vector.load %arg2[%c0_1, %c0_2] : memref<16x1xf32, #tpu.memory_space<vmem>>, vector<16x1xf32>
    %2 = vector.broadcast %1 : vector<16x1xf32> to vector<16x512xf32>
    %3 = arith.mulf %0, %2 : vector<16x512xf32>
    %c0_3 = arith.constant 0 : index
    %c0_4 = arith.constant 0 : index
    %4 = vector.load %arg3[%c0_3, %c0_4] : memref<16x1xf32, #tpu.memory_space<vmem>>, vector<16x1xf32>
    %5 = vector.broadcast %4 : vector<16x1xf32> to vector<16x512xf32>
    %6 = arith.addf %3, %5 : vector<16x512xf32>
    %cst = arith.constant 0.000000e+00 : f32
    %7 = vector.broadcast %cst : f32 to vector<16x512xf32>
    %8 = arith.maximumf %6, %7 : vector<16x512xf32>
    %9 = arith.truncf %8 : vector<16x512xf32> to vector<16x512xbf16>
    %c0_5 = arith.constant 0 : index
    %c0_6 = arith.constant 0 : index
    %10 = vector.load %arg4[%c0_5, %c0_6] : memref<16x512xbf16, #tpu.memory_space<vmem>>, vector<16x512xbf16>
    tpu.vector_store %arg4[%c0_5, %c0_6], %9 {strides = array<i32>} : memref<16x512xbf16, #tpu.memory_space<vmem>>, vector<16x512xbf16>,
    return
  }
  func.func @transform_0(%arg0: i32) -> (i32, i32) {
    %c0_i32 = arith.constant 0 : i32
    %c0_i32_0 = arith.constant 0 : i32
    return %c0_i32, %arg0 : i32, i32
  }
  func.func @transform_1(%arg0: i32) -> (i32, i32) {
    %c0_i32 = arith.constant 0 : i32
    %c0_i32_0 = arith.constant 0 : i32
    %c0_i32_1 = arith.constant 0 : i32
    return %c0_i32, %c0_i32_0 : i32, i32
  }
  func.func @transform_2(%arg0: i32) -> (i32, i32) {
    %c0_i32 = arith.constant 0 : i32
    %c0_i32_0 = arith.constant 0 : i32
    %c0_i32_1 = arith.constant 0 : i32
    return %c0_i32, %c0_i32_0 : i32, i32
  }
  func.func @transform_3(%arg0: i32) -> (i32, i32) {
    %c0_i32 = arith.constant 0 : i32
    %c0_i32_0 = arith.constant 0 : i32
    return %c0_i32, %arg0 : i32, i32
  }
}

module attributes {stable_mosaic.version = 11 : i64} {
  func.func @_convt_gemm_kernel(%arg0: i32, %arg1: memref<256x2048xbf16, #tpu.memory_space<vmem>>, %arg2: memref<8x256xbf16, #tpu.memory_space<vmem>>, %arg3: memref<8x1xf32, #tpu.memory_space<vmem>>, %arg4: memref<8x2048xf32, #tpu.memory_space<vmem>>, %arg5: memref<1x8x1xf32, #tpu.memory_space<vmem>>, %arg6: memref<1x8x1xf32, #tpu.memory_space<vmem>>) attributes {dimension_semantics = [#tpu.dimension_semantics<parallel>], iteration_bounds = array<i64: 1>, scalar_prefetch = 0 : i64, scratch_operands = 0 : i64, tpu.core_type = #tpu.core_type<tc>, window_params = [{transform_indices = @transform_0, window_bounds = array<i64: 256, 2048>}, {pipeline_mode = #tpu.pipeline_mode<synchronous>, transform_indices = @transform_1, window_bounds = array<i64: 8, 256>}, {pipeline_mode = #tpu.pipeline_mode<synchronous>, transform_indices = @transform_2, window_bounds = array<i64: 8, 1>}, {transform_indices = @transform_3, window_bounds = array<i64: 8, 2048>}, {transform_indices = @transform_4, window_bounds = array<i64: 1, 8, 1>}, {transform_indices = @transform_5, window_bounds = array<i64: 1, 8, 1>}]} {
    %c0 = arith.constant 0 : index
    %c0_0 = arith.constant 0 : index
    %0 = vector.load %arg2[%c0, %c0_0] : memref<8x256xbf16, #tpu.memory_space<vmem>>, vector<8x256xbf16>
    %c0_1 = arith.constant 0 : index
    %c0_2 = arith.constant 0 : index
    %1 = vector.load %arg1[%c0_1, %c0_2] : memref<256x2048xbf16, #tpu.memory_space<vmem>>, vector<256x2048xbf16>
    %cst = arith.constant dense<0.000000e+00> : vector<8x2048xf32>
    %2 = tpu.matmul %0, %1, %cst {dimension_numbers = #tpu.dot_dimension_numbers<[1], [0], [0], [1], [0, 0, 1, 1], [], []>} : vector<8x256xbf16>, vector<256x2048xbf16>, vector<8x2048xf32> -> vector<8x2048xf32>
    %c0_3 = arith.constant 0 : index
    %c0_4 = arith.constant 0 : index
    %3 = vector.load %arg3[%c0_3, %c0_4] : memref<8x1xf32, #tpu.memory_space<vmem>>, vector<8x1xf32>
    %4 = vector.broadcast %3 : vector<8x1xf32> to vector<8x2048xf32>
    %5 = arith.addf %2, %4 : vector<8x2048xf32>
    %c0_5 = arith.constant 0 : index
    %c0_6 = arith.constant 0 : index
    %6 = vector.load %arg4[%c0_5, %c0_6] : memref<8x2048xf32, #tpu.memory_space<vmem>>, vector<8x2048xf32>
    tpu.vector_store %arg4[%c0_5, %c0_6], %5 {strides = array<i32>} : memref<8x2048xf32, #tpu.memory_space<vmem>>, vector<8x2048xf32>,
    %cst_7 = arith.constant dense<0.000000e+00> : vector<8xf32>
    %7 = vector.multi_reduction <add>, %5, %cst_7 [1] : vector<8x2048xf32> to vector<8xf32>
    %8 = vector.shape_cast %7 : vector<8xf32> to vector<8x1xf32>
    %9 = vector.shape_cast %8 : vector<8x1xf32> to vector<1x8x1xf32>
    %c0_8 = arith.constant 0 : index
    %c0_9 = arith.constant 0 : index
    %c0_10 = arith.constant 0 : index
    %10 = vector.load %arg5[%c0_8, %c0_9, %c0_10] : memref<1x8x1xf32, #tpu.memory_space<vmem>>, vector<1x8x1xf32>
    tpu.vector_store %arg5[%c0_8, %c0_9, %c0_10], %9 {strides = array<i32>} : memref<1x8x1xf32, #tpu.memory_space<vmem>>, vector<1x8x1xf32>,
    %11 = arith.mulf %5, %5 : vector<8x2048xf32>
    %cst_11 = arith.constant dense<0.000000e+00> : vector<8xf32>
    %12 = vector.multi_reduction <add>, %11, %cst_11 [1] : vector<8x2048xf32> to vector<8xf32>
    %13 = vector.shape_cast %12 : vector<8xf32> to vector<8x1xf32>
    %14 = vector.shape_cast %13 : vector<8x1xf32> to vector<1x8x1xf32>
    %c0_12 = arith.constant 0 : index
    %c0_13 = arith.constant 0 : index
    %c0_14 = arith.constant 0 : index
    %15 = vector.load %arg6[%c0_12, %c0_13, %c0_14] : memref<1x8x1xf32, #tpu.memory_space<vmem>>, vector<1x8x1xf32>
    tpu.vector_store %arg6[%c0_12, %c0_13, %c0_14], %14 {strides = array<i32>} : memref<1x8x1xf32, #tpu.memory_space<vmem>>, vector<1x8x1xf32>,
    return
  }
  func.func @transform_0(%arg0: i32) -> (i32, i32) {
    %c0_i32 = arith.constant 0 : i32
    %c0_i32_0 = arith.constant 0 : i32
    return %c0_i32, %arg0 : i32, i32
  }
  func.func @transform_1(%arg0: i32) -> (i32, i32) {
    %c0_i32 = arith.constant 0 : i32
    %c0_i32_0 = arith.constant 0 : i32
    %c0_i32_1 = arith.constant 0 : i32
    return %c0_i32, %c0_i32_0 : i32, i32
  }
  func.func @transform_2(%arg0: i32) -> (i32, i32) {
    %c0_i32 = arith.constant 0 : i32
    %c0_i32_0 = arith.constant 0 : i32
    %c0_i32_1 = arith.constant 0 : i32
    return %c0_i32, %c0_i32_0 : i32, i32
  }
  func.func @transform_3(%arg0: i32) -> (i32, i32) {
    %c0_i32 = arith.constant 0 : i32
    %c0_i32_0 = arith.constant 0 : i32
    return %c0_i32, %arg0 : i32, i32
  }
  func.func @transform_4(%arg0: i32) -> (i32, i32, i32) {
    %c0_i32 = arith.constant 0 : i32
    %c0_i32_0 = arith.constant 0 : i32
    %c0_i32_1 = arith.constant 0 : i32
    return %arg0, %c0_i32, %c0_i32_0 : i32, i32, i32
  }
  func.func @transform_5(%arg0: i32) -> (i32, i32, i32) {
    %c0_i32 = arith.constant 0 : i32
    %c0_i32_0 = arith.constant 0 : i32
    %c0_i32_1 = arith.constant 0 : i32
    return %arg0, %c0_i32, %c0_i32_0 : i32, i32, i32
  }
}

module attributes {stable_mosaic.version = 11 : i64} {
  func.func @_scale_shift_relu_kernel(%arg0: i32, %arg1: memref<8x2048xf32, #tpu.memory_space<vmem>>, %arg2: memref<8x1xf32, #tpu.memory_space<vmem>>, %arg3: memref<8x1xf32, #tpu.memory_space<vmem>>, %arg4: memref<8x2048xbf16, #tpu.memory_space<vmem>>) attributes {dimension_semantics = [#tpu.dimension_semantics<parallel>], iteration_bounds = array<i64: 1>, scalar_prefetch = 0 : i64, scratch_operands = 0 : i64, tpu.core_type = #tpu.core_type<tc>, window_params = [{transform_indices = @transform_0, window_bounds = array<i64: 8, 2048>}, {pipeline_mode = #tpu.pipeline_mode<synchronous>, transform_indices = @transform_1, window_bounds = array<i64: 8, 1>}, {pipeline_mode = #tpu.pipeline_mode<synchronous>, transform_indices = @transform_2, window_bounds = array<i64: 8, 1>}, {transform_indices = @transform_3, window_bounds = array<i64: 8, 2048>}]} {
    %c0 = arith.constant 0 : index
    %c0_0 = arith.constant 0 : index
    %0 = vector.load %arg1[%c0, %c0_0] : memref<8x2048xf32, #tpu.memory_space<vmem>>, vector<8x2048xf32>
    %c0_1 = arith.constant 0 : index
    %c0_2 = arith.constant 0 : index
    %1 = vector.load %arg2[%c0_1, %c0_2] : memref<8x1xf32, #tpu.memory_space<vmem>>, vector<8x1xf32>
    %2 = vector.broadcast %1 : vector<8x1xf32> to vector<8x2048xf32>
    %3 = arith.mulf %0, %2 : vector<8x2048xf32>
    %c0_3 = arith.constant 0 : index
    %c0_4 = arith.constant 0 : index
    %4 = vector.load %arg3[%c0_3, %c0_4] : memref<8x1xf32, #tpu.memory_space<vmem>>, vector<8x1xf32>
    %5 = vector.broadcast %4 : vector<8x1xf32> to vector<8x2048xf32>
    %6 = arith.addf %3, %5 : vector<8x2048xf32>
    %cst = arith.constant 0.000000e+00 : f32
    %7 = vector.broadcast %cst : f32 to vector<8x2048xf32>
    %8 = arith.maximumf %6, %7 : vector<8x2048xf32>
    %9 = arith.truncf %8 : vector<8x2048xf32> to vector<8x2048xbf16>
    %c0_5 = arith.constant 0 : index
    %c0_6 = arith.constant 0 : index
    %10 = vector.load %arg4[%c0_5, %c0_6] : memref<8x2048xbf16, #tpu.memory_space<vmem>>, vector<8x2048xbf16>
    tpu.vector_store %arg4[%c0_5, %c0_6], %9 {strides = array<i32>} : memref<8x2048xbf16, #tpu.memory_space<vmem>>, vector<8x2048xbf16>,
    return
  }
  func.func @transform_0(%arg0: i32) -> (i32, i32) {
    %c0_i32 = arith.constant 0 : i32
    %c0_i32_0 = arith.constant 0 : i32
    return %c0_i32, %arg0 : i32, i32
  }
  func.func @transform_1(%arg0: i32) -> (i32, i32) {
    %c0_i32 = arith.constant 0 : i32
    %c0_i32_0 = arith.constant 0 : i32
    %c0_i32_1 = arith.constant 0 : i32
    return %c0_i32, %c0_i32_0 : i32, i32
  }
  func.func @transform_2(%arg0: i32) -> (i32, i32) {
    %c0_i32 = arith.constant 0 : i32
    %c0_i32_0 = arith.constant 0 : i32
    %c0_i32_1 = arith.constant 0 : i32
    return %c0_i32, %c0_i32_0 : i32, i32
  }
  func.func @transform_3(%arg0: i32) -> (i32, i32) {
    %c0_i32 = arith.constant 0 : i32
    %c0_i32_0 = arith.constant 0 : i32
    return %c0_i32, %arg0 : i32, i32
  }
}

module attributes {stable_mosaic.version = 11 : i64} {
  func.func @_convt_gemm_kernel(%arg0: i32, %arg1: memref<128x2048xbf16, #tpu.memory_space<vmem>>, %arg2: memref<3x128xbf16, #tpu.memory_space<vmem>>, %arg3: memref<3x1xf32, #tpu.memory_space<vmem>>, %arg4: memref<3x2048xf32, #tpu.memory_space<vmem>>) attributes {dimension_semantics = [#tpu.dimension_semantics<parallel>], iteration_bounds = array<i64: 4>, scalar_prefetch = 0 : i64, scratch_operands = 0 : i64, tpu.core_type = #tpu.core_type<tc>, window_params = [{transform_indices = @transform_0, window_bounds = array<i64: 128, 2048>}, {pipeline_mode = #tpu.pipeline_mode<synchronous>, transform_indices = @transform_1, window_bounds = array<i64: 3, 128>}, {pipeline_mode = #tpu.pipeline_mode<synchronous>, transform_indices = @transform_2, window_bounds = array<i64: 3, 1>}, {transform_indices = @transform_3, window_bounds = array<i64: 3, 2048>}]} {
    %c0 = arith.constant 0 : index
    %c0_0 = arith.constant 0 : index
    %0 = vector.load %arg2[%c0, %c0_0] : memref<3x128xbf16, #tpu.memory_space<vmem>>, vector<3x128xbf16>
    %c0_1 = arith.constant 0 : index
    %c0_2 = arith.constant 0 : index
    %1 = vector.load %arg1[%c0_1, %c0_2] : memref<128x2048xbf16, #tpu.memory_space<vmem>>, vector<128x2048xbf16>
    %cst = arith.constant dense<0.000000e+00> : vector<3x2048xf32>
    %2 = tpu.matmul %0, %1, %cst {dimension_numbers = #tpu.dot_dimension_numbers<[1], [0], [0], [1], [0, 0, 1, 1], [], []>} : vector<3x128xbf16>, vector<128x2048xbf16>, vector<3x2048xf32> -> vector<3x2048xf32>
    %c0_3 = arith.constant 0 : index
    %c0_4 = arith.constant 0 : index
    %3 = vector.load %arg3[%c0_3, %c0_4] : memref<3x1xf32, #tpu.memory_space<vmem>>, vector<3x1xf32>
    %4 = vector.broadcast %3 : vector<3x1xf32> to vector<3x2048xf32>
    %5 = arith.addf %2, %4 : vector<3x2048xf32>
    %6 = math.tanh %5 : vector<3x2048xf32>
    %c0_5 = arith.constant 0 : index
    %c0_6 = arith.constant 0 : index
    %7 = vector.load %arg4[%c0_5, %c0_6] : memref<3x2048xf32, #tpu.memory_space<vmem>>, vector<3x2048xf32>
    tpu.vector_store %arg4[%c0_5, %c0_6], %6 {strides = array<i32>} : memref<3x2048xf32, #tpu.memory_space<vmem>>, vector<3x2048xf32>,
    return
  }
  func.func @transform_0(%arg0: i32) -> (i32, i32) {
    %c0_i32 = arith.constant 0 : i32
    %c0_i32_0 = arith.constant 0 : i32
    return %c0_i32, %arg0 : i32, i32
  }
  func.func @transform_1(%arg0: i32) -> (i32, i32) {
    %c0_i32 = arith.constant 0 : i32
    %c0_i32_0 = arith.constant 0 : i32
    %c0_i32_1 = arith.constant 0 : i32
    return %c0_i32, %c0_i32_0 : i32, i32
  }
  func.func @transform_2(%arg0: i32) -> (i32, i32) {
    %c0_i32 = arith.constant 0 : i32
    %c0_i32_0 = arith.constant 0 : i32
    %c0_i32_1 = arith.constant 0 : i32
    return %c0_i32, %c0_i32_0 : i32, i32
  }
  func.func @transform_3(%arg0: i32) -> (i32, i32) {
    %c0_i32 = arith.constant 0 : i32
    %c0_i32_0 = arith.constant 0 : i32
    return %c0_i32, %arg0 : i32, i32
  }
}

</mosaic_0001>

<llo_original>
// kernel: generator_forward.10
$region0: #{generator_forward.10}
  #allocation0 [shape = 'u32[]', space=smem, size = 0x4, offset = 0x4, fixed_abs, tag = 'smem constant byte address 0x4 - core index']
  #allocation1 [shape = 'u32[72,128]{1,0:T(1,128)}', space=vmem, size = 0x9000, scoped, tag = 'internal scratch']
  %s0 = inlined_call_operand.vmem [shape: f32[64,32], index: 0, kind: input, shape index: {}]
  %s1 = inlined_call_operand.vmem [shape: f32[64,1], index: 1, kind: input, shape index: {}]
  %s2 = inlined_call_operand.vmem [shape: f32[64,1], index: 2, kind: input, shape index: {}]
  %s3 = inlined_call_operand.vmem [shape: bf16[64,32], index: 3, kind: output, shape index: {}]
  %s4 = sld [smem:[#allocation0]]
  $region22: #{generator_forward.10} parent=0
    _
  %s6 = ssub.s32 1, %s4
  %s7 = scalar_select 0, %s6, %s4
  // Predicated region
  $region2: #{generator_forward.10} parent=0 // pred_check
    _
  $region3: #{generator_forward.10} parent=0 // pred_check_branch
    %9 = sbr.rel (0) target = $region5
  $region4: #{generator_forward.10} parent=0 // pred_region
    _
  $region5: #{generator_forward.10} parent=0 // pred_fallthru
    _
  // Predicated region
  $region6: #{generator_forward.10} parent=0 // pred_check
    _
  $region7: #{generator_forward.10} parent=0 // pred_check_branch
    %11 = sbr.rel (0) target = $region9
  $region8: #{generator_forward.10} parent=0 // pred_region
    _
  $region9: #{generator_forward.10} parent=0 // pred_fallthru
    _
  // Predicated region
  $region10: #{generator_forward.10} parent=0 // pred_check
    _
  $region11: #{generator_forward.10} parent=0 // pred_check_branch
    %13 = sbr.rel (0) target = $region13
  $region12: #{generator_forward.10} parent=0 // pred_region
    _
  $region13: #{generator_forward.10} parent=0 // pred_fallthru
    _
  %v14 = vld [vmem:[%s0] sm:$0xff]
  %v15 = vld [vmem:[%s0 + $0x8] sm:$0xff]
  %v16 = vld [vmem:[%s0 + $0x10] sm:$0xff]
  %v17 = vld [vmem:[%s0 + $0x18] sm:$0xff]
  %v18 = vld [vmem:[%s0 + $0x20] sm:$0xff]
  %v19 = vld [vmem:[%s0 + $0x28] sm:$0xff]
  %v20 = vld [vmem:[%s0 + $0x30] sm:$0xff]
  %v21 = vld [vmem:[%s0 + $0x38] sm:$0xff]
  %v22 = vld [vmem:[%s1] sm:$0xff]
  %v23 = vld [vmem:[%s1 + $0x8] sm:$0xff]
  %v24 = vld [vmem:[%s1 + $0x10] sm:$0xff]
  %v25 = vld [vmem:[%s1 + $0x18] sm:$0xff]
  %v26 = vld [vmem:[%s1 + $0x20] sm:$0xff]
  %v27 = vld [vmem:[%s1 + $0x28] sm:$0xff]
  %v28 = vld [vmem:[%s1 + $0x30] sm:$0xff]
  %v29 = vld [vmem:[%s1 + $0x38] sm:$0xff]
  %31 = vset.pattern.permute.xlu0 0
  %32 = vperm.xlu0 %31, %v22
  %v33 = vpop.permute.xlu0 %32
  %36 = vset.pattern.permute.xlu0 0
  %37 = vperm.xlu0 %36, %v23
  %v38 = vpop.permute.xlu0 %37
  %41 = vset.pattern.permute.xlu0 0
  %42 = vperm.xlu0 %41, %v24
  %v43 = vpop.permute.xlu0 %42
  %46 = vset.pattern.permute.xlu0 0
  %47 = vperm.xlu0 %46, %v25
  %v48 = vpop.permute.xlu0 %47
  %51 = vset.pattern.permute.xlu0 0
  %52 = vperm.xlu0 %51, %v26
  %v53 = vpop.permute.xlu0 %52
  %56 = vset.pattern.permute.xlu0 0
  %57 = vperm.xlu0 %56, %v27
  %v58 = vpop.permute.xlu0 %57
  %61 = vset.pattern.permute.xlu0 0
  %62 = vperm.xlu0 %61, %v28
  %v63 = vpop.permute.xlu0 %62
  %66 = vset.pattern.permute.xlu0 0
  %67 = vperm.xlu0 %66, %v29
  %v68 = vpop.permute.xlu0 %67
  %v70 = vmul.f32 %v14, %v33
  %v71 = vmul.f32 %v15, %v38
  %v72 = vmul.f32 %v16, %v43
  %v73 = vmul.f32 %v17, %v48
  %v74 = vmul.f32 %v18, %v53
  %v75 = vmul.f32 %v19, %v58
  %v76 = vmul.f32 %v20, %v63
  %v77 = vmul.f32 %v21, %v68
  %v78 = vld [vmem:[%s2] sm:$0xff]
  %v79 = vld [vmem:[%s2 + $0x8] sm:$0xff]
  %v80 = vld [vmem:[%s2 + $0x10] sm:$0xff]
  %v81 = vld [vmem:[%s2 + $0x18] sm:$0xff]
  %v82 = vld [vmem:[%s2 + $0x20] sm:$0xff]
  %v83 = vld [vmem:[%s2 + $0x28] sm:$0xff]
  %v84 = vld [vmem:[%s2 + $0x30] sm:$0xff]
  %v85 = vld [vmem:[%s2 + $0x38] sm:$0xff]
  %87 = vset.pattern.permute.xlu0 0
  %88 = vperm.xlu0 %87, %v78
  %v89 = vpop.permute.xlu0 %88
  %92 = vset.pattern.permute.xlu0 0
  %93 = vperm.xlu0 %92, %v79
  %v94 = vpop.permute.xlu0 %93
  %97 = vset.pattern.permute.xlu0 0
  %98 = vperm.xlu0 %97, %v80
  %v99 = vpop.permute.xlu0 %98
  %102 = vset.pattern.permute.xlu0 0
  %103 = vperm.xlu0 %102, %v81
  %v104 = vpop.permute.xlu0 %103
  %107 = vset.pattern.permute.xlu0 0
  %108 = vperm.xlu0 %107, %v82
  %v109 = vpop.permute.xlu0 %108
  %112 = vset.pattern.permute.xlu0 0
  %113 = vperm.xlu0 %112, %v83
  %v114 = vpop.permute.xlu0 %113
  %117 = vset.pattern.permute.xlu0 0
  %118 = vperm.xlu0 %117, %v84
  %v119 = vpop.permute.xlu0 %118
  %122 = vset.pattern.permute.xlu0 0
  %123 = vperm.xlu0 %122, %v85
  %v124 = vpop.permute.xlu0 %123
  %v126 = vadd.f32 %v70, %v89
  %v127 = vadd.f32 %v71, %v94
  %v128 = vadd.f32 %v72, %v99
  %v129 = vadd.f32 %v73, %v104
  %v130 = vadd.f32 %v74, %v109
  %v131 = vadd.f32 %v75, %v114
  %v132 = vadd.f32 %v76, %v119
  %v133 = vadd.f32 %v77, %v124
  %v134 = vmax.f32 %v126, 0.0
  %v135 = vmax.f32 %v127, 0.0
  %v136 = vmax.f32 %v128, 0.0
  %v137 = vmax.f32 %v129, 0.0
  %v138 = vmax.f32 %v130, 0.0
  %v139 = vmax.f32 %v131, 0.0
  %v140 = vmax.f32 %v132, 0.0
  %v141 = vmax.f32 %v133, 0.0
  %v142 = vpack.c.bf16 %v134, %v134
  %v143 = vpack.c.bf16 %v135, %v135
  %v144 = vpack.c.bf16 %v136, %v136
  %v145 = vpack.c.bf16 %v137, %v137
  %v146 = vpack.c.bf16 %v138, %v138
  %v147 = vpack.c.bf16 %v139, %v139
  %v148 = vpack.c.bf16 %v140, %v140
  %v149 = vpack.c.bf16 %v141, %v141
  %vm150 = vcmask 257024
  %151 = vst.msk [vmem:[%s3] sm:$0xf] %vm150, %v142
  %152 = vst.msk [vmem:[%s3 + $0x4] sm:$0xf] %vm150, %v143
  %153 = vst.msk [vmem:[%s3 + $0x8] sm:$0xf] %vm150, %v144
  %154 = vst.msk [vmem:[%s3 + $0xc] sm:$0xf] %vm150, %v145
  %155 = vst.msk [vmem:[%s3 + $0x10] sm:$0xf] %vm150, %v146
  %156 = vst.msk [vmem:[%s3 + $0x14] sm:$0xf] %vm150, %v147
  %157 = vst.msk [vmem:[%s3 + $0x18] sm:$0xf] %vm150, %v148
  %158 = vst.msk [vmem:[%s3 + $0x1c] sm:$0xf] %vm150, %v149
  // Predicated region
  $region14: #{generator_forward.10} parent=0 // pred_check
    _
  $region15: #{generator_forward.10} parent=0 // pred_check_branch
    %160 = sbr.rel (0) target = $region17
  $region16: #{generator_forward.10} parent=0 // pred_region
    _
  $region17: #{generator_forward.10} parent=0 // pred_fallthru
    _
  // Predicated region
  $region18: #{generator_forward.10} parent=0 // pred_check
    _
  $region19: #{generator_forward.10} parent=0 // pred_check_branch
    %162 = sbr.rel (0) target = $region21
  $region20: #{generator_forward.10} parent=0 // pred_region
    _
  $region21: #{generator_forward.10} parent=0 // pred_fallthru
    _

// kernel: generator_forward.9
$region0: #{generator_forward.9}
  #allocation0 [shape = 'u32[]', space=smem, size = 0x4, offset = 0x4, fixed_abs, tag = 'smem constant byte address 0x4 - core index']
  #allocation1 [shape = 'u32[72,128]{1,0:T(1,128)}', space=vmem, size = 0x9000, scoped, tag = 'internal scratch']
  %s0 = inlined_call_operand.vmem [shape: bf16[128,32], index: 0, kind: input, shape index: {}]
  %s1 = inlined_call_operand.vmem [shape: bf16[64,128], index: 1, kind: input, shape index: {}]
  %s2 = inlined_call_operand.vmem [shape: f32[64,1], index: 2, kind: input, shape index: {}]
  %s3 = inlined_call_operand.vmem [shape: f32[64,32], index: 3, kind: output, shape index: {0}]
  %s4 = inlined_call_operand.vmem [shape: f32[1,64,1], index: 4, kind: output, shape index: {1}]
  %s5 = inlined_call_operand.vmem [shape: f32[1,64,1], index: 5, kind: output, shape index: {2}]
  %6 = xla_tuple %s3, %s4, %s5
  %s7 = sld [smem:[#allocation0]]
  $region38: #{generator_forward.9} parent=0
    _
  %s9 = ssub.s32 1, %s7
  %s10 = scalar_select 0, %s9, %s7
  // Predicated region
  $region2: #{generator_forward.9} parent=0 // pred_check
    _
  $region3: #{generator_forward.9} parent=0 // pred_check_branch
    %12 = sbr.rel (0) target = $region5
  $region4: #{generator_forward.9} parent=0 // pred_region
    _
  $region5: #{generator_forward.9} parent=0 // pred_fallthru
    _
  // Predicated region
  $region6: #{generator_forward.9} parent=0 // pred_check
    _
  $region7: #{generator_forward.9} parent=0 // pred_check_branch
    %14 = sbr.rel (0) target = $region9
  $region8: #{generator_forward.9} parent=0 // pred_region
    _
  $region9: #{generator_forward.9} parent=0 // pred_fallthru
    _
  // Predicated region
  $region10: #{generator_forward.9} parent=0 // pred_check
    _
  $region11: #{generator_forward.9} parent=0 // pred_check_branch
    %16 = sbr.rel (0) target = $region13
  $region12: #{generator_forward.9} parent=0 // pred_region
    _
  $region13: #{generator_forward.9} parent=0 // pred_fallthru
    _
  %v17 = vld [vmem:[%s1] sm:$0xf]
  %v18 = vld [vmem:[%s1 + $0x4] sm:$0xf]
  %v19 = vld [vmem:[%s1 + $0x8] sm:$0xf]
  %v20 = vld [vmem:[%s1 + $0xc] sm:$0xf]
  %v21 = vld [vmem:[%s1 + $0x10] sm:$0xf]
  %v22 = vld [vmem:[%s1 + $0x14] sm:$0xf]
  %v23 = vld [vmem:[%s1 + $0x18] sm:$0xf]
  %v24 = vld [vmem:[%s1 + $0x1c] sm:$0xf]
  %v25 = vld [vmem:[%s0] sm:$0xf]
  %v26 = vld [vmem:[%s0 + $0x4] sm:$0xf]
  %v27 = vld [vmem:[%s0 + $0x8] sm:$0xf]
  %v28 = vld [vmem:[%s0 + $0xc] sm:$0xf]
  %v29 = vld [vmem:[%s0 + $0x10] sm:$0xf]
  %v30 = vld [vmem:[%s0 + $0x14] sm:$0xf]
  %v31 = vld [vmem:[%s0 + $0x18] sm:$0xf]
  %v32 = vld [vmem:[%s0 + $0x1c] sm:$0xf]
  %v33 = vld [vmem:[%s0 + $0x20] sm:$0xf]
  %v34 = vld [vmem:[%s0 + $0x24] sm:$0xf]
  %v35 = vld [vmem:[%s0 + $0x28] sm:$0xf]
  %v36 = vld [vmem:[%s0 + $0x2c] sm:$0xf]
  %v37 = vld [vmem:[%s0 + $0x30] sm:$0xf]
  %v38 = vld [vmem:[%s0 + $0x34] sm:$0xf]
  %v39 = vld [vmem:[%s0 + $0x38] sm:$0xf]
  %v40 = vld [vmem:[%s0 + $0x3c] sm:$0xf]
  %v41 = vld [vmem:[%s2] sm:$0xff]
  %v42 = vld [vmem:[%s2 + $0x8] sm:$0xff]
  %v43 = vld [vmem:[%s2 + $0x10] sm:$0xff]
  %v44 = vld [vmem:[%s2 + $0x18] sm:$0xff]
  %v45 = vld [vmem:[%s2 + $0x20] sm:$0xff]
  %v46 = vld [vmem:[%s2 + $0x28] sm:$0xff]
  %v47 = vld [vmem:[%s2 + $0x30] sm:$0xff]
  %v48 = vld [vmem:[%s2 + $0x38] sm:$0xff]
  %50 = vset.pattern.permute.xlu0 0
  %51 = vperm.xlu0 %50, %v41
  %v52 = vpop.permute.xlu0 %51
  %55 = vset.pattern.permute.xlu0 0
  %56 = vperm.xlu0 %55, %v42
  %v57 = vpop.permute.xlu0 %56
  %60 = vset.pattern.permute.xlu0 0
  %61 = vperm.xlu0 %60, %v43
  %v62 = vpop.permute.xlu0 %61
  %65 = vset.pattern.permute.xlu0 0
  %66 = vperm.xlu0 %65, %v44
  %v67 = vpop.permute.xlu0 %66
  %70 = vset.pattern.permute.xlu0 0
  %71 = vperm.xlu0 %70, %v45
  %v72 = vpop.permute.xlu0 %71
  %75 = vset.pattern.permute.xlu0 0
  %76 = vperm.xlu0 %75, %v46
  %v77 = vpop.permute.xlu0 %76
  %80 = vset.pattern.permute.xlu0 0
  %81 = vperm.xlu0 %80, %v47
  %v82 = vpop.permute.xlu0 %81
  %85 = vset.pattern.permute.xlu0 0
  %86 = vperm.xlu0 %85, %v48
  %v87 = vpop.permute.xlu0 %86
  %v97 = vunpack.c.l.b16 %v17
  %v98 = vunpack.c.l.b16 %v18
  %v99 = vunpack.c.l.b16 %v19
  %v100 = vunpack.c.l.b16 %v20
  %v101 = vunpack.c.l.b16 %v21
  %v102 = vunpack.c.l.b16 %v22
  %v103 = vunpack.c.l.b16 %v23
  %v104 = vunpack.c.l.b16 %v24
  %v105 = vpack.c.b16 %v98, %v97
  %v106 = vpack.c.b16 %v100, %v99
  %v107 = vpack.c.b16 %v102, %v101
  %v108 = vpack.c.b16 %v104, %v103
  %v129 = vunpack.c.l.b16 %v25
  %v130 = vunpack.c.l.b16 %v26
  %v131 = vunpack.c.l.b16 %v27
  %v132 = vunpack.c.l.b16 %v28
  %v133 = vunpack.c.l.b16 %v29
  %v134 = vunpack.c.l.b16 %v30
  %v135 = vunpack.c.l.b16 %v31
  %v136 = vunpack.c.l.b16 %v32
  %v137 = vunpack.c.l.b16 %v33
  %v138 = vunpack.c.l.b16 %v34
  %v139 = vunpack.c.l.b16 %v35
  %v140 = vunpack.c.l.b16 %v36
  %v141 = vunpack.c.l.b16 %v37
  %v142 = vunpack.c.l.b16 %v38
  %v143 = vunpack.c.l.b16 %v39
  %v144 = vunpack.c.l.b16 %v40
  %v145 = vpack.c.b16 %v130, %v129
  %v146 = vpack.c.b16 %v132, %v131
  %v147 = vpack.c.b16 %v134, %v133
  %v148 = vpack.c.b16 %v136, %v135
  %v149 = vpack.c.b16 %v138, %v137
  %v150 = vpack.c.b16 %v140, %v139
  %v151 = vpack.c.b16 %v142, %v141
  %v152 = vpack.c.b16 %v144, %v143
  %161 = vmatpush.bf16.msra.mxu0 %v152
  %162 = vmatpush.bf16.msra.mxu0 %v151
  %163 = vmatpush.bf16.msra.mxu0 %v150
  %164 = vmatpush.bf16.msra.mxu0 %v149
  %165 = vmatpush.bf16.msra.mxu0 %v148
  %166 = vmatpush.bf16.msra.mxu0 %v147
  %167 = vmatpush.bf16.msra.mxu0 %v146
  %168 = vmatpush.bf16.msra.mxu0 %v145
  %169 = vmatmul.bf16.gmra.mxu0 %v105
  %v170 = vpop.f32.mrf.mxu0
  %v171 = vadd.f32 %v52, %v170
  %v172 = vpop.f32.mrf.mxu0
  %v173 = vadd.f32 %v57, %v172
  %174 = vmatmul.bf16.gmra.mxu0 %v106
  %v175 = vpop.f32.mrf.mxu0
  %v176 = vadd.f32 %v62, %v175
  %v177 = vpop.f32.mrf.mxu0
  %v178 = vadd.f32 %v67, %v177
  %179 = vmatmul.bf16.gmra.mxu0 %v107
  %v180 = vpop.f32.mrf.mxu0
  %v181 = vadd.f32 %v72, %v180
  %v182 = vpop.f32.mrf.mxu0
  %v183 = vadd.f32 %v77, %v182
  %184 = vmatmul.bf16.gmra.mxu0 %v108
  %v185 = vpop.f32.mrf.mxu0
  %v186 = vadd.f32 %v82, %v185
  %v187 = vpop.f32.mrf.mxu0
  %v188 = vadd.f32 %v87, %v187
  %189 = vdwg.mxu0
  %vm190 = vcmask 261120
  %191 = vst.msk [vmem:[%s3] sm:$0xff] %vm190, %v171
  %192 = vst.msk [vmem:[%s3 + $0x8] sm:$0xff] %vm190, %v173
  %193 = vst.msk [vmem:[%s3 + $0x10] sm:$0xff] %vm190, %v176
  %194 = vst.msk [vmem:[%s3 + $0x18] sm:$0xff] %vm190, %v178
  %195 = vst.msk [vmem:[%s3 + $0x20] sm:$0xff] %vm190, %v181
  %196 = vst.msk [vmem:[%s3 + $0x28] sm:$0xff] %vm190, %v183
  %197 = vst.msk [vmem:[%s3 + $0x30] sm:$0xff] %vm190, %v186
  %198 = vst.msk [vmem:[%s3 + $0x38] sm:$0xff] %vm190, %v188
  %v199 = vsel %vm190, %v171, 0.0
  %200 = vadd.xlane.f32.xlu0 %v199
  %v201 = vpop.xlane.xlu0 %200
  %v202 = vsel %vm190, %v173, 0.0
  %203 = vadd.xlane.f32.xlu0 %v202
  %v204 = vpop.xlane.xlu0 %203
  %v205 = vsel %vm190, %v176, 0.0
  %206 = vadd.xlane.f32.xlu0 %v205
  %v207 = vpop.xlane.xlu0 %206
  %v208 = vsel %vm190, %v178, 0.0
  %209 = vadd.xlane.f32.xlu0 %v208
  %v210 = vpop.xlane.xlu0 %209
  %v211 = vsel %vm190, %v181, 0.0
  %212 = vadd.xlane.f32.xlu0 %v211
  %v213 = vpop.xlane.xlu0 %212
  %v214 = vsel %vm190, %v183, 0.0
  %215 = vadd.xlane.f32.xlu0 %v214
  %v216 = vpop.xlane.xlu0 %215
  %v217 = vsel %vm190, %v186, 0.0
  %218 = vadd.xlane.f32.xlu0 %v217
  %v219 = vpop.xlane.xlu0 %218
  %v220 = vsel %vm190, %v188, 0.0
  %221 = vadd.xlane.f32.xlu0 %v220
  %v222 = vpop.xlane.xlu0 %221
  %vm223 = vcmask 7168
  %224 = vst.msk [vmem:[%s4] sm:$0xff] %vm223, %v201
  %225 = vst.msk [vmem:[%s4 + $0x8] sm:$0xff] %vm223, %v204
  %226 = vst.msk [vmem:[%s4 + $0x10] sm:$0xff] %vm223, %v207
  %227 = vst.msk [vmem:[%s4 + $0x18] sm:$0xff] %vm223, %v210
  %228 = vst.msk [vmem:[%s4 + $0x20] sm:$0xff] %vm223, %v213
  %229 = vst.msk [vmem:[%s4 + $0x28] sm:$0xff] %vm223, %v216
  %230 = vst.msk [vmem:[%s4 + $0x30] sm:$0xff] %vm223, %v219
  %231 = vst.msk [vmem:[%s4 + $0x38] sm:$0xff] %vm223, %v222
  %v232 = vmul.f32 %v171, %v171
  %v233 = vmul.f32 %v173, %v173
  %v234 = vmul.f32 %v176, %v176
  %v235 = vmul.f32 %v178, %v178
  %v236 = vmul.f32 %v181, %v181
  %v237 = vmul.f32 %v183, %v183
  %v238 = vmul.f32 %v186, %v186
  %v239 = vmul.f32 %v188, %v188
  %v240 = vsel %vm190, %v232, 0.0
  %241 = vadd.xlane.f32.xlu0 %v240
  %v242 = vpop.xlane.xlu0 %241
  %v243 = vsel %vm190, %v233, 0.0
  %244 = vadd.xlane.f32.xlu0 %v243
  %v245 = vpop.xlane.xlu0 %244
  %v246 = vsel %vm190, %v234, 0.0
  %247 = vadd.xlane.f32.xlu0 %v246
  %v248 = vpop.xlane.xlu0 %247
  %v249 = vsel %vm190, %v235, 0.0
  %250 = vadd.xlane.f32.xlu0 %v249
  %v251 = vpop.xlane.xlu0 %250
  %v252 = vsel %vm190, %v236, 0.0
  %253 = vadd.xlane.f32.xlu0 %v252
  %v254 = vpop.xlane.xlu0 %253
  %v255 = vsel %vm190, %v237, 0.0
  %256 = vadd.xlane.f32.xlu0 %v255
  %v257 = vpop.xlane.xlu0 %256
  %v258 = vsel %vm190, %v238, 0.0
  %259 = vadd.xlane.f32.xlu0 %v258
  %v260 = vpop.xlane.xlu0 %259
  %v261 = vsel %vm190, %v239, 0.0
  %262 = vadd.xlane.f32.xlu0 %v261
  %v263 = vpop.xlane.xlu0 %262
  %264 = vst.msk [vmem:[%s5] sm:$0xff] %vm223, %v242
  %265 = vst.msk [vmem:[%s5 + $0x8] sm:$0xff] %vm223, %v245
  %266 = vst.msk [vmem:[%s5 + $0x10] sm:$0xff] %vm223, %v248
  %267 = vst.msk [vmem:[%s5 + $0x18] sm:$0xff] %vm223, %v251
  %268 = vst.msk [vmem:[%s5 + $0x20] sm:$0xff] %vm223, %v254
  %269 = vst.msk [vmem:[%s5 + $0x28] sm:$0xff] %vm223, %v257
  %270 = vst.msk [vmem:[%s5 + $0x30] sm:$0xff] %vm223, %v260
  %271 = vst.msk [vmem:[%s5 + $0x38] sm:$0xff] %vm223, %v263
  // Predicated region
  $region14: #{generator_forward.9} parent=0 // pred_check
    _
  $region15: #{generator_forward.9} parent=0 // pred_check_branch
    %273 = sbr.rel (0) target = $region17
  $region16: #{generator_forward.9} parent=0 // pred_region
    _
  $region17: #{generator_forward.9} parent=0 // pred_fallthru
    _
  // Predicated region
  $region18: #{generator_forward.9} parent=0 // pred_check
    _
  $region19: #{generator_forward.9} parent=0 // pred_check_branch
    %275 = sbr.rel (0) target = $region21
  $region20: #{generator_forward.9} parent=0 // pred_region
    _
  $region21: #{generator_forward.9} parent=0 // pred_fallthru
    _
  // Predicated region
  $region22: #{generator_forward.9} parent=0 // pred_check
    _
  $region23: #{generator_forward.9} parent=0 // pred_check_branch
    %277 = sbr.rel (0) target = $region25
  $region24: #{generator_forward.9} parent=0 // pred_region
    _
  $region25: #{generator_forward.9} parent=0 // pred_fallthru
    _
  // Predicated region
  $region26: #{generator_forward.9} parent=0 // pred_check
    _
  $region27: #{generator_forward.9} parent=0 // pred_check_branch
    %279 = sbr.rel (0) target = $region29
  $region28: #{generator_forward.9} parent=0 // pred_region
    _
  $region29: #{generator_forward.9} parent=0 // pred_fallthru
    _
  // Predicated region
  $region30: #{generator_forward.9} parent=0 // pred_check
    _
  $region31: #{generator_forward.9} parent=0 // pred_check_branch
    %281 = sbr.rel (0) target = $region33
  $region32: #{generator_forward.9} parent=0 // pred_region
    _
  $region33: #{generator_forward.9} parent=0 // pred_fallthru
    _
  // Predicated region
  $region34: #{generator_forward.9} parent=0 // pred_check
    _
  $region35: #{generator_forward.9} parent=0 // pred_check_branch
    %283 = sbr.rel (0) target = $region37
  $region36: #{generator_forward.9} parent=0 // pred_region
    _
  $region37: #{generator_forward.9} parent=0 // pred_fallthru
    _

// kernel: generator_forward.12
$region0: #{generator_forward.12}
  #allocation0 [shape = 'u32[]', space=smem, size = 0x4, offset = 0x4, fixed_abs, tag = 'smem constant byte address 0x4 - core index']
  #allocation1 [shape = 'u32[72,128]{1,0:T(1,128)}', space=vmem, size = 0x9000, scoped, tag = 'internal scratch']
  %s0 = inlined_call_operand.vmem [shape: f32[32,128], index: 0, kind: input, shape index: {}]
  %s1 = inlined_call_operand.vmem [shape: f32[32,1], index: 1, kind: input, shape index: {}]
  %s2 = inlined_call_operand.vmem [shape: f32[32,1], index: 2, kind: input, shape index: {}]
  %s3 = inlined_call_operand.vmem [shape: bf16[32,128], index: 3, kind: output, shape index: {}]
  %s4 = sld [smem:[#allocation0]]
  $region22: #{generator_forward.12} parent=0
    _
  %s6 = ssub.s32 1, %s4
  %s7 = scalar_select 0, %s6, %s4
  // Predicated region
  $region2: #{generator_forward.12} parent=0 // pred_check
    _
  $region3: #{generator_forward.12} parent=0 // pred_check_branch
    %9 = sbr.rel (0) target = $region5
  $region4: #{generator_forward.12} parent=0 // pred_region
    _
  $region5: #{generator_forward.12} parent=0 // pred_fallthru
    _
  // Predicated region
  $region6: #{generator_forward.12} parent=0 // pred_check
    _
  $region7: #{generator_forward.12} parent=0 // pred_check_branch
    %11 = sbr.rel (0) target = $region9
  $region8: #{generator_forward.12} parent=0 // pred_region
    _
  $region9: #{generator_forward.12} parent=0 // pred_fallthru
    _
  // Predicated region
  $region10: #{generator_forward.12} parent=0 // pred_check
    _
  $region11: #{generator_forward.12} parent=0 // pred_check_branch
    %13 = sbr.rel (0) target = $region13
  $region12: #{generator_forward.12} parent=0 // pred_region
    _
  $region13: #{generator_forward.12} parent=0 // pred_fallthru
    _
  %v14 = vld [vmem:[%s0] sm:$0xff]
  %v15 = vld [vmem:[%s0 + $0x8] sm:$0xff]
  %v16 = vld [vmem:[%s0 + $0x10] sm:$0xff]
  %v17 = vld [vmem:[%s0 + $0x18] sm:$0xff]
  %v18 = vld [vmem:[%s1] sm:$0xff]
  %v19 = vld [vmem:[%s1 + $0x8] sm:$0xff]
  %v20 = vld [vmem:[%s1 + $0x10] sm:$0xff]
  %v21 = vld [vmem:[%s1 + $0x18] sm:$0xff]
  %23 = vset.pattern.permute.xlu0 0
  %24 = vperm.xlu0 %23, %v18
  %v25 = vpop.permute.xlu0 %24
  %28 = vset.pattern.permute.xlu0 0
  %29 = vperm.xlu0 %28, %v19
  %v30 = vpop.permute.xlu0 %29
  %33 = vset.pattern.permute.xlu0 0
  %34 = vperm.xlu0 %33, %v20
  %v35 = vpop.permute.xlu0 %34
  %38 = vset.pattern.permute.xlu0 0
  %39 = vperm.xlu0 %38, %v21
  %v40 = vpop.permute.xlu0 %39
  %v42 = vmul.f32 %v14, %v25
  %v43 = vmul.f32 %v15, %v30
  %v44 = vmul.f32 %v16, %v35
  %v45 = vmul.f32 %v17, %v40
  %v46 = vld [vmem:[%s2] sm:$0xff]
  %v47 = vld [vmem:[%s2 + $0x8] sm:$0xff]
  %v48 = vld [vmem:[%s2 + $0x10] sm:$0xff]
  %v49 = vld [vmem:[%s2 + $0x18] sm:$0xff]
  %51 = vset.pattern.permute.xlu0 0
  %52 = vperm.xlu0 %51, %v46
  %v53 = vpop.permute.xlu0 %52
  %56 = vset.pattern.permute.xlu0 0
  %57 = vperm.xlu0 %56, %v47
  %v58 = vpop.permute.xlu0 %57
  %61 = vset.pattern.permute.xlu0 0
  %62 = vperm.xlu0 %61, %v48
  %v63 = vpop.permute.xlu0 %62
  %66 = vset.pattern.permute.xlu0 0
  %67 = vperm.xlu0 %66, %v49
  %v68 = vpop.permute.xlu0 %67
  %v70 = vadd.f32 %v42, %v53
  %v71 = vadd.f32 %v43, %v58
  %v72 = vadd.f32 %v44, %v63
  %v73 = vadd.f32 %v45, %v68
  %v74 = vmax.f32 %v70, 0.0
  %v75 = vmax.f32 %v71, 0.0
  %v76 = vmax.f32 %v72, 0.0
  %v77 = vmax.f32 %v73, 0.0
  %v78 = vpack.c.bf16 %v74, %v74
  %v79 = vpack.c.bf16 %v75, %v75
  %v80 = vpack.c.bf16 %v76, %v76
  %v81 = vpack.c.bf16 %v77, %v77
  %82 = vst [vmem:[%s3] sm:$0xf] %v78
  %83 = vst [vmem:[%s3 + $0x4] sm:$0xf] %v79
  %84 = vst [vmem:[%s3 + $0x8] sm:$0xf] %v80
  %85 = vst [vmem:[%s3 + $0xc] sm:$0xf] %v81
  // Predicated region
  $region14: #{generator_forward.12} parent=0 // pred_check
    _
  $region15: #{generator_forward.12} parent=0 // pred_check_branch
    %87 = sbr.rel (0) target = $region17
  $region16: #{generator_forward.12} parent=0 // pred_region
    _
  $region17: #{generator_forward.12} parent=0 // pred_fallthru
    _
  // Predicated region
  $region18: #{generator_forward.12} parent=0 // pred_check
    _
  $region19: #{generator_forward.12} parent=0 // pred_check_branch
    %89 = sbr.rel (0) target = $region21
  $region20: #{generator_forward.12} parent=0 // pred_region
    _
  $region21: #{generator_forward.12} parent=0 // pred_fallthru
    _

// kernel: generator_forward.11
$region0: #{generator_forward.11}
  #allocation0 [shape = 'u32[]', space=smem, size = 0x4, offset = 0x4, fixed_abs, tag = 'smem constant byte address 0x4 - core index']
  #allocation1 [shape = 'u32[72,128]{1,0:T(1,128)}', space=vmem, size = 0x9000, scoped, tag = 'internal scratch']
  %s0 = inlined_call_operand.vmem [shape: bf16[1024,128], index: 0, kind: input, shape index: {}]
  %s1 = inlined_call_operand.vmem [shape: bf16[32,1024], index: 1, kind: input, shape index: {}]
  %s2 = inlined_call_operand.vmem [shape: f32[32,1], index: 2, kind: input, shape index: {}]
  %s3 = inlined_call_operand.vmem [shape: f32[32,128], index: 3, kind: output, shape index: {0}]
  %s4 = inlined_call_operand.vmem [shape: f32[1,32,1], index: 4, kind: output, shape index: {1}]
  %s5 = inlined_call_operand.vmem [shape: f32[1,32,1], index: 5, kind: output, shape index: {2}]
  %6 = xla_tuple %s3, %s4, %s5
  %s7 = sld [smem:[#allocation0]]
  $region38: #{generator_forward.11} parent=0
    _
  %s9 = ssub.s32 1, %s7
  %s10 = scalar_select 0, %s9, %s7
  // Predicated region
  $region2: #{generator_forward.11} parent=0 // pred_check
    _
  $region3: #{generator_forward.11} parent=0 // pred_check_branch
    %12 = sbr.rel (0) target = $region5
  $region4: #{generator_forward.11} parent=0 // pred_region
    _
  $region5: #{generator_forward.11} parent=0 // pred_fallthru
    _
  // Predicated region
  $region6: #{generator_forward.11} parent=0 // pred_check
    _
  $region7: #{generator_forward.11} parent=0 // pred_check_branch
    %14 = sbr.rel (0) target = $region9
  $region8: #{generator_forward.11} parent=0 // pred_region
    _
  $region9: #{generator_forward.11} parent=0 // pred_fallthru
    _
  // Predicated region
  $region10: #{generator_forward.11} parent=0 // pred_check
    _
  $region11: #{generator_forward.11} parent=0 // pred_check_branch
    %16 = sbr.rel (0) target = $region13
  $region12: #{generator_forward.11} parent=0 // pred_region
    _
  $region13: #{generator_forward.11} parent=0 // pred_fallthru
    _
  %v17 = vld [vmem:[%s1] sm:$0xff]
  %v18 = vld [vmem:[%s1 + $0x8] sm:$0xff]
  %v19 = vld [vmem:[%s1 + $0x10] sm:$0xff]
  %v20 = vld [vmem:[%s1 + $0x18] sm:$0xff]
  %v21 = vld [vmem:[%s1 + $0x20] sm:$0xff]
  %v22 = vld [vmem:[%s1 + $0x28] sm:$0xff]
  %v23 = vld [vmem:[%s1 + $0x30] sm:$0xff]
  %v24 = vld [vmem:[%s1 + $0x38] sm:$0xff]
  %v25 = vld [vmem:[%s1 + $0x40] sm:$0xff]
  %v26 = vld [vmem:[%s1 + $0x48] sm:$0xff]
  %v27 = vld [vmem:[%s1 + $0x50] sm:$0xff]
  %v28 = vld [vmem:[%s1 + $0x58] sm:$0xff]
  %v29 = vld [vmem:[%s1 + $0x60] sm:$0xff]
  %v30 = vld [vmem:[%s1 + $0x68] sm:$0xff]
  %v31 = vld [vmem:[%s1 + $0x70] sm:$0xff]
  %v32 = vld [vmem:[%s1 + $0x78] sm:$0xff]
  %v33 = vld [vmem:[%s0] sm:$0xf]
  %v34 = vld [vmem:[%s0 + $0x4] sm:$0xf]
  %v35 = vld [vmem:[%s0 + $0x8] sm:$0xf]
  %v36 = vld [vmem:[%s0 + $0xc] sm:$0xf]
  %v37 = vld [vmem:[%s0 + $0x10] sm:$0xf]
  %v38 = vld [vmem:[%s0 + $0x14] sm:$0xf]
  %v39 = vld [vmem:[%s0 + $0x18] sm:$0xf]
  %v40 = vld [vmem:[%s0 + $0x1c] sm:$0xf]
  %v41 = vld [vmem:[%s0 + $0x20] sm:$0xf]
  %v42 = vld [vmem:[%s0 + $0x24] sm:$0xf]
  %v43 = vld [vmem:[%s0 + $0x28] sm:$0xf]
  %v44 = vld [vmem:[%s0 + $0x2c] sm:$0xf]
  %v45 = vld [vmem:[%s0 + $0x30] sm:$0xf]
  %v46 = vld [vmem:[%s0 + $0x34] sm:$0xf]
  %v47 = vld [vmem:[%s0 + $0x38] sm:$0xf]
  %v48 = vld [vmem:[%s0 + $0x3c] sm:$0xf]
  %v49 = vld [vmem:[%s0 + $0x40] sm:$0xf]
  %v50 = vld [vmem:[%s0 + $0x44] sm:$0xf]
  %v51 = vld [vmem:[%s0 + $0x48] sm:$0xf]
  %v52 = vld [vmem:[%s0 + $0x4c] sm:$0xf]
  %v53 = vld [vmem:[%s0 + $0x50] sm:$0xf]
  %v54 = vld [vmem:[%s0 + $0x54] sm:$0xf]
  %v55 = vld [vmem:[%s0 + $0x58] sm:$0xf]
  %v56 = vld [vmem:[%s0 + $0x5c] sm:$0xf]
  %v57 = vld [vmem:[%s0 + $0x60] sm:$0xf]
  %v58 = vld [vmem:[%s0 + $0x64] sm:$0xf]
  %v59 = vld [vmem:[%s0 + $0x68] sm:$0xf]
  %v60 = vld [vmem:[%s0 + $0x6c] sm:$0xf]
  %v61 = vld [vmem:[%s0 + $0x70] sm:$0xf]
  %v62 = vld [vmem:[%s0 + $0x74] sm:$0xf]
  %v63 = vld [vmem:[%s0 + $0x78] sm:$0xf]
  %v64 = vld [vmem:[%s0 + $0x7c] sm:$0xf]
  %v65 = vld [vmem:[%s0 + $0x80] sm:$0xf]
  %v66 = vld [vmem:[%s0 + $0x84] sm:$0xf]
  %v67 = vld [vmem:[%s0 + $0x88] sm:$0xf]
  %v68 = vld [vmem:[%s0 + $0x8c] sm:$0xf]
  %v69 = vld [vmem:[%s0 + $0x90] sm:$0xf]
  %v70 = vld [vmem:[%s0 + $0x94] sm:$0xf]
  %v71 = vld [vmem:[%s0 + $0x98] sm:$0xf]
  %v72 = vld [vmem:[%s0 + $0x9c] sm:$0xf]
  %v73 = vld [vmem:[%s0 + $0xa0] sm:$0xf]
  %v74 = vld [vmem:[%s0 + $0xa4] sm:$0xf]
  %v75 = vld [vmem:[%s0 + $0xa8] sm:$0xf]
  %v76 = vld [vmem:[%s0 + $0xac] sm:$0xf]
  %v77 = vld [vmem:[%s0 + $0xb0] sm:$0xf]
  %v78 = vld [vmem:[%s0 + $0xb4] sm:$0xf]
  %v79 = vld [vmem:[%s0 + $0xb8] sm:$0xf]
  %v80 = vld [vmem:[%s0 + $0xbc] sm:$0xf]
  %v81 = vld [vmem:[%s0 + $0xc0] sm:$0xf]
  %v82 = vld [vmem:[%s0 + $0xc4] sm:$0xf]
  %v83 = vld [vmem:[%s0 + $0xc8] sm:$0xf]
  %v84 = vld [vmem:[%s0 + $0xcc] sm:$0xf]
  %v85 = vld [vmem:[%s0 + $0xd0] sm:$0xf]
  %v86 = vld [vmem:[%s0 + $0xd4] sm:$0xf]
  %v87 = vld [vmem:[%s0 + $0xd8] sm:$0xf]
  %v88 = vld [vmem:[%s0 + $0xdc] sm:$0xf]
  %v89 = vld [vmem:[%s0 + $0xe0] sm:$0xf]
  %v90 = vld [vmem:[%s0 + $0xe4] sm:$0xf]
  %v91 = vld [vmem:[%s0 + $0xe8] sm:$0xf]
  %v92 = vld [vmem:[%s0 + $0xec] sm:$0xf]
  %v93 = vld [vmem:[%s0 + $0xf0] sm:$0xf]
  %v94 = vld [vmem:[%s0 + $0xf4] sm:$0xf]
  %v95 = vld [vmem:[%s0 + $0xf8] sm:$0xf]
  %v96 = vld [vmem:[%s0 + $0xfc] sm:$0xf]
  %v97 = vld [vmem:[%s0 + $0x100] sm:$0xf]
  %v98 = vld [vmem:[%s0 + $0x104] sm:$0xf]
  %v99 = vld [vmem:[%s0 + $0x108] sm:$0xf]
  %v100 = vld [vmem:[%s0 + $0x10c] sm:$0xf]
  %v101 = vld [vmem:[%s0 + $0x110] sm:$0xf]
  %v102 = vld [vmem:[%s0 + $0x114] sm:$0xf]
  %v103 = vld [vmem:[%s0 + $0x118] sm:$0xf]
  %v104 = vld [vmem:[%s0 + $0x11c] sm:$0xf]
  %v105 = vld [vmem:[%s0 + $0x120] sm:$0xf]
  %v106 = vld [vmem:[%s0 + $0x124] sm:$0xf]
  %v107 = vld [vmem:[%s0 + $0x128] sm:$0xf]
  %v108 = vld [vmem:[%s0 + $0x12c] sm:$0xf]
  %v109 = vld [vmem:[%s0 + $0x130] sm:$0xf]
  %v110 = vld [vmem:[%s0 + $0x134] sm:$0xf]
  %v111 = vld [vmem:[%s0 + $0x138] sm:$0xf]
  %v112 = vld [vmem:[%s0 + $0x13c] sm:$0xf]
  %v113 = vld [vmem:[%s0 + $0x140] sm:$0xf]
  %v114 = vld [vmem:[%s0 + $0x144] sm:$0xf]
  %v115 = vld [vmem:[%s0 + $0x148] sm:$0xf]
  %v116 = vld [vmem:[%s0 + $0x14c] sm:$0xf]
  %v117 = vld [vmem:[%s0 + $0x150] sm:$0xf]
  %v118 = vld [vmem:[%s0 + $0x154] sm:$0xf]
  %v119 = vld [vmem:[%s0 + $0x158] sm:$0xf]
  %v120 = vld [vmem:[%s0 + $0x15c] sm:$0xf]
  %v121 = vld [vmem:[%s0 + $0x160] sm:$0xf]
  %v122 = vld [vmem:[%s0 + $0x164] sm:$0xf]
  %v123 = vld [vmem:[%s0 + $0x168] sm:$0xf]
  %v124 = vld [vmem:[%s0 + $0x16c] sm:$0xf]
  %v125 = vld [vmem:[%s0 + $0x170] sm:$0xf]
  %v126 = vld [vmem:[%s0 + $0x174] sm:$0xf]
  %v127 = vld [vmem:[%s0 + $0x178] sm:$0xf]
  %v128 = vld [vmem:[%s0 + $0x17c] sm:$0xf]
  %v129 = vld [vmem:[%s0 + $0x180] sm:$0xf]
  %v130 = vld [vmem:[%s0 + $0x184] sm:$0xf]
  %v131 = vld [vmem:[%s0 + $0x188] sm:$0xf]
  %v132 = vld [vmem:[%s0 + $0x18c] sm:$0xf]
  %v133 = vld [vmem:[%s0 + $0x190] sm:$0xf]
  %v134 = vld [vmem:[%s0 + $0x194] sm:$0xf]
  %v135 = vld [vmem:[%s0 + $0x198] sm:$0xf]
  %v136 = vld [vmem:[%s0 + $0x19c] sm:$0xf]
  %v137 = vld [vmem:[%s0 + $0x1a0] sm:$0xf]
  %v138 = vld [vmem:[%s0 + $0x1a4] sm:$0xf]
  %v139 = vld [vmem:[%s0 + $0x1a8] sm:$0xf]
  %v140 = vld [vmem:[%s0 + $0x1ac] sm:$0xf]
  %v141 = vld [vmem:[%s0 + $0x1b0] sm:$0xf]
  %v142 = vld [vmem:[%s0 + $0x1b4] sm:$0xf]
  %v143 = vld [vmem:[%s0 + $0x1b8] sm:$0xf]
  %v144 = vld [vmem:[%s0 + $0x1bc] sm:$0xf]
  %v145 = vld [vmem:[%s0 + $0x1c0] sm:$0xf]
  %v146 = vld [vmem:[%s0 + $0x1c4] sm:$0xf]
  %v147 = vld [vmem:[%s0 + $0x1c8] sm:$0xf]
  %v148 = vld [vmem:[%s0 + $0x1cc] sm:$0xf]
  %v149 = vld [vmem:[%s0 + $0x1d0] sm:$0xf]
  %v150 = vld [vmem:[%s0 + $0x1d4] sm:$0xf]
  %v151 = vld [vmem:[%s0 + $0x1d8] sm:$0xf]
  %v152 = vld [vmem:[%s0 + $0x1dc] sm:$0xf]
  %v153 = vld [vmem:[%s0 + $0x1e0] sm:$0xf]
  %v154 = vld [vmem:[%s0 + $0x1e4] sm:$0xf]
  %v155 = vld [vmem:[%s0 + $0x1e8] sm:$0xf]
  %v156 = vld [vmem:[%s0 + $0x1ec] sm:$0xf]
  %v157 = vld [vmem:[%s0 + $0x1f0] sm:$0xf]
  %v158 = vld [vmem:[%s0 + $0x1f4] sm:$0xf]
  %v159 = vld [vmem:[%s0 + $0x1f8] sm:$0xf]
  %v160 = vld [vmem:[%s0 + $0x1fc] sm:$0xf]
  %v161 = vld [vmem:[%s2] sm:$0xff]
  %v162 = vld [vmem:[%s2 + $0x8] sm:$0xff]
  %v163 = vld [vmem:[%s2 + $0x10] sm:$0xff]
  %v164 = vld [vmem:[%s2 + $0x18] sm:$0xff]
  %166 = vset.pattern.permute.xlu0 0
  %167 = vperm.xlu0 %166, %v161
  %v168 = vpop.permute.xlu0 %167
  %171 = vset.pattern.permute.xlu0 0
  %172 = vperm.xlu0 %171, %v162
  %v173 = vpop.permute.xlu0 %172
  %176 = vset.pattern.permute.xlu0 0
  %177 = vperm.xlu0 %176, %v163
  %v178 = vpop.permute.xlu0 %177
  %181 = vset.pattern.permute.xlu0 0
  %182 = vperm.xlu0 %181, %v164
  %v183 = vpop.permute.xlu0 %182
  %v201 = vunpack.c.l.b16 %v17
  %v202 = vunpack.c.h.b16 %v17
  %v203 = vunpack.c.l.b16 %v18
  %v204 = vunpack.c.h.b16 %v18
  %v205 = vunpack.c.l.b16 %v19
  %v206 = vunpack.c.h.b16 %v19
  %v207 = vunpack.c.l.b16 %v20
  %v208 = vunpack.c.h.b16 %v20
  %v209 = vunpack.c.l.b16 %v21
  %v210 = vunpack.c.h.b16 %v21
  %v211 = vunpack.c.l.b16 %v22
  %v212 = vunpack.c.h.b16 %v22
  %v213 = vunpack.c.l.b16 %v23
  %v214 = vunpack.c.h.b16 %v23
  %v215 = vunpack.c.l.b16 %v24
  %v216 = vunpack.c.h.b16 %v24
  %v217 = vunpack.c.l.b16 %v25
  %v218 = vunpack.c.h.b16 %v25
  %v219 = vunpack.c.l.b16 %v26
  %v220 = vunpack.c.h.b16 %v26
  %v221 = vunpack.c.l.b16 %v27
  %v222 = vunpack.c.h.b16 %v27
  %v223 = vunpack.c.l.b16 %v28
  %v224 = vunpack.c.h.b16 %v28
  %v225 = vunpack.c.l.b16 %v29
  %v226 = vunpack.c.h.b16 %v29
  %v227 = vunpack.c.l.b16 %v30
  %v228 = vunpack.c.h.b16 %v30
  %v229 = vunpack.c.l.b16 %v31
  %v230 = vunpack.c.h.b16 %v31
  %v231 = vunpack.c.l.b16 %v32
  %v232 = vunpack.c.h.b16 %v32
  %v233 = vpack.c.b16 %v209, %v201
  %v234 = vpack.c.b16 %v210, %v202
  %v235 = vpack.c.b16 %v211, %v203
  %v236 = vpack.c.b16 %v212, %v204
  %v237 = vpack.c.b16 %v213, %v205
  %v238 = vpack.c.b16 %v214, %v206
  %v239 = vpack.c.b16 %v215, %v207
  %v240 = vpack.c.b16 %v216, %v208
  %v241 = vpack.c.b16 %v225, %v217
  %v242 = vpack.c.b16 %v226, %v218
  %v243 = vpack.c.b16 %v227, %v219
  %v244 = vpack.c.b16 %v228, %v220
  %v245 = vpack.c.b16 %v229, %v221
  %v246 = vpack.c.b16 %v230, %v222
  %v247 = vpack.c.b16 %v231, %v223
  %v248 = vpack.c.b16 %v232, %v224
  %v393 = vunpack.c.l.b16 %v33
  %v394 = vunpack.c.l.b16 %v34
  %v395 = vunpack.c.l.b16 %v35
  %v396 = vunpack.c.l.b16 %v36
  %v397 = vunpack.c.l.b16 %v37
  %v398 = vunpack.c.l.b16 %v38
  %v399 = vunpack.c.l.b16 %v39
  %v400 = vunpack.c.l.b16 %v40
  %v401 = vunpack.c.l.b16 %v41
  %v402 = vunpack.c.l.b16 %v42
  %v403 = vunpack.c.l.b16 %v43
  %v404 = vunpack.c.l.b16 %v44
  %v405 = vunpack.c.l.b16 %v45
  %v406 = vunpack.c.l.b16 %v46
  %v407 = vunpack.c.l.b16 %v47
  %v408 = vunpack.c.l.b16 %v48
  %v409 = vunpack.c.l.b16 %v49
  %v410 = vunpack.c.l.b16 %v50
  %v411 = vunpack.c.l.b16 %v51
  %v412 = vunpack.c.l.b16 %v52
  %v413 = vunpack.c.l.b16 %v53
  %v414 = vunpack.c.l.b16 %v54
  %v415 = vunpack.c.l.b16 %v55
  %v416 = vunpack.c.l.b16 %v56
  %v417 = vunpack.c.l.b16 %v57
  %v418 = vunpack.c.l.b16 %v58
  %v419 = vunpack.c.l.b16 %v59
  %v420 = vunpack.c.l.b16 %v60
  %v421 = vunpack.c.l.b16 %v61
  %v422 = vunpack.c.l.b16 %v62
  %v423 = vunpack.c.l.b16 %v63
  %v424 = vunpack.c.l.b16 %v64
  %v425 = vunpack.c.l.b16 %v65
  %v426 = vunpack.c.l.b16 %v66
  %v427 = vunpack.c.l.b16 %v67
  %v428 = vunpack.c.l.b16 %v68
  %v429 = vunpack.c.l.b16 %v69
  %v430 = vunpack.c.l.b16 %v70
  %v431 = vunpack.c.l.b16 %v71
  %v432 = vunpack.c.l.b16 %v72
  %v433 = vunpack.c.l.b16 %v73
  %v434 = vunpack.c.l.b16 %v74
  %v435 = vunpack.c.l.b16 %v75
  %v436 = vunpack.c.l.b16 %v76
  %v437 = vunpack.c.l.b16 %v77
  %v438 = vunpack.c.l.b16 %v78
  %v439 = vunpack.c.l.b16 %v79
  %v440 = vunpack.c.l.b16 %v80
  %v441 = vunpack.c.l.b16 %v81
  %v442 = vunpack.c.l.b16 %v82
  %v443 = vunpack.c.l.b16 %v83
  %v444 = vunpack.c.l.b16 %v84
  %v445 = vunpack.c.l.b16 %v85
  %v446 = vunpack.c.l.b16 %v86
  %v447 = vunpack.c.l.b16 %v87
  %v448 = vunpack.c.l.b16 %v88
  %v449 = vunpack.c.l.b16 %v89
  %v450 = vunpack.c.l.b16 %v90
  %v451 = vunpack.c.l.b16 %v91
  %v452 = vunpack.c.l.b16 %v92
  %v453 = vunpack.c.l.b16 %v93
  %v454 = vunpack.c.l.b16 %v94
  %v455 = vunpack.c.l.b16 %v95
  %v456 = vunpack.c.l.b16 %v96
  %v457 = vunpack.c.l.b16 %v97
  %v458 = vunpack.c.l.b16 %v98
  %v459 = vunpack.c.l.b16 %v99
  %v460 = vunpack.c.l.b16 %v100
  %v461 = vunpack.c.l.b16 %v101
  %v462 = vunpack.c.l.b16 %v102
  %v463 = vunpack.c.l.b16 %v103
  %v464 = vunpack.c.l.b16 %v104
  %v465 = vunpack.c.l.b16 %v105
  %v466 = vunpack.c.l.b16 %v106
  %v467 = vunpack.c.l.b16 %v107
  %v468 = vunpack.c.l.b16 %v108
  %v469 = vunpack.c.l.b16 %v109
  %v470 = vunpack.c.l.b16 %v110
  %v471 = vunpack.c.l.b16 %v111
  %v472 = vunpack.c.l.b16 %v112
  %v473 = vunpack.c.l.b16 %v113
  %v474 = vunpack.c.l.b16 %v114
  %v475 = vunpack.c.l.b16 %v115
  %v476 = vunpack.c.l.b16 %v116
  %v477 = vunpack.c.l.b16 %v117
  %v478 = vunpack.c.l.b16 %v118
  %v479 = vunpack.c.l.b16 %v119
  %v480 = vunpack.c.l.b16 %v120
  %v481 = vunpack.c.l.b16 %v121
  %v482 = vunpack.c.l.b16 %v122
  %v483 = vunpack.c.l.b16 %v123
  %v484 = vunpack.c.l.b16 %v124
  %v485 = vunpack.c.l.b16 %v125
  %v486 = vunpack.c.l.b16 %v126
  %v487 = vunpack.c.l.b16 %v127
  %v488 = vunpack.c.l.b16 %v128
  %v489 = vunpack.c.l.b16 %v129
  %v490 = vunpack.c.l.b16 %v130
  %v491 = vunpack.c.l.b16 %v131
  %v492 = vunpack.c.l.b16 %v132
  %v493 = vunpack.c.l.b16 %v133
  %v494 = vunpack.c.l.b16 %v134
  %v495 = vunpack.c.l.b16 %v135
  %v496 = vunpack.c.l.b16 %v136
  %v497 = vunpack.c.l.b16 %v137
  %v498 = vunpack.c.l.b16 %v138
  %v499 = vunpack.c.l.b16 %v139
  %v500 = vunpack.c.l.b16 %v140
  %v501 = vunpack.c.l.b16 %v141
  %v502 = vunpack.c.l.b16 %v142
  %v503 = vunpack.c.l.b16 %v143
  %v504 = vunpack.c.l.b16 %v144
  %v505 = vunpack.c.l.b16 %v145
  %v506 = vunpack.c.l.b16 %v146
  %v507 = vunpack.c.l.b16 %v147
  %v508 = vunpack.c.l.b16 %v148
  %v509 = vunpack.c.l.b16 %v149
  %v510 = vunpack.c.l.b16 %v150
  %v511 = vunpack.c.l.b16 %v151
  %v512 = vunpack.c.l.b16 %v152
  %v513 = vunpack.c.l.b16 %v153
  %v514 = vunpack.c.l.b16 %v154
  %v515 = vunpack.c.l.b16 %v155
  %v516 = vunpack.c.l.b16 %v156
  %v517 = vunpack.c.l.b16 %v157
  %v518 = vunpack.c.l.b16 %v158
  %v519 = vunpack.c.l.b16 %v159
  %v520 = vunpack.c.l.b16 %v160
  %v521 = vpack.c.b16 %v394, %v393
  %v522 = vpack.c.b16 %v396, %v395
  %v523 = vpack.c.b16 %v398, %v397
  %v524 = vpack.c.b16 %v400, %v399
  %v525 = vpack.c.b16 %v402, %v401
  %v526 = vpack.c.b16 %v404, %v403
  %v527 = vpack.c.b16 %v406, %v405
  %v528 = vpack.c.b16 %v408, %v407
  %v529 = vpack.c.b16 %v410, %v409
  %v530 = vpack.c.b16 %v412, %v411
  %v531 = vpack.c.b16 %v414, %v413
  %v532 = vpack.c.b16 %v416, %v415
  %v533 = vpack.c.b16 %v418, %v417
  %v534 = vpack.c.b16 %v420, %v419
  %v535 = vpack.c.b16 %v422, %v421
  %v536 = vpack.c.b16 %v424, %v423
  %v537 = vpack.c.b16 %v426, %v425
  %v538 = vpack.c.b16 %v428, %v427
  %v539 = vpack.c.b16 %v430, %v429
  %v540 = vpack.c.b16 %v432, %v431
  %v541 = vpack.c.b16 %v434, %v433
  %v542 = vpack.c.b16 %v436, %v435
  %v543 = vpack.c.b16 %v438, %v437
  %v544 = vpack.c.b16 %v440, %v439
  %v545 = vpack.c.b16 %v442, %v441
  %v546 = vpack.c.b16 %v444, %v443
  %v547 = vpack.c.b16 %v446, %v445
  %v548 = vpack.c.b16 %v448, %v447
  %v549 = vpack.c.b16 %v450, %v449
  %v550 = vpack.c.b16 %v452, %v451
  %v551 = vpack.c.b16 %v454, %v453
  %v552 = vpack.c.b16 %v456, %v455
  %v553 = vpack.c.b16 %v458, %v457
  %v554 = vpack.c.b16 %v460, %v459
  %v555 = vpack.c.b16 %v462, %v461
  %v556 = vpack.c.b16 %v464, %v463
  %v557 = vpack.c.b16 %v466, %v465
  %v558 = vpack.c.b16 %v468, %v467
  %v559 = vpack.c.b16 %v470, %v469
  %v560 = vpack.c.b16 %v472, %v471
  %v561 = vpack.c.b16 %v474, %v473
  %v562 = vpack.c.b16 %v476, %v475
  %v563 = vpack.c.b16 %v478, %v477
  %v564 = vpack.c.b16 %v480, %v479
  %v565 = vpack.c.b16 %v482, %v481
  %v566 = vpack.c.b16 %v484, %v483
  %v567 = vpack.c.b16 %v486, %v485
  %v568 = vpack.c.b16 %v488, %v487
  %v569 = vpack.c.b16 %v490, %v489
  %v570 = vpack.c.b16 %v492, %v491
  %v571 = vpack.c.b16 %v494, %v493
  %v572 = vpack.c.b16 %v496, %v495
  %v573 = vpack.c.b16 %v498, %v497
  %v574 = vpack.c.b16 %v500, %v499
  %v575 = vpack.c.b16 %v502, %v501
  %v576 = vpack.c.b16 %v504, %v503
  %v577 = vpack.c.b16 %v506, %v505
  %v578 = vpack.c.b16 %v508, %v507
  %v579 = vpack.c.b16 %v510, %v509
  %v580 = vpack.c.b16 %v512, %v511
  %v581 = vpack.c.b16 %v514, %v513
  %v582 = vpack.c.b16 %v516, %v515
  %v583 = vpack.c.b16 %v518, %v517
  %v584 = vpack.c.b16 %v520, %v519
  %649 = vmatpush.bf16.msra.mxu0 %v528
  %650 = vmatpush.bf16.msra.mxu0 %v527
  %651 = vmatpush.bf16.msra.mxu0 %v526
  %652 = vmatpush.bf16.msra.mxu0 %v525
  %653 = vmatpush.bf16.msra.mxu0 %v524
  %654 = vmatpush.bf16.msra.mxu0 %v523
  %655 = vmatpush.bf16.msra.mxu0 %v522
  %656 = vmatpush.bf16.msra.mxu0 %v521
  %657 = vmatmul.bf16.gmra.mxu0 %v233
  %v658 = vpop.f32.mrf.mxu0
  %v659 = vadd.f32 %v168, %v658
  %v660 = vpop.f32.mrf.mxu0
  %v661 = vadd.f32 %v173, %v660
  %662 = vmatmul.bf16.gmra.mxu0 %v241
  %v663 = vpop.f32.mrf.mxu0
  %v664 = vadd.f32 %v178, %v663
  %v665 = vpop.f32.mrf.mxu0
  %v666 = vadd.f32 %v183, %v665
  %667 = vdwg.mxu0
  %668 = vmatpush.bf16.msra.mxu0 %v536
  %669 = vmatpush.bf16.msra.mxu0 %v535
  %670 = vmatpush.bf16.msra.mxu0 %v534
  %671 = vmatpush.bf16.msra.mxu0 %v533
  %672 = vmatpush.bf16.msra.mxu0 %v532
  %673 = vmatpush.bf16.msra.mxu0 %v531
  %674 = vmatpush.bf16.msra.mxu0 %v530
  %675 = vmatpush.bf16.msra.mxu0 %v529
  %676 = vmatmul.bf16.gmra.mxu0 %v234
  %v677 = vpop.f32.mrf.mxu0
  %v678 = vadd.f32 %v659, %v677
  %v679 = vpop.f32.mrf.mxu0
  %v680 = vadd.f32 %v661, %v679
  %681 = vmatmul.bf16.gmra.mxu0 %v242
  %v682 = vpop.f32.mrf.mxu0
  %v683 = vadd.f32 %v664, %v682
  %v684 = vpop.f32.mrf.mxu0
  %v685 = vadd.f32 %v666, %v684
  %686 = vdwg.mxu0
  %687 = vmatpush.bf16.msra.mxu0 %v544
  %688 = vmatpush.bf16.msra.mxu0 %v543
  %689 = vmatpush.bf16.msra.mxu0 %v542
  %690 = vmatpush.bf16.msra.mxu0 %v541
  %691 = vmatpush.bf16.msra.mxu0 %v540
  %692 = vmatpush.bf16.msra.mxu0 %v539
  %693 = vmatpush.bf16.msra.mxu0 %v538
  %694 = vmatpush.bf16.msra.mxu0 %v537
  %695 = vmatmul.bf16.gmra.mxu0 %v235
  %v696 = vpop.f32.mrf.mxu0
  %v697 = vadd.f32 %v678, %v696
  %v698 = vpop.f32.mrf.mxu0
  %v699 = vadd.f32 %v680, %v698
  %700 = vmatmul.bf16.gmra.mxu0 %v243
  %v701 = vpop.f32.mrf.mxu0
  %v702 = vadd.f32 %v683, %v701
  %v703 = vpop.f32.mrf.mxu0
  %v704 = vadd.f32 %v685, %v703
  %705 = vdwg.mxu0
  %706 = vmatpush.bf16.msra.mxu0 %v552
  %707 = vmatpush.bf16.msra.mxu0 %v551
  %708 = vmatpush.bf16.msra.mxu0 %v550
  %709 = vmatpush.bf16.msra.mxu0 %v549
  %710 = vmatpush.bf16.msra.mxu0 %v548
  %711 = vmatpush.bf16.msra.mxu0 %v547
  %712 = vmatpush.bf16.msra.mxu0 %v546
  %713 = vmatpush.bf16.msra.mxu0 %v545
  %714 = vmatmul.bf16.gmra.mxu0 %v236
  %v715 = vpop.f32.mrf.mxu0
  %v716 = vadd.f32 %v697, %v715
  %v717 = vpop.f32.mrf.mxu0
  %v718 = vadd.f32 %v699, %v717
  %719 = vmatmul.bf16.gmra.mxu0 %v244
  %v720 = vpop.f32.mrf.mxu0
  %v721 = vadd.f32 %v702, %v720
  %v722 = vpop.f32.mrf.mxu0
  %v723 = vadd.f32 %v704, %v722
  %724 = vdwg.mxu0
  %725 = vmatpush.bf16.msra.mxu0 %v560
  %726 = vmatpush.bf16.msra.mxu0 %v559
  %727 = vmatpush.bf16.msra.mxu0 %v558
  %728 = vmatpush.bf16.msra.mxu0 %v557
  %729 = vmatpush.bf16.msra.mxu0 %v556
  %730 = vmatpush.bf16.msra.mxu0 %v555
  %731 = vmatpush.bf16.msra.mxu0 %v554
  %732 = vmatpush.bf16.msra.mxu0 %v553
  %733 = vmatmul.bf16.gmra.mxu0 %v237
  %v734 = vpop.f32.mrf.mxu0
  %v735 = vadd.f32 %v716, %v734
  %v736 = vpop.f32.mrf.mxu0
  %v737 = vadd.f32 %v718, %v736
  %738 = vmatmul.bf16.gmra.mxu0 %v245
  %v739 = vpop.f32.mrf.mxu0
  %v740 = vadd.f32 %v721, %v739
  %v741 = vpop.f32.mrf.mxu0
  %v742 = vadd.f32 %v723, %v741
  %743 = vdwg.mxu0
  %744 = vmatpush.bf16.msra.mxu0 %v568
  %745 = vmatpush.bf16.msra.mxu0 %v567
  %746 = vmatpush.bf16.msra.mxu0 %v566
  %747 = vmatpush.bf16.msra.mxu0 %v565
  %748 = vmatpush.bf16.msra.mxu0 %v564
  %749 = vmatpush.bf16.msra.mxu0 %v563
  %750 = vmatpush.bf16.msra.mxu0 %v562
  %751 = vmatpush.bf16.msra.mxu0 %v561
  %752 = vmatmul.bf16.gmra.mxu0 %v238
  %v753 = vpop.f32.mrf.mxu0
  %v754 = vadd.f32 %v735, %v753
  %v755 = vpop.f32.mrf.mxu0
  %v756 = vadd.f32 %v737, %v755
  %757 = vmatmul.bf16.gmra.mxu0 %v246
  %v758 = vpop.f32.mrf.mxu0
  %v759 = vadd.f32 %v740, %v758
  %v760 = vpop.f32.mrf.mxu0
  %v761 = vadd.f32 %v742, %v760
  %762 = vdwg.mxu0
  %763 = vmatpush.bf16.msra.mxu0 %v576
  %764 = vmatpush.bf16.msra.mxu0 %v575
  %765 = vmatpush.bf16.msra.mxu0 %v574
  %766 = vmatpush.bf16.msra.mxu0 %v573
  %767 = vmatpush.bf16.msra.mxu0 %v572
  %768 = vmatpush.bf16.msra.mxu0 %v571
  %769 = vmatpush.bf16.msra.mxu0 %v570
  %770 = vmatpush.bf16.msra.mxu0 %v569
  %771 = vmatmul.bf16.gmra.mxu0 %v239
  %v772 = vpop.f32.mrf.mxu0
  %v773 = vadd.f32 %v754, %v772
  %v774 = vpop.f32.mrf.mxu0
  %v775 = vadd.f32 %v756, %v774
  %776 = vmatmul.bf16.gmra.mxu0 %v247
  %v777 = vpop.f32.mrf.mxu0
  %v778 = vadd.f32 %v759, %v777
  %v779 = vpop.f32.mrf.mxu0
  %v780 = vadd.f32 %v761, %v779
  %781 = vdwg.mxu0
  %782 = vmatpush.bf16.msra.mxu0 %v584
  %783 = vmatpush.bf16.msra.mxu0 %v583
  %784 = vmatpush.bf16.msra.mxu0 %v582
  %785 = vmatpush.bf16.msra.mxu0 %v581
  %786 = vmatpush.bf16.msra.mxu0 %v580
  %787 = vmatpush.bf16.msra.mxu0 %v579
  %788 = vmatpush.bf16.msra.mxu0 %v578
  %789 = vmatpush.bf16.msra.mxu0 %v577
  %790 = vmatmul.bf16.gmra.mxu0 %v240
  %v791 = vpop.f32.mrf.mxu0
  %v792 = vadd.f32 %v773, %v791
  %v793 = vpop.f32.mrf.mxu0
  %v794 = vadd.f32 %v775, %v793
  %795 = vmatmul.bf16.gmra.mxu0 %v248
  %v796 = vpop.f32.mrf.mxu0
  %v797 = vadd.f32 %v778, %v796
  %v798 = vpop.f32.mrf.mxu0
  %v799 = vadd.f32 %v780, %v798
  %800 = vdwg.mxu0
  %801 = vst [vmem:[%s3] sm:$0xff] %v792
  %802 = vst [vmem:[%s3 + $0x8] sm:$0xff] %v794
  %803 = vst [vmem:[%s3 + $0x10] sm:$0xff] %v797
  %804 = vst [vmem:[%s3 + $0x18] sm:$0xff] %v799
  %805 = vadd.xlane.f32.xlu0 %v792
  %v806 = vpop.xlane.xlu0 %805
  %807 = vadd.xlane.f32.xlu0 %v794
  %v808 = vpop.xlane.xlu0 %807
  %809 = vadd.xlane.f32.xlu0 %v797
  %v810 = vpop.xlane.xlu0 %809
  %811 = vadd.xlane.f32.xlu0 %v799
  %v812 = vpop.xlane.xlu0 %811
  %vm813 = vcmask 7168
  %814 = vst.msk [vmem:[%s4] sm:$0xff] %vm813, %v806
  %815 = vst.msk [vmem:[%s4 + $0x8] sm:$0xff] %vm813, %v808
  %816 = vst.msk [vmem:[%s4 + $0x10] sm:$0xff] %vm813, %v810
  %817 = vst.msk [vmem:[%s4 + $0x18] sm:$0xff] %vm813, %v812
  %v818 = vmul.f32 %v792, %v792
  %v819 = vmul.f32 %v794, %v794
  %v820 = vmul.f32 %v797, %v797
  %v821 = vmul.f32 %v799, %v799
  %822 = vadd.xlane.f32.xlu0 %v818
  %v823 = vpop.xlane.xlu0 %822
  %824 = vadd.xlane.f32.xlu0 %v819
  %v825 = vpop.xlane.xlu0 %824
  %826 = vadd.xlane.f32.xlu0 %v820
  %v827 = vpop.xlane.xlu0 %826
  %828 = vadd.xlane.f32.xlu0 %v821
  %v829 = vpop.xlane.xlu0 %828
  %830 = vst.msk [vmem:[%s5] sm:$0xff] %vm813, %v823
  %831 = vst.msk [vmem:[%s5 + $0x8] sm:$0xff] %vm813, %v825
  %832 = vst.msk [vmem:[%s5 + $0x10] sm:$0xff] %vm813, %v827
  %833 = vst.msk [vmem:[%s5 + $0x18] sm:$0xff] %vm813, %v829
  // Predicated region
  $region14: #{generator_forward.11} parent=0 // pred_check
    _
  $region15: #{generator_forward.11} parent=0 // pred_check_branch
    %835 = sbr.rel (0) target = $region17
  $region16: #{generator_forward.11} parent=0 // pred_region
    _
  $region17: #{generator_forward.11} parent=0 // pred_fallthru
    _
  // Predicated region
  $region18: #{generator_forward.11} parent=0 // pred_check
    _
  $region19: #{generator_forward.11} parent=0 // pred_check_branch
    %837 = sbr.rel (0) target = $region21
  $region20: #{generator_forward.11} parent=0 // pred_region
    _
  $region21: #{generator_forward.11} parent=0 // pred_fallthru
    _
  // Predicated region
  $region22: #{generator_forward.11} parent=0 // pred_check
    _
  $region23: #{generator_forward.11} parent=0 // pred_check_branch
    %839 = sbr.rel (0) target = $region25
  $region24: #{generator_forward.11} parent=0 // pred_region
    _
  $region25: #{generator_forward.11} parent=0 // pred_fallthru
    _
  // Predicated region
  $region26: #{generator_forward.11} parent=0 // pred_check
    _
  $region27: #{generator_forward.11} parent=0 // pred_check_branch
    %841 = sbr.rel (0) target = $region29
  $region28: #{generator_forward.11} parent=0 // pred_region
    _
  $region29: #{generator_forward.11} parent=0 // pred_fallthru
    _
  // Predicated region
  $region30: #{generator_forward.11} parent=0 // pred_check
    _
  $region31: #{generator_forward.11} parent=0 // pred_check_branch
    %843 = sbr.rel (0) target = $region33
  $region32: #{generator_forward.11} parent=0 // pred_region
    _
  $region33: #{generator_forward.11} parent=0 // pred_fallthru
    _
  // Predicated region
  $region34: #{generator_forward.11} parent=0 // pred_check
    _
  $region35: #{generator_forward.11} parent=0 // pred_check_branch
    %845 = sbr.rel (0) target = $region37
  $region36: #{generator_forward.11} parent=0 // pred_region
    _
  $region37: #{generator_forward.11} parent=0 // pred_fallthru
    _

// kernel: generator_forward.13
$region0: #{generator_forward.13}
  #allocation0 [shape = 'u32[]', space=smem, size = 0x4, offset = 0x4, fixed_abs, tag = 'smem constant byte address 0x4 - core index']
  #allocation1 [shape = 'u32[72,128]{1,0:T(1,128)}', space=vmem, size = 0x9000, scoped, tag = 'internal scratch']
  %s0 = inlined_call_operand.vmem [shape: bf16[512,512], index: 0, kind: input, shape index: {}]
  %s1 = inlined_call_operand.vmem [shape: bf16[16,512], index: 1, kind: input, shape index: {}]
  %s2 = inlined_call_operand.vmem [shape: f32[16,1], index: 2, kind: input, shape index: {}]
  %s3 = inlined_call_operand.vmem [shape: f32[16,512], index: 3, kind: output, shape index: {0}]
  %s4 = inlined_call_operand.vmem [shape: f32[1,16,1], index: 4, kind: output, shape index: {1}]
  %s5 = inlined_call_operand.vmem [shape: f32[1,16,1], index: 5, kind: output, shape index: {2}]
  %6 = xla_tuple %s3, %s4, %s5
  %s7 = sld [smem:[#allocation0]]
  $region38: #{generator_forward.13} parent=0
    _
  %s9 = ssub.s32 1, %s7
  %s10 = scalar_select 0, %s9, %s7
  // Predicated region
  $region2: #{generator_forward.13} parent=0 // pred_check
    _
  $region3: #{generator_forward.13} parent=0 // pred_check_branch
    %12 = sbr.rel (0) target = $region5
  $region4: #{generator_forward.13} parent=0 // pred_region
    _
  $region5: #{generator_forward.13} parent=0 // pred_fallthru
    _
  // Predicated region
  $region6: #{generator_forward.13} parent=0 // pred_check
    _
  $region7: #{generator_forward.13} parent=0 // pred_check_branch
    %14 = sbr.rel (0) target = $region9
  $region8: #{generator_forward.13} parent=0 // pred_region
    _
  $region9: #{generator_forward.13} parent=0 // pred_fallthru
    _
  // Predicated region
  $region10: #{generator_forward.13} parent=0 // pred_check
    _
  $region11: #{generator_forward.13} parent=0 // pred_check_branch
    %16 = sbr.rel (0) target = $region13
  $region12: #{generator_forward.13} parent=0 // pred_region
    _
  $region13: #{generator_forward.13} parent=0 // pred_fallthru
    _
  %v17 = vld [vmem:[%s1] sm:$0xff]
  %v18 = vld [vmem:[%s1 + $0x8] sm:$0xff]
  %v19 = vld [vmem:[%s1 + $0x10] sm:$0xff]
  %v20 = vld [vmem:[%s1 + $0x18] sm:$0xff]
  %v21 = vld [vmem:[%s0] sm:$0xff]
  %v22 = vld [vmem:[%s0 + $0x8] sm:$0xff]
  %v23 = vld [vmem:[%s0 + $0x10] sm:$0xff]
  %v24 = vld [vmem:[%s0 + $0x18] sm:$0xff]
  %v25 = vld [vmem:[%s0 + $0x20] sm:$0xff]
  %v26 = vld [vmem:[%s0 + $0x28] sm:$0xff]
  %v27 = vld [vmem:[%s0 + $0x30] sm:$0xff]
  %v28 = vld [vmem:[%s0 + $0x38] sm:$0xff]
  %v29 = vld [vmem:[%s0 + $0x40] sm:$0xff]
  %v30 = vld [vmem:[%s0 + $0x48] sm:$0xff]
  %v31 = vld [vmem:[%s0 + $0x50] sm:$0xff]
  %v32 = vld [vmem:[%s0 + $0x58] sm:$0xff]
  %v33 = vld [vmem:[%s0 + $0x60] sm:$0xff]
  %v34 = vld [vmem:[%s0 + $0x68] sm:$0xff]
  %v35 = vld [vmem:[%s0 + $0x70] sm:$0xff]
  %v36 = vld [vmem:[%s0 + $0x78] sm:$0xff]
  %v37 = vld [vmem:[%s0 + $0x80] sm:$0xff]
  %v38 = vld [vmem:[%s0 + $0x88] sm:$0xff]
  %v39 = vld [vmem:[%s0 + $0x90] sm:$0xff]
  %v40 = vld [vmem:[%s0 + $0x98] sm:$0xff]
  %v41 = vld [vmem:[%s0 + $0xa0] sm:$0xff]
  %v42 = vld [vmem:[%s0 + $0xa8] sm:$0xff]
  %v43 = vld [vmem:[%s0 + $0xb0] sm:$0xff]
  %v44 = vld [vmem:[%s0 + $0xb8] sm:$0xff]
  %v45 = vld [vmem:[%s0 + $0xc0] sm:$0xff]
  %v46 = vld [vmem:[%s0 + $0xc8] sm:$0xff]
  %v47 = vld [vmem:[%s0 + $0xd0] sm:$0xff]
  %v48 = vld [vmem:[%s0 + $0xd8] sm:$0xff]
  %v49 = vld [vmem:[%s0 + $0xe0] sm:$0xff]
  %v50 = vld [vmem:[%s0 + $0xe8] sm:$0xff]
  %v51 = vld [vmem:[%s0 + $0xf0] sm:$0xff]
  %v52 = vld [vmem:[%s0 + $0xf8] sm:$0xff]
  %v53 = vld [vmem:[%s0 + $0x100] sm:$0xff]
  %v54 = vld [vmem:[%s0 + $0x108] sm:$0xff]
  %v55 = vld [vmem:[%s0 + $0x110] sm:$0xff]
  %v56 = vld [vmem:[%s0 + $0x118] sm:$0xff]
  %v57 = vld [vmem:[%s0 + $0x120] sm:$0xff]
  %v58 = vld [vmem:[%s0 + $0x128] sm:$0xff]
  %v59 = vld [vmem:[%s0 + $0x130] sm:$0xff]
  %v60 = vld [vmem:[%s0 + $0x138] sm:$0xff]
  %v61 = vld [vmem:[%s0 + $0x140] sm:$0xff]
  %v62 = vld [vmem:[%s0 + $0x148] sm:$0xff]
  %v63 = vld [vmem:[%s0 + $0x150] sm:$0xff]
  %v64 = vld [vmem:[%s0 + $0x158] sm:$0xff]
  %v65 = vld [vmem:[%s0 + $0x160] sm:$0xff]
  %v66 = vld [vmem:[%s0 + $0x168] sm:$0xff]
  %v67 = vld [vmem:[%s0 + $0x170] sm:$0xff]
  %v68 = vld [vmem:[%s0 + $0x178] sm:$0xff]
  %v69 = vld [vmem:[%s0 + $0x180] sm:$0xff]
  %v70 = vld [vmem:[%s0 + $0x188] sm:$0xff]
  %v71 = vld [vmem:[%s0 + $0x190] sm:$0xff]
  %v72 = vld [vmem:[%s0 + $0x198] sm:$0xff]
  %v73 = vld [vmem:[%s0 + $0x1a0] sm:$0xff]
  %v74 = vld [vmem:[%s0 + $0x1a8] sm:$0xff]
  %v75 = vld [vmem:[%s0 + $0x1b0] sm:$0xff]
  %v76 = vld [vmem:[%s0 + $0x1b8] sm:$0xff]
  %v77 = vld [vmem:[%s0 + $0x1c0] sm:$0xff]
  %v78 = vld [vmem:[%s0 + $0x1c8] sm:$0xff]
  %v79 = vld [vmem:[%s0 + $0x1d0] sm:$0xff]
  %v80 = vld [vmem:[%s0 + $0x1d8] sm:$0xff]
  %v81 = vld [vmem:[%s0 + $0x1e0] sm:$0xff]
  %v82 = vld [vmem:[%s0 + $0x1e8] sm:$0xff]
  %v83 = vld [vmem:[%s0 + $0x1f0] sm:$0xff]
  %v84 = vld [vmem:[%s0 + $0x1f8] sm:$0xff]
  %v85 = vld [vmem:[%s0 + $0x200] sm:$0xff]
  %v86 = vld [vmem:[%s0 + $0x208] sm:$0xff]
  %v87 = vld [vmem:[%s0 + $0x210] sm:$0xff]
  %v88 = vld [vmem:[%s0 + $0x218] sm:$0xff]
  %v89 = vld [vmem:[%s0 + $0x220] sm:$0xff]
  %v90 = vld [vmem:[%s0 + $0x228] sm:$0xff]
  %v91 = vld [vmem:[%s0 + $0x230] sm:$0xff]
  %v92 = vld [vmem:[%s0 + $0x238] sm:$0xff]
  %v93 = vld [vmem:[%s0 + $0x240] sm:$0xff]
  %v94 = vld [vmem:[%s0 + $0x248] sm:$0xff]
  %v95 = vld [vmem:[%s0 + $0x250] sm:$0xff]
  %v96 = vld [vmem:[%s0 + $0x258] sm:$0xff]
  %v97 = vld [vmem:[%s0 + $0x260] sm:$0xff]
  %v98 = vld [vmem:[%s0 + $0x268] sm:$0xff]
  %v99 = vld [vmem:[%s0 + $0x270] sm:$0xff]
  %v100 = vld [vmem:[%s0 + $0x278] sm:$0xff]
  %v101 = vld [vmem:[%s0 + $0x280] sm:$0xff]
  %v102 = vld [vmem:[%s0 + $0x288] sm:$0xff]
  %v103 = vld [vmem:[%s0 + $0x290] sm:$0xff]
  %v104 = vld [vmem:[%s0 + $0x298] sm:$0xff]
  %v105 = vld [vmem:[%s0 + $0x2a0] sm:$0xff]
  %v106 = vld [vmem:[%s0 + $0x2a8] sm:$0xff]
  %v107 = vld [vmem:[%s0 + $0x2b0] sm:$0xff]
  %v108 = vld [vmem:[%s0 + $0x2b8] sm:$0xff]
  %v109 = vld [vmem:[%s0 + $0x2c0] sm:$0xff]
  %v110 = vld [vmem:[%s0 + $0x2c8] sm:$0xff]
  %v111 = vld [vmem:[%s0 + $0x2d0] sm:$0xff]
  %v112 = vld [vmem:[%s0 + $0x2d8] sm:$0xff]
  %v113 = vld [vmem:[%s0 + $0x2e0] sm:$0xff]
  %v114 = vld [vmem:[%s0 + $0x2e8] sm:$0xff]
  %v115 = vld [vmem:[%s0 + $0x2f0] sm:$0xff]
  %v116 = vld [vmem:[%s0 + $0x2f8] sm:$0xff]
  %v117 = vld [vmem:[%s0 + $0x300] sm:$0xff]
  %v118 = vld [vmem:[%s0 + $0x308] sm:$0xff]
  %v119 = vld [vmem:[%s0 + $0x310] sm:$0xff]
  %v120 = vld [vmem:[%s0 + $0x318] sm:$0xff]
  %v121 = vld [vmem:[%s0 + $0x320] sm:$0xff]
  %v122 = vld [vmem:[%s0 + $0x328] sm:$0xff]
  %v123 = vld [vmem:[%s0 + $0x330] sm:$0xff]
  %v124 = vld [vmem:[%s0 + $0x338] sm:$0xff]
  %v125 = vld [vmem:[%s0 + $0x340] sm:$0xff]
  %v126 = vld [vmem:[%s0 + $0x348] sm:$0xff]
  %v127 = vld [vmem:[%s0 + $0x350] sm:$0xff]
  %v128 = vld [vmem:[%s0 + $0x358] sm:$0xff]
  %v129 = vld [vmem:[%s0 + $0x360] sm:$0xff]
  %v130 = vld [vmem:[%s0 + $0x368] sm:$0xff]
  %v131 = vld [vmem:[%s0 + $0x370] sm:$0xff]
  %v132 = vld [vmem:[%s0 + $0x378] sm:$0xff]
  %v133 = vld [vmem:[%s0 + $0x380] sm:$0xff]
  %v134 = vld [vmem:[%s0 + $0x388] sm:$0xff]
  %v135 = vld [vmem:[%s0 + $0x390] sm:$0xff]
  %v136 = vld [vmem:[%s0 + $0x398] sm:$0xff]
  %v137 = vld [vmem:[%s0 + $0x3a0] sm:$0xff]
  %v138 = vld [vmem:[%s0 + $0x3a8] sm:$0xff]
  %v139 = vld [vmem:[%s0 + $0x3b0] sm:$0xff]
  %v140 = vld [vmem:[%s0 + $0x3b8] sm:$0xff]
  %v141 = vld [vmem:[%s0 + $0x3c0] sm:$0xff]
  %v142 = vld [vmem:[%s0 + $0x3c8] sm:$0xff]
  %v143 = vld [vmem:[%s0 + $0x3d0] sm:$0xff]
  %v144 = vld [vmem:[%s0 + $0x3d8] sm:$0xff]
  %v145 = vld [vmem:[%s0 + $0x3e0] sm:$0xff]
  %v146 = vld [vmem:[%s0 + $0x3e8] sm:$0xff]
  %v147 = vld [vmem:[%s0 + $0x3f0] sm:$0xff]
  %v148 = vld [vmem:[%s0 + $0x3f8] sm:$0xff]
  %v149 = vld [vmem:[%s2] sm:$0xff]
  %v150 = vld [vmem:[%s2 + $0x8] sm:$0xff]
  %152 = vset.pattern.permute.xlu0 0
  %153 = vperm.xlu0 %152, %v149
  %v154 = vpop.permute.xlu0 %153
  %157 = vset.pattern.permute.xlu0 0
  %158 = vperm.xlu0 %157, %v150
  %v159 = vpop.permute.xlu0 %158
  %v165 = vunpack.c.l.b16 %v17
  %v166 = vunpack.c.h.b16 %v17
  %v167 = vunpack.c.l.b16 %v18
  %v168 = vunpack.c.h.b16 %v18
  %v169 = vunpack.c.l.b16 %v19
  %v170 = vunpack.c.h.b16 %v19
  %v171 = vunpack.c.l.b16 %v20
  %v172 = vunpack.c.h.b16 %v20
  %v173 = vpack.c.b16 %v169, %v165
  %v174 = vpack.c.b16 %v170, %v166
  %v175 = vpack.c.b16 %v171, %v167
  %v176 = vpack.c.b16 %v172, %v168
  %v309 = vunpack.c.l.b16 %v21
  %v310 = vunpack.c.h.b16 %v21
  %v311 = vunpack.c.l.b16 %v22
  %v312 = vunpack.c.h.b16 %v22
  %v313 = vunpack.c.l.b16 %v23
  %v314 = vunpack.c.h.b16 %v23
  %v315 = vunpack.c.l.b16 %v24
  %v316 = vunpack.c.h.b16 %v24
  %v317 = vunpack.c.l.b16 %v25
  %v318 = vunpack.c.h.b16 %v25
  %v319 = vunpack.c.l.b16 %v26
  %v320 = vunpack.c.h.b16 %v26
  %v321 = vunpack.c.l.b16 %v27
  %v322 = vunpack.c.h.b16 %v27
  %v323 = vunpack.c.l.b16 %v28
  %v324 = vunpack.c.h.b16 %v28
  %v325 = vunpack.c.l.b16 %v29
  %v326 = vunpack.c.h.b16 %v29
  %v327 = vunpack.c.l.b16 %v30
  %v328 = vunpack.c.h.b16 %v30
  %v329 = vunpack.c.l.b16 %v31
  %v330 = vunpack.c.h.b16 %v31
  %v331 = vunpack.c.l.b16 %v32
  %v332 = vunpack.c.h.b16 %v32
  %v333 = vunpack.c.l.b16 %v33
  %v334 = vunpack.c.h.b16 %v33
  %v335 = vunpack.c.l.b16 %v34
  %v336 = vunpack.c.h.b16 %v34
  %v337 = vunpack.c.l.b16 %v35
  %v338 = vunpack.c.h.b16 %v35
  %v339 = vunpack.c.l.b16 %v36
  %v340 = vunpack.c.h.b16 %v36
  %v341 = vunpack.c.l.b16 %v37
  %v342 = vunpack.c.h.b16 %v37
  %v343 = vunpack.c.l.b16 %v38
  %v344 = vunpack.c.h.b16 %v38
  %v345 = vunpack.c.l.b16 %v39
  %v346 = vunpack.c.h.b16 %v39
  %v347 = vunpack.c.l.b16 %v40
  %v348 = vunpack.c.h.b16 %v40
  %v349 = vunpack.c.l.b16 %v41
  %v350 = vunpack.c.h.b16 %v41
  %v351 = vunpack.c.l.b16 %v42
  %v352 = vunpack.c.h.b16 %v42
  %v353 = vunpack.c.l.b16 %v43
  %v354 = vunpack.c.h.b16 %v43
  %v355 = vunpack.c.l.b16 %v44
  %v356 = vunpack.c.h.b16 %v44
  %v357 = vunpack.c.l.b16 %v45
  %v358 = vunpack.c.h.b16 %v45
  %v359 = vunpack.c.l.b16 %v46
  %v360 = vunpack.c.h.b16 %v46
  %v361 = vunpack.c.l.b16 %v47
  %v362 = vunpack.c.h.b16 %v47
  %v363 = vunpack.c.l.b16 %v48
  %v364 = vunpack.c.h.b16 %v48
  %v365 = vunpack.c.l.b16 %v49
  %v366 = vunpack.c.h.b16 %v49
  %v367 = vunpack.c.l.b16 %v50
  %v368 = vunpack.c.h.b16 %v50
  %v369 = vunpack.c.l.b16 %v51
  %v370 = vunpack.c.h.b16 %v51
  %v371 = vunpack.c.l.b16 %v52
  %v372 = vunpack.c.h.b16 %v52
  %v373 = vunpack.c.l.b16 %v53
  %v374 = vunpack.c.h.b16 %v53
  %v375 = vunpack.c.l.b16 %v54
  %v376 = vunpack.c.h.b16 %v54
  %v377 = vunpack.c.l.b16 %v55
  %v378 = vunpack.c.h.b16 %v55
  %v379 = vunpack.c.l.b16 %v56
  %v380 = vunpack.c.h.b16 %v56
  %v381 = vunpack.c.l.b16 %v57
  %v382 = vunpack.c.h.b16 %v57
  %v383 = vunpack.c.l.b16 %v58
  %v384 = vunpack.c.h.b16 %v58
  %v385 = vunpack.c.l.b16 %v59
  %v386 = vunpack.c.h.b16 %v59
  %v387 = vunpack.c.l.b16 %v60
  %v388 = vunpack.c.h.b16 %v60
  %v389 = vunpack.c.l.b16 %v61
  %v390 = vunpack.c.h.b16 %v61
  %v391 = vunpack.c.l.b16 %v62
  %v392 = vunpack.c.h.b16 %v62
  %v393 = vunpack.c.l.b16 %v63
  %v394 = vunpack.c.h.b16 %v63
  %v395 = vunpack.c.l.b16 %v64
  %v396 = vunpack.c.h.b16 %v64
  %v397 = vunpack.c.l.b16 %v65
  %v398 = vunpack.c.h.b16 %v65
  %v399 = vunpack.c.l.b16 %v66
  %v400 = vunpack.c.h.b16 %v66
  %v401 = vunpack.c.l.b16 %v67
  %v402 = vunpack.c.h.b16 %v67
  %v403 = vunpack.c.l.b16 %v68
  %v404 = vunpack.c.h.b16 %v68
  %v405 = vunpack.c.l.b16 %v69
  %v406 = vunpack.c.h.b16 %v69
  %v407 = vunpack.c.l.b16 %v70
  %v408 = vunpack.c.h.b16 %v70
  %v409 = vunpack.c.l.b16 %v71
  %v410 = vunpack.c.h.b16 %v71
  %v411 = vunpack.c.l.b16 %v72
  %v412 = vunpack.c.h.b16 %v72
  %v413 = vunpack.c.l.b16 %v73
  %v414 = vunpack.c.h.b16 %v73
  %v415 = vunpack.c.l.b16 %v74
  %v416 = vunpack.c.h.b16 %v74
  %v417 = vunpack.c.l.b16 %v75
  %v418 = vunpack.c.h.b16 %v75
  %v419 = vunpack.c.l.b16 %v76
  %v420 = vunpack.c.h.b16 %v76
  %v421 = vunpack.c.l.b16 %v77
  %v422 = vunpack.c.h.b16 %v77
  %v423 = vunpack.c.l.b16 %v78
  %v424 = vunpack.c.h.b16 %v78
  %v425 = vunpack.c.l.b16 %v79
  %v426 = vunpack.c.h.b16 %v79
  %v427 = vunpack.c.l.b16 %v80
  %v428 = vunpack.c.h.b16 %v80
  %v429 = vunpack.c.l.b16 %v81
  %v430 = vunpack.c.h.b16 %v81
  %v431 = vunpack.c.l.b16 %v82
  %v432 = vunpack.c.h.b16 %v82
  %v433 = vunpack.c.l.b16 %v83
  %v434 = vunpack.c.h.b16 %v83
  %v435 = vunpack.c.l.b16 %v84
  %v436 = vunpack.c.h.b16 %v84
  %v437 = vunpack.c.l.b16 %v85
  %v438 = vunpack.c.h.b16 %v85
  %v439 = vunpack.c.l.b16 %v86
  %v440 = vunpack.c.h.b16 %v86
  %v441 = vunpack.c.l.b16 %v87
  %v442 = vunpack.c.h.b16 %v87
  %v443 = vunpack.c.l.b16 %v88
  %v444 = vunpack.c.h.b16 %v88
  %v445 = vunpack.c.l.b16 %v89
  %v446 = vunpack.c.h.b16 %v89
  %v447 = vunpack.c.l.b16 %v90
  %v448 = vunpack.c.h.b16 %v90
  %v449 = vunpack.c.l.b16 %v91
  %v450 = vunpack.c.h.b16 %v91
  %v451 = vunpack.c.l.b16 %v92
  %v452 = vunpack.c.h.b16 %v92
  %v453 = vunpack.c.l.b16 %v93
  %v454 = vunpack.c.h.b16 %v93
  %v455 = vunpack.c.l.b16 %v94
  %v456 = vunpack.c.h.b16 %v94
  %v457 = vunpack.c.l.b16 %v95
  %v458 = vunpack.c.h.b16 %v95
  %v459 = vunpack.c.l.b16 %v96
  %v460 = vunpack.c.h.b16 %v96
  %v461 = vunpack.c.l.b16 %v97
  %v462 = vunpack.c.h.b16 %v97
  %v463 = vunpack.c.l.b16 %v98
  %v464 = vunpack.c.h.b16 %v98
  %v465 = vunpack.c.l.b16 %v99
  %v466 = vunpack.c.h.b16 %v99
  %v467 = vunpack.c.l.b16 %v100
  %v468 = vunpack.c.h.b16 %v100
  %v469 = vunpack.c.l.b16 %v101
  %v470 = vunpack.c.h.b16 %v101
  %v471 = vunpack.c.l.b16 %v102
  %v472 = vunpack.c.h.b16 %v102
  %v473 = vunpack.c.l.b16 %v103
  %v474 = vunpack.c.h.b16 %v103
  %v475 = vunpack.c.l.b16 %v104
  %v476 = vunpack.c.h.b16 %v104
  %v477 = vunpack.c.l.b16 %v105
  %v478 = vunpack.c.h.b16 %v105
  %v479 = vunpack.c.l.b16 %v106
  %v480 = vunpack.c.h.b16 %v106
  %v481 = vunpack.c.l.b16 %v107
  %v482 = vunpack.c.h.b16 %v107
  %v483 = vunpack.c.l.b16 %v108
  %v484 = vunpack.c.h.b16 %v108
  %v485 = vunpack.c.l.b16 %v109
  %v486 = vunpack.c.h.b16 %v109
  %v487 = vunpack.c.l.b16 %v110
  %v488 = vunpack.c.h.b16 %v110
  %v489 = vunpack.c.l.b16 %v111
  %v490 = vunpack.c.h.b16 %v111
  %v491 = vunpack.c.l.b16 %v112
  %v492 = vunpack.c.h.b16 %v112
  %v493 = vunpack.c.l.b16 %v113
  %v494 = vunpack.c.h.b16 %v113
  %v495 = vunpack.c.l.b16 %v114
  %v496 = vunpack.c.h.b16 %v114
  %v497 = vunpack.c.l.b16 %v115
  %v498 = vunpack.c.h.b16 %v115
  %v499 = vunpack.c.l.b16 %v116
  %v500 = vunpack.c.h.b16 %v116
  %v501 = vunpack.c.l.b16 %v117
  %v502 = vunpack.c.h.b16 %v117
  %v503 = vunpack.c.l.b16 %v118
  %v504 = vunpack.c.h.b16 %v118
  %v505 = vunpack.c.l.b16 %v119
  %v506 = vunpack.c.h.b16 %v119
  %v507 = vunpack.c.l.b16 %v120
  %v508 = vunpack.c.h.b16 %v120
  %v509 = vunpack.c.l.b16 %v121
  %v510 = vunpack.c.h.b16 %v121
  %v511 = vunpack.c.l.b16 %v122
  %v512 = vunpack.c.h.b16 %v122
  %v513 = vunpack.c.l.b16 %v123
  %v514 = vunpack.c.h.b16 %v123
  %v515 = vunpack.c.l.b16 %v124
  %v516 = vunpack.c.h.b16 %v124
  %v517 = vunpack.c.l.b16 %v125
  %v518 = vunpack.c.h.b16 %v125
  %v519 = vunpack.c.l.b16 %v126
  %v520 = vunpack.c.h.b16 %v126
  %v521 = vunpack.c.l.b16 %v127
  %v522 = vunpack.c.h.b16 %v127
  %v523 = vunpack.c.l.b16 %v128
  %v524 = vunpack.c.h.b16 %v128
  %v525 = vunpack.c.l.b16 %v129
  %v526 = vunpack.c.h.b16 %v129
  %v527 = vunpack.c.l.b16 %v130
  %v528 = vunpack.c.h.b16 %v130
  %v529 = vunpack.c.l.b16 %v131
  %v530 = vunpack.c.h.b16 %v131
  %v531 = vunpack.c.l.b16 %v132
  %v532 = vunpack.c.h.b16 %v132
  %v533 = vunpack.c.l.b16 %v133
  %v534 = vunpack.c.h.b16 %v133
  %v535 = vunpack.c.l.b16 %v134
  %v536 = vunpack.c.h.b16 %v134
  %v537 = vunpack.c.l.b16 %v135
  %v538 = vunpack.c.h.b16 %v135
  %v539 = vunpack.c.l.b16 %v136
  %v540 = vunpack.c.h.b16 %v136
  %v541 = vunpack.c.l.b16 %v137
  %v542 = vunpack.c.h.b16 %v137
  %v543 = vunpack.c.l.b16 %v138
  %v544 = vunpack.c.h.b16 %v138
  %v545 = vunpack.c.l.b16 %v139
  %v546 = vunpack.c.h.b16 %v139
  %v547 = vunpack.c.l.b16 %v140
  %v548 = vunpack.c.h.b16 %v140
  %v549 = vunpack.c.l.b16 %v141
  %v550 = vunpack.c.h.b16 %v141
  %v551 = vunpack.c.l.b16 %v142
  %v552 = vunpack.c.h.b16 %v142
  %v553 = vunpack.c.l.b16 %v143
  %v554 = vunpack.c.h.b16 %v143
  %v555 = vunpack.c.l.b16 %v144
  %v556 = vunpack.c.h.b16 %v144
  %v557 = vunpack.c.l.b16 %v145
  %v558 = vunpack.c.h.b16 %v145
  %v559 = vunpack.c.l.b16 %v146
  %v560 = vunpack.c.h.b16 %v146
  %v561 = vunpack.c.l.b16 %v147
  %v562 = vunpack.c.h.b16 %v147
  %v563 = vunpack.c.l.b16 %v148
  %v564 = vunpack.c.h.b16 %v148
  %v565 = vpack.c.b16 %v313, %v309
  %v566 = vpack.c.b16 %v314, %v310
  %v567 = vpack.c.b16 %v315, %v311
  %v568 = vpack.c.b16 %v316, %v312
  %v569 = vpack.c.b16 %v321, %v317
  %v570 = vpack.c.b16 %v322, %v318
  %v571 = vpack.c.b16 %v323, %v319
  %v572 = vpack.c.b16 %v324, %v320
  %v573 = vpack.c.b16 %v329, %v325
  %v574 = vpack.c.b16 %v330, %v326
  %v575 = vpack.c.b16 %v331, %v327
  %v576 = vpack.c.b16 %v332, %v328
  %v577 = vpack.c.b16 %v337, %v333
  %v578 = vpack.c.b16 %v338, %v334
  %v579 = vpack.c.b16 %v339, %v335
  %v580 = vpack.c.b16 %v340, %v336
  %v581 = vpack.c.b16 %v345, %v341
  %v582 = vpack.c.b16 %v346, %v342
  %v583 = vpack.c.b16 %v347, %v343
  %v584 = vpack.c.b16 %v348, %v344
  %v585 = vpack.c.b16 %v353, %v349
  %v586 = vpack.c.b16 %v354, %v350
  %v587 = vpack.c.b16 %v355, %v351
  %v588 = vpack.c.b16 %v356, %v352
  %v589 = vpack.c.b16 %v361, %v357
  %v590 = vpack.c.b16 %v362, %v358
  %v591 = vpack.c.b16 %v363, %v359
  %v592 = vpack.c.b16 %v364, %v360
  %v593 = vpack.c.b16 %v369, %v365
  %v594 = vpack.c.b16 %v370, %v366
  %v595 = vpack.c.b16 %v371, %v367
  %v596 = vpack.c.b16 %v372, %v368
  %v597 = vpack.c.b16 %v377, %v373
  %v598 = vpack.c.b16 %v378, %v374
  %v599 = vpack.c.b16 %v379, %v375
  %v600 = vpack.c.b16 %v380, %v376
  %v601 = vpack.c.b16 %v385, %v381
  %v602 = vpack.c.b16 %v386, %v382
  %v603 = vpack.c.b16 %v387, %v383
  %v604 = vpack.c.b16 %v388, %v384
  %v605 = vpack.c.b16 %v393, %v389
  %v606 = vpack.c.b16 %v394, %v390
  %v607 = vpack.c.b16 %v395, %v391
  %v608 = vpack.c.b16 %v396, %v392
  %v609 = vpack.c.b16 %v401, %v397
  %v610 = vpack.c.b16 %v402, %v398
  %v611 = vpack.c.b16 %v403, %v399
  %v612 = vpack.c.b16 %v404, %v400
  %v613 = vpack.c.b16 %v409, %v405
  %v614 = vpack.c.b16 %v410, %v406
  %v615 = vpack.c.b16 %v411, %v407
  %v616 = vpack.c.b16 %v412, %v408
  %v617 = vpack.c.b16 %v417, %v413
  %v618 = vpack.c.b16 %v418, %v414
  %v619 = vpack.c.b16 %v419, %v415
  %v620 = vpack.c.b16 %v420, %v416
  %v621 = vpack.c.b16 %v425, %v421
  %v622 = vpack.c.b16 %v426, %v422
  %v623 = vpack.c.b16 %v427, %v423
  %v624 = vpack.c.b16 %v428, %v424
  %v625 = vpack.c.b16 %v433, %v429
  %v626 = vpack.c.b16 %v434, %v430
  %v627 = vpack.c.b16 %v435, %v431
  %v628 = vpack.c.b16 %v436, %v432
  %v629 = vpack.c.b16 %v441, %v437
  %v630 = vpack.c.b16 %v442, %v438
  %v631 = vpack.c.b16 %v443, %v439
  %v632 = vpack.c.b16 %v444, %v440
  %v633 = vpack.c.b16 %v449, %v445
  %v634 = vpack.c.b16 %v450, %v446
  %v635 = vpack.c.b16 %v451, %v447
  %v636 = vpack.c.b16 %v452, %v448
  %v637 = vpack.c.b16 %v457, %v453
  %v638 = vpack.c.b16 %v458, %v454
  %v639 = vpack.c.b16 %v459, %v455
  %v640 = vpack.c.b16 %v460, %v456
  %v641 = vpack.c.b16 %v465, %v461
  %v642 = vpack.c.b16 %v466, %v462
  %v643 = vpack.c.b16 %v467, %v463
  %v644 = vpack.c.b16 %v468, %v464
  %v645 = vpack.c.b16 %v473, %v469
  %v646 = vpack.c.b16 %v474, %v470
  %v647 = vpack.c.b16 %v475, %v471
  %v648 = vpack.c.b16 %v476, %v472
  %v649 = vpack.c.b16 %v481, %v477
  %v650 = vpack.c.b16 %v482, %v478
  %v651 = vpack.c.b16 %v483, %v479
  %v652 = vpack.c.b16 %v484, %v480
  %v653 = vpack.c.b16 %v489, %v485
  %v654 = vpack.c.b16 %v490, %v486
  %v655 = vpack.c.b16 %v491, %v487
  %v656 = vpack.c.b16 %v492, %v488
  %v657 = vpack.c.b16 %v497, %v493
  %v658 = vpack.c.b16 %v498, %v494
  %v659 = vpack.c.b16 %v499, %v495
  %v660 = vpack.c.b16 %v500, %v496
  %v661 = vpack.c.b16 %v505, %v501
  %v662 = vpack.c.b16 %v506, %v502
  %v663 = vpack.c.b16 %v507, %v503
  %v664 = vpack.c.b16 %v508, %v504
  %v665 = vpack.c.b16 %v513, %v509
  %v666 = vpack.c.b16 %v514, %v510
  %v667 = vpack.c.b16 %v515, %v511
  %v668 = vpack.c.b16 %v516, %v512
  %v669 = vpack.c.b16 %v521, %v517
  %v670 = vpack.c.b16 %v522, %v518
  %v671 = vpack.c.b16 %v523, %v519
  %v672 = vpack.c.b16 %v524, %v520
  %v673 = vpack.c.b16 %v529, %v525
  %v674 = vpack.c.b16 %v530, %v526
  %v675 = vpack.c.b16 %v531, %v527
  %v676 = vpack.c.b16 %v532, %v528
  %v677 = vpack.c.b16 %v537, %v533
  %v678 = vpack.c.b16 %v538, %v534
  %v679 = vpack.c.b16 %v539, %v535
  %v680 = vpack.c.b16 %v540, %v536
  %v681 = vpack.c.b16 %v545, %v541
  %v682 = vpack.c.b16 %v546, %v542
  %v683 = vpack.c.b16 %v547, %v543
  %v684 = vpack.c.b16 %v548, %v544
  %v685 = vpack.c.b16 %v553, %v549
  %v686 = vpack.c.b16 %v554, %v550
  %v687 = vpack.c.b16 %v555, %v551
  %v688 = vpack.c.b16 %v556, %v552
  %v689 = vpack.c.b16 %v561, %v557
  %v690 = vpack.c.b16 %v562, %v558
  %v691 = vpack.c.b16 %v563, %v559
  %v692 = vpack.c.b16 %v564, %v560
  %821 = vmatpush.bf16.msra.mxu0 %v593
  %822 = vmatpush.bf16.msra.mxu0 %v589
  %823 = vmatpush.bf16.msra.mxu0 %v585
  %824 = vmatpush.bf16.msra.mxu0 %v581
  %825 = vmatpush.bf16.msra.mxu0 %v577
  %826 = vmatpush.bf16.msra.mxu0 %v573
  %827 = vmatpush.bf16.msra.mxu0 %v569
  %828 = vmatpush.bf16.msra.mxu0 %v565
  %829 = vmatmul.bf16.gmra.mxu0 %v173
  %v830 = vpop.f32.mrf.mxu0
  %v831 = vadd.f32 %v154, %v830
  %v832 = vpop.f32.mrf.mxu0
  %v833 = vadd.f32 %v159, %v832
  %834 = vdwg.mxu0
  %835 = vmatpush.bf16.msra.mxu0 %v625
  %836 = vmatpush.bf16.msra.mxu0 %v621
  %837 = vmatpush.bf16.msra.mxu0 %v617
  %838 = vmatpush.bf16.msra.mxu0 %v613
  %839 = vmatpush.bf16.msra.mxu0 %v609
  %840 = vmatpush.bf16.msra.mxu0 %v605
  %841 = vmatpush.bf16.msra.mxu0 %v601
  %842 = vmatpush.bf16.msra.mxu0 %v597
  %843 = vmatmul.bf16.gmra.mxu0 %v174
  %v844 = vpop.f32.mrf.mxu0
  %v845 = vadd.f32 %v831, %v844
  %v846 = vpop.f32.mrf.mxu0
  %v847 = vadd.f32 %v833, %v846
  %848 = vdwg.mxu0
  %849 = vmatpush.bf16.msra.mxu0 %v657
  %850 = vmatpush.bf16.msra.mxu0 %v653
  %851 = vmatpush.bf16.msra.mxu0 %v649
  %852 = vmatpush.bf16.msra.mxu0 %v645
  %853 = vmatpush.bf16.msra.mxu0 %v641
  %854 = vmatpush.bf16.msra.mxu0 %v637
  %855 = vmatpush.bf16.msra.mxu0 %v633
  %856 = vmatpush.bf16.msra.mxu0 %v629
  %857 = vmatmul.bf16.gmra.mxu0 %v175
  %v858 = vpop.f32.mrf.mxu0
  %v859 = vadd.f32 %v845, %v858
  %v860 = vpop.f32.mrf.mxu0
  %v861 = vadd.f32 %v847, %v860
  %862 = vdwg.mxu0
  %863 = vmatpush.bf16.msra.mxu0 %v689
  %864 = vmatpush.bf16.msra.mxu0 %v685
  %865 = vmatpush.bf16.msra.mxu0 %v681
  %866 = vmatpush.bf16.msra.mxu0 %v677
  %867 = vmatpush.bf16.msra.mxu0 %v673
  %868 = vmatpush.bf16.msra.mxu0 %v669
  %869 = vmatpush.bf16.msra.mxu0 %v665
  %870 = vmatpush.bf16.msra.mxu0 %v661
  %871 = vmatmul.bf16.gmra.mxu0 %v176
  %v872 = vpop.f32.mrf.mxu0
  %v873 = vadd.f32 %v859, %v872
  %v874 = vpop.f32.mrf.mxu0
  %v875 = vadd.f32 %v861, %v874
  %876 = vdwg.mxu0
  %877 = vmatpush.bf16.msra.mxu0 %v594
  %878 = vmatpush.bf16.msra.mxu0 %v590
  %879 = vmatpush.bf16.msra.mxu0 %v586
  %880 = vmatpush.bf16.msra.mxu0 %v582
  %881 = vmatpush.bf16.msra.mxu0 %v578
  %882 = vmatpush.bf16.msra.mxu0 %v574
  %883 = vmatpush.bf16.msra.mxu0 %v570
  %884 = vmatpush.bf16.msra.mxu0 %v566
  %885 = vmatmul.bf16.gmra.mxu0 %v173
  %v886 = vpop.f32.mrf.mxu0
  %v887 = vadd.f32 %v154, %v886
  %v888 = vpop.f32.mrf.mxu0
  %v889 = vadd.f32 %v159, %v888
  %890 = vdwg.mxu0
  %891 = vmatpush.bf16.msra.mxu0 %v626
  %892 = vmatpush.bf16.msra.mxu0 %v622
  %893 = vmatpush.bf16.msra.mxu0 %v618
  %894 = vmatpush.bf16.msra.mxu0 %v614
  %895 = vmatpush.bf16.msra.mxu0 %v610
  %896 = vmatpush.bf16.msra.mxu0 %v606
  %897 = vmatpush.bf16.msra.mxu0 %v602
  %898 = vmatpush.bf16.msra.mxu0 %v598
  %899 = vmatmul.bf16.gmra.mxu0 %v174
  %v900 = vpop.f32.mrf.mxu0
  %v901 = vadd.f32 %v887, %v900
  %v902 = vpop.f32.mrf.mxu0
  %v903 = vadd.f32 %v889, %v902
  %904 = vdwg.mxu0
  %905 = vmatpush.bf16.msra.mxu0 %v658
  %906 = vmatpush.bf16.msra.mxu0 %v654
  %907 = vmatpush.bf16.msra.mxu0 %v650
  %908 = vmatpush.bf16.msra.mxu0 %v646
  %909 = vmatpush.bf16.msra.mxu0 %v642
  %910 = vmatpush.bf16.msra.mxu0 %v638
  %911 = vmatpush.bf16.msra.mxu0 %v634
  %912 = vmatpush.bf16.msra.mxu0 %v630
  %913 = vmatmul.bf16.gmra.mxu0 %v175
  %v914 = vpop.f32.mrf.mxu0
  %v915 = vadd.f32 %v901, %v914
  %v916 = vpop.f32.mrf.mxu0
  %v917 = vadd.f32 %v903, %v916
  %918 = vdwg.mxu0
  %919 = vmatpush.bf16.msra.mxu0 %v690
  %920 = vmatpush.bf16.msra.mxu0 %v686
  %921 = vmatpush.bf16.msra.mxu0 %v682
  %922 = vmatpush.bf16.msra.mxu0 %v678
  %923 = vmatpush.bf16.msra.mxu0 %v674
  %924 = vmatpush.bf16.msra.mxu0 %v670
  %925 = vmatpush.bf16.msra.mxu0 %v666
  %926 = vmatpush.bf16.msra.mxu0 %v662
  %927 = vmatmul.bf16.gmra.mxu0 %v176
  %v928 = vpop.f32.mrf.mxu0
  %v929 = vadd.f32 %v915, %v928
  %v930 = vpop.f32.mrf.mxu0
  %v931 = vadd.f32 %v917, %v930
  %932 = vdwg.mxu0
  %933 = vmatpush.bf16.msra.mxu0 %v595
  %934 = vmatpush.bf16.msra.mxu0 %v591
  %935 = vmatpush.bf16.msra.mxu0 %v587
  %936 = vmatpush.bf16.msra.mxu0 %v583
  %937 = vmatpush.bf16.msra.mxu0 %v579
  %938 = vmatpush.bf16.msra.mxu0 %v575
  %939 = vmatpush.bf16.msra.mxu0 %v571
  %940 = vmatpush.bf16.msra.mxu0 %v567
  %941 = vmatmul.bf16.gmra.mxu0 %v173
  %v942 = vpop.f32.mrf.mxu0
  %v943 = vadd.f32 %v154, %v942
  %v944 = vpop.f32.mrf.mxu0
  %v945 = vadd.f32 %v159, %v944
  %946 = vdwg.mxu0
  %947 = vmatpush.bf16.msra.mxu0 %v627
  %948 = vmatpush.bf16.msra.mxu0 %v623
  %949 = vmatpush.bf16.msra.mxu0 %v619
  %950 = vmatpush.bf16.msra.mxu0 %v615
  %951 = vmatpush.bf16.msra.mxu0 %v611
  %952 = vmatpush.bf16.msra.mxu0 %v607
  %953 = vmatpush.bf16.msra.mxu0 %v603
  %954 = vmatpush.bf16.msra.mxu0 %v599
  %955 = vmatmul.bf16.gmra.mxu0 %v174
  %v956 = vpop.f32.mrf.mxu0
  %v957 = vadd.f32 %v943, %v956
  %v958 = vpop.f32.mrf.mxu0
  %v959 = vadd.f32 %v945, %v958
  %960 = vdwg.mxu0
  %961 = vmatpush.bf16.msra.mxu0 %v659
  %962 = vmatpush.bf16.msra.mxu0 %v655
  %963 = vmatpush.bf16.msra.mxu0 %v651
  %964 = vmatpush.bf16.msra.mxu0 %v647
  %965 = vmatpush.bf16.msra.mxu0 %v643
  %966 = vmatpush.bf16.msra.mxu0 %v639
  %967 = vmatpush.bf16.msra.mxu0 %v635
  %968 = vmatpush.bf16.msra.mxu0 %v631
  %969 = vmatmul.bf16.gmra.mxu0 %v175
  %v970 = vpop.f32.mrf.mxu0
  %v971 = vadd.f32 %v957, %v970
  %v972 = vpop.f32.mrf.mxu0
  %v973 = vadd.f32 %v959, %v972
  %974 = vdwg.mxu0
  %975 = vmatpush.bf16.msra.mxu0 %v691
  %976 = vmatpush.bf16.msra.mxu0 %v687
  %977 = vmatpush.bf16.msra.mxu0 %v683
  %978 = vmatpush.bf16.msra.mxu0 %v679
  %979 = vmatpush.bf16.msra.mxu0 %v675
  %980 = vmatpush.bf16.msra.mxu0 %v671
  %981 = vmatpush.bf16.msra.mxu0 %v667
  %982 = vmatpush.bf16.msra.mxu0 %v663
  %983 = vmatmul.bf16.gmra.mxu0 %v176
  %v984 = vpop.f32.mrf.mxu0
  %v985 = vadd.f32 %v971, %v984
  %v986 = vpop.f32.mrf.mxu0
  %v987 = vadd.f32 %v973, %v986
  %988 = vdwg.mxu0
  %989 = vmatpush.bf16.msra.mxu0 %v596
  %990 = vmatpush.bf16.msra.mxu0 %v592
  %991 = vmatpush.bf16.msra.mxu0 %v588
  %992 = vmatpush.bf16.msra.mxu0 %v584
  %993 = vmatpush.bf16.msra.mxu0 %v580
  %994 = vmatpush.bf16.msra.mxu0 %v576
  %995 = vmatpush.bf16.msra.mxu0 %v572
  %996 = vmatpush.bf16.msra.mxu0 %v568
  %997 = vmatmul.bf16.gmra.mxu0 %v173
  %v998 = vpop.f32.mrf.mxu0
  %v999 = vadd.f32 %v154, %v998
  %v1000 = vpop.f32.mrf.mxu0
  %v1001 = vadd.f32 %v159, %v1000
  %1002 = vdwg.mxu0
  %1003 = vmatpush.bf16.msra.mxu0 %v628
  %1004 = vmatpush.bf16.msra.mxu0 %v624
  %1005 = vmatpush.bf16.msra.mxu0 %v620
  %1006 = vmatpush.bf16.msra.mxu0 %v616
  %1007 = vmatpush.bf16.msra.mxu0 %v612
  %1008 = vmatpush.bf16.msra.mxu0 %v608
  %1009 = vmatpush.bf16.msra.mxu0 %v604
  %1010 = vmatpush.bf16.msra.mxu0 %v600
  %1011 = vmatmul.bf16.gmra.mxu0 %v174
  %v1012 = vpop.f32.mrf.mxu0
  %v1013 = vadd.f32 %v999, %v1012
  %v1014 = vpop.f32.mrf.mxu0
  %v1015 = vadd.f32 %v1001, %v1014
  %1016 = vdwg.mxu0
  %1017 = vmatpush.bf16.msra.mxu0 %v660
  %1018 = vmatpush.bf16.msra.mxu0 %v656
  %1019 = vmatpush.bf16.msra.mxu0 %v652
  %1020 = vmatpush.bf16.msra.mxu0 %v648
  %1021 = vmatpush.bf16.msra.mxu0 %v644
  %1022 = vmatpush.bf16.msra.mxu0 %v640
  %1023 = vmatpush.bf16.msra.mxu0 %v636
  %1024 = vmatpush.bf16.msra.mxu0 %v632
  %1025 = vmatmul.bf16.gmra.mxu0 %v175
  %v1026 = vpop.f32.mrf.mxu0
  %v1027 = vadd.f32 %v1013, %v1026
  %v1028 = vpop.f32.mrf.mxu0
  %v1029 = vadd.f32 %v1015, %v1028
  %1030 = vdwg.mxu0
  %1031 = vmatpush.bf16.msra.mxu0 %v692
  %1032 = vmatpush.bf16.msra.mxu0 %v688
  %1033 = vmatpush.bf16.msra.mxu0 %v684
  %1034 = vmatpush.bf16.msra.mxu0 %v680
  %1035 = vmatpush.bf16.msra.mxu0 %v676
  %1036 = vmatpush.bf16.msra.mxu0 %v672
  %1037 = vmatpush.bf16.msra.mxu0 %v668
  %1038 = vmatpush.bf16.msra.mxu0 %v664
  %1039 = vmatmul.bf16.gmra.mxu0 %v176
  %v1040 = vpop.f32.mrf.mxu0
  %v1041 = vadd.f32 %v1027, %v1040
  %v1042 = vpop.f32.mrf.mxu0
  %v1043 = vadd.f32 %v1029, %v1042
  %1044 = vdwg.mxu0
  %1045 = vst [vmem:[%s3] sm:$0xff] %v873
  %1046 = vst [vmem:[%s3 + $0x8] sm:$0xff] %v929
  %1047 = vst [vmem:[%s3 + $0x10] sm:$0xff] %v985
  %1048 = vst [vmem:[%s3 + $0x18] sm:$0xff] %v1041
  %1049 = vst [vmem:[%s3 + $0x20] sm:$0xff] %v875
  %1050 = vst [vmem:[%s3 + $0x28] sm:$0xff] %v931
  %1051 = vst [vmem:[%s3 + $0x30] sm:$0xff] %v987
  %1052 = vst [vmem:[%s3 + $0x38] sm:$0xff] %v1043
  %v1053 = vadd.f32 %v873, %v929
  %v1054 = vadd.f32 %v1053, %v985
  %v1055 = vadd.f32 %v1054, %v1041
  %1056 = vadd.xlane.f32.xlu0 %v1055
  %v1057 = vpop.xlane.xlu0 %1056
  %v1058 = vadd.f32 %v875, %v931
  %v1059 = vadd.f32 %v1058, %v987
  %v1060 = vadd.f32 %v1059, %v1043
  %1061 = vadd.xlane.f32.xlu0 %v1060
  %v1062 = vpop.xlane.xlu0 %1061
  %vm1063 = vcmask 7168
  %1064 = vst.msk [vmem:[%s4] sm:$0xff] %vm1063, %v1057
  %1065 = vst.msk [vmem:[%s4 + $0x8] sm:$0xff] %vm1063, %v1062
  %v1066 = vmul.f32 %v873, %v873
  %v1067 = vmul.f32 %v929, %v929
  %v1068 = vmul.f32 %v985, %v985
  %v1069 = vmul.f32 %v1041, %v1041
  %v1070 = vmul.f32 %v875, %v875
  %v1071 = vmul.f32 %v931, %v931
  %v1072 = vmul.f32 %v987, %v987
  %v1073 = vmul.f32 %v1043, %v1043
  %v1074 = vadd.f32 %v1066, %v1067
  %v1075 = vadd.f32 %v1074, %v1068
  %v1076 = vadd.f32 %v1075, %v1069
  %1077 = vadd.xlane.f32.xlu0 %v1076
  %v1078 = vpop.xlane.xlu0 %1077
  %v1079 = vadd.f32 %v1070, %v1071
  %v1080 = vadd.f32 %v1079, %v1072
  %v1081 = vadd.f32 %v1080, %v1073
  %1082 = vadd.xlane.f32.xlu0 %v1081
  %v1083 = vpop.xlane.xlu0 %1082
  %1084 = vst.msk [vmem:[%s5] sm:$0xff] %vm1063, %v1078
  %1085 = vst.msk [vmem:[%s5 + $0x8] sm:$0xff] %vm1063, %v1083
  // Predicated region
  $region14: #{generator_forward.13} parent=0 // pred_check
    _
  $region15: #{generator_forward.13} parent=0 // pred_check_branch
    %1087 = sbr.rel (0) target = $region17
  $region16: #{generator_forward.13} parent=0 // pred_region
    _
  $region17: #{generator_forward.13} parent=0 // pred_fallthru
    _
  // Predicated region
  $region18: #{generator_forward.13} parent=0 // pred_check
    _
  $region19: #{generator_forward.13} parent=0 // pred_check_branch
    %1089 = sbr.rel (0) target = $region21
  $region20: #{generator_forward.13} parent=0 // pred_region
    _
  $region21: #{generator_forward.13} parent=0 // pred_fallthru
    _
  // Predicated region
  $region22: #{generator_forward.13} parent=0 // pred_check
    _
  $region23: #{generator_forward.13} parent=0 // pred_check_branch
    %1091 = sbr.rel (0) target = $region25
  $region24: #{generator_forward.13} parent=0 // pred_region
    _
  $region25: #{generator_forward.13} parent=0 // pred_fallthru
    _
  // Predicated region
  $region26: #{generator_forward.13} parent=0 // pred_check
    _
  $region27: #{generator_forward.13} parent=0 // pred_check_branch
    %1093 = sbr.rel (0) target = $region29
  $region28: #{generator_forward.13} parent=0 // pred_region
    _
  $region29: #{generator_forward.13} parent=0 // pred_fallthru
    _
  // Predicated region
  $region30: #{generator_forward.13} parent=0 // pred_check
    _
  $region31: #{generator_forward.13} parent=0 // pred_check_branch
    %1095 = sbr.rel (0) target = $region33
  $region32: #{generator_forward.13} parent=0 // pred_region
    _
  $region33: #{generator_forward.13} parent=0 // pred_fallthru
    _
  // Predicated region
  $region34: #{generator_forward.13} parent=0 // pred_check
    _
  $region35: #{generator_forward.13} parent=0 // pred_check_branch
    %1097 = sbr.rel (0) target = $region37
  $region36: #{generator_forward.13} parent=0 // pred_region
    _
  $region37: #{generator_forward.13} parent=0 // pred_fallthru
    _

// kernel: generator_forward.14
$region0: #{generator_forward.14}
  #allocation0 [shape = 'u32[]', space=smem, size = 0x4, offset = 0x4, fixed_abs, tag = 'smem constant byte address 0x4 - core index']
  #allocation1 [shape = 'u32[72,128]{1,0:T(1,128)}', space=vmem, size = 0x9000, scoped, tag = 'internal scratch']
  %s0 = inlined_call_operand.vmem [shape: f32[16,512], index: 0, kind: input, shape index: {}]
  %s1 = inlined_call_operand.vmem [shape: f32[16,1], index: 1, kind: input, shape index: {}]
  %s2 = inlined_call_operand.vmem [shape: f32[16,1], index: 2, kind: input, shape index: {}]
  %s3 = inlined_call_operand.vmem [shape: bf16[16,512], index: 3, kind: output, shape index: {}]
  %s4 = sld [smem:[#allocation0]]
  $region22: #{generator_forward.14} parent=0
    _
  %s6 = ssub.s32 1, %s4
  %s7 = scalar_select 0, %s6, %s4
  // Predicated region
  $region2: #{generator_forward.14} parent=0 // pred_check
    _
  $region3: #{generator_forward.14} parent=0 // pred_check_branch
    %9 = sbr.rel (0) target = $region5
  $region4: #{generator_forward.14} parent=0 // pred_region
    _
  $region5: #{generator_forward.14} parent=0 // pred_fallthru
    _
  // Predicated region
  $region6: #{generator_forward.14} parent=0 // pred_check
    _
  $region7: #{generator_forward.14} parent=0 // pred_check_branch
    %11 = sbr.rel (0) target = $region9
  $region8: #{generator_forward.14} parent=0 // pred_region
    _
  $region9: #{generator_forward.14} parent=0 // pred_fallthru
    _
  // Predicated region
  $region10: #{generator_forward.14} parent=0 // pred_check
    _
  $region11: #{generator_forward.14} parent=0 // pred_check_branch
    %13 = sbr.rel (0) target = $region13
  $region12: #{generator_forward.14} parent=0 // pred_region
    _
  $region13: #{generator_forward.14} parent=0 // pred_fallthru
    _
  %v14 = vld [vmem:[%s0] sm:$0xff]
  %v15 = vld [vmem:[%s0 + $0x8] sm:$0xff]
  %v16 = vld [vmem:[%s0 + $0x10] sm:$0xff]
  %v17 = vld [vmem:[%s0 + $0x18] sm:$0xff]
  %v18 = vld [vmem:[%s0 + $0x20] sm:$0xff]
  %v19 = vld [vmem:[%s0 + $0x28] sm:$0xff]
  %v20 = vld [vmem:[%s0 + $0x30] sm:$0xff]
  %v21 = vld [vmem:[%s0 + $0x38] sm:$0xff]
  %v22 = vld [vmem:[%s1] sm:$0xff]
  %v23 = vld [vmem:[%s1 + $0x8] sm:$0xff]
  %25 = vset.pattern.permute.xlu0 0
  %26 = vperm.xlu0 %25, %v22
  %v27 = vpop.permute.xlu0 %26
  %30 = vset.pattern.permute.xlu0 0
  %31 = vperm.xlu0 %30, %v23
  %v32 = vpop.permute.xlu0 %31
  %v34 = vmul.f32 %v14, %v27
  %v35 = vmul.f32 %v15, %v27
  %v36 = vmul.f32 %v16, %v27
  %v37 = vmul.f32 %v17, %v27
  %v38 = vmul.f32 %v18, %v32
  %v39 = vmul.f32 %v19, %v32
  %v40 = vmul.f32 %v20, %v32
  %v41 = vmul.f32 %v21, %v32
  %v42 = vld [vmem:[%s2] sm:$0xff]
  %v43 = vld [vmem:[%s2 + $0x8] sm:$0xff]
  %45 = vset.pattern.permute.xlu0 0
  %46 = vperm.xlu0 %45, %v42
  %v47 = vpop.permute.xlu0 %46
  %50 = vset.pattern.permute.xlu0 0
  %51 = vperm.xlu0 %50, %v43
  %v52 = vpop.permute.xlu0 %51
  %v54 = vadd.f32 %v34, %v47
  %v55 = vadd.f32 %v35, %v47
  %v56 = vadd.f32 %v36, %v47
  %v57 = vadd.f32 %v37, %v47
  %v58 = vadd.f32 %v38, %v52
  %v59 = vadd.f32 %v39, %v52
  %v60 = vadd.f32 %v40, %v52
  %v61 = vadd.f32 %v41, %v52
  %v62 = vmax.f32 %v54, 0.0
  %v63 = vmax.f32 %v55, 0.0
  %v64 = vmax.f32 %v56, 0.0
  %v65 = vmax.f32 %v57, 0.0
  %v66 = vmax.f32 %v58, 0.0
  %v67 = vmax.f32 %v59, 0.0
  %v68 = vmax.f32 %v60, 0.0
  %v69 = vmax.f32 %v61, 0.0
  %v70 = vpack.c.bf16 %v63, %v62
  %v71 = vpack.c.bf16 %v65, %v64
  %v72 = vpack.c.bf16 %v67, %v66
  %v73 = vpack.c.bf16 %v69, %v68
  %74 = vst [vmem:[%s3] sm:$0xff] %v70
  %75 = vst [vmem:[%s3 + $0x8] sm:$0xff] %v71
  %76 = vst [vmem:[%s3 + $0x10] sm:$0xff] %v72
  %77 = vst [vmem:[%s3 + $0x18] sm:$0xff] %v73
  // Predicated region
  $region14: #{generator_forward.14} parent=0 // pred_check
    _
  $region15: #{generator_forward.14} parent=0 // pred_check_branch
    %79 = sbr.rel (0) target = $region17
  $region16: #{generator_forward.14} parent=0 // pred_region
    _
  $region17: #{generator_forward.14} parent=0 // pred_fallthru
    _
  // Predicated region
  $region18: #{generator_forward.14} parent=0 // pred_check
    _
  $region19: #{generator_forward.14} parent=0 // pred_check_branch
    %81 = sbr.rel (0) target = $region21
  $region20: #{generator_forward.14} parent=0 // pred_region
    _
  $region21: #{generator_forward.14} parent=0 // pred_fallthru
    _

// kernel: generator_forward.16
$region0: #{generator_forward.16}
  #allocation0 [shape = 'u32[]', space=smem, size = 0x4, offset = 0x4, fixed_abs, tag = 'smem constant byte address 0x4 - core index']
  #allocation1 [shape = 'u32[72,128]{1,0:T(1,128)}', space=vmem, size = 0x9000, scoped, tag = 'internal scratch']
  %s0 = inlined_call_operand.vmem [shape: f32[8,2048], index: 0, kind: input, shape index: {}]
  %s1 = inlined_call_operand.vmem [shape: f32[8,1], index: 1, kind: input, shape index: {}]
  %s2 = inlined_call_operand.vmem [shape: f32[8,1], index: 2, kind: input, shape index: {}]
  %s3 = inlined_call_operand.vmem [shape: bf16[8,2048], index: 3, kind: output, shape index: {}]
  %s4 = sld [smem:[#allocation0]]
  $region22: #{generator_forward.16} parent=0
    _
  %s6 = ssub.s32 1, %s4
  %s7 = scalar_select 0, %s6, %s4
  // Predicated region
  $region2: #{generator_forward.16} parent=0 // pred_check
    _
  $region3: #{generator_forward.16} parent=0 // pred_check_branch
    %9 = sbr.rel (0) target = $region5
  $region4: #{generator_forward.16} parent=0 // pred_region
    _
  $region5: #{generator_forward.16} parent=0 // pred_fallthru
    _
  // Predicated region
  $region6: #{generator_forward.16} parent=0 // pred_check
    _
  $region7: #{generator_forward.16} parent=0 // pred_check_branch
    %11 = sbr.rel (0) target = $region9
  $region8: #{generator_forward.16} parent=0 // pred_region
    _
  $region9: #{generator_forward.16} parent=0 // pred_fallthru
    _
  // Predicated region
  $region10: #{generator_forward.16} parent=0 // pred_check
    _
  $region11: #{generator_forward.16} parent=0 // pred_check_branch
    %13 = sbr.rel (0) target = $region13
  $region12: #{generator_forward.16} parent=0 // pred_region
    _
  $region13: #{generator_forward.16} parent=0 // pred_fallthru
    _
  %v14 = vld [vmem:[%s0] sm:$0xff]
  %v15 = vld [vmem:[%s0 + $0x8] sm:$0xff]
  %v16 = vld [vmem:[%s0 + $0x10] sm:$0xff]
  %v17 = vld [vmem:[%s0 + $0x18] sm:$0xff]
  %v18 = vld [vmem:[%s0 + $0x20] sm:$0xff]
  %v19 = vld [vmem:[%s0 + $0x28] sm:$0xff]
  %v20 = vld [vmem:[%s0 + $0x30] sm:$0xff]
  %v21 = vld [vmem:[%s0 + $0x38] sm:$0xff]
  %v22 = vld [vmem:[%s0 + $0x40] sm:$0xff]
  %v23 = vld [vmem:[%s0 + $0x48] sm:$0xff]
  %v24 = vld [vmem:[%s0 + $0x50] sm:$0xff]
  %v25 = vld [vmem:[%s0 + $0x58] sm:$0xff]
  %v26 = vld [vmem:[%s0 + $0x60] sm:$0xff]
  %v27 = vld [vmem:[%s0 + $0x68] sm:$0xff]
  %v28 = vld [vmem:[%s0 + $0x70] sm:$0xff]
  %v29 = vld [vmem:[%s0 + $0x78] sm:$0xff]
  %v30 = vld [vmem:[%s1] sm:$0xff]
  %32 = vset.pattern.permute.xlu0 0
  %33 = vperm.xlu0 %32, %v30
  %v34 = vpop.permute.xlu0 %33
  %v36 = vmul.f32 %v14, %v34
  %v37 = vmul.f32 %v15, %v34
  %v38 = vmul.f32 %v16, %v34
  %v39 = vmul.f32 %v17, %v34
  %v40 = vmul.f32 %v18, %v34
  %v41 = vmul.f32 %v19, %v34
  %v42 = vmul.f32 %v20, %v34
  %v43 = vmul.f32 %v21, %v34
  %v44 = vmul.f32 %v22, %v34
  %v45 = vmul.f32 %v23, %v34
  %v46 = vmul.f32 %v24, %v34
  %v47 = vmul.f32 %v25, %v34
  %v48 = vmul.f32 %v26, %v34
  %v49 = vmul.f32 %v27, %v34
  %v50 = vmul.f32 %v28, %v34
  %v51 = vmul.f32 %v29, %v34
  %v52 = vld [vmem:[%s2] sm:$0xff]
  %54 = vset.pattern.permute.xlu0 0
  %55 = vperm.xlu0 %54, %v52
  %v56 = vpop.permute.xlu0 %55
  %v58 = vadd.f32 %v36, %v56
  %v59 = vadd.f32 %v37, %v56
  %v60 = vadd.f32 %v38, %v56
  %v61 = vadd.f32 %v39, %v56
  %v62 = vadd.f32 %v40, %v56
  %v63 = vadd.f32 %v41, %v56
  %v64 = vadd.f32 %v42, %v56
  %v65 = vadd.f32 %v43, %v56
  %v66 = vadd.f32 %v44, %v56
  %v67 = vadd.f32 %v45, %v56
  %v68 = vadd.f32 %v46, %v56
  %v69 = vadd.f32 %v47, %v56
  %v70 = vadd.f32 %v48, %v56
  %v71 = vadd.f32 %v49, %v56
  %v72 = vadd.f32 %v50, %v56
  %v73 = vadd.f32 %v51, %v56
  %v74 = vmax.f32 %v58, 0.0
  %v75 = vmax.f32 %v59, 0.0
  %v76 = vmax.f32 %v60, 0.0
  %v77 = vmax.f32 %v61, 0.0
  %v78 = vmax.f32 %v62, 0.0
  %v79 = vmax.f32 %v63, 0.0
  %v80 = vmax.f32 %v64, 0.0
  %v81 = vmax.f32 %v65, 0.0
  %v82 = vmax.f32 %v66, 0.0
  %v83 = vmax.f32 %v67, 0.0
  %v84 = vmax.f32 %v68, 0.0
  %v85 = vmax.f32 %v69, 0.0
  %v86 = vmax.f32 %v70, 0.0
  %v87 = vmax.f32 %v71, 0.0
  %v88 = vmax.f32 %v72, 0.0
  %v89 = vmax.f32 %v73, 0.0
  %v90 = vpack.c.bf16 %v75, %v74
  %v91 = vpack.c.bf16 %v77, %v76
  %v92 = vpack.c.bf16 %v79, %v78
  %v93 = vpack.c.bf16 %v81, %v80
  %v94 = vpack.c.bf16 %v83, %v82
  %v95 = vpack.c.bf16 %v85, %v84
  %v96 = vpack.c.bf16 %v87, %v86
  %v97 = vpack.c.bf16 %v89, %v88
  %98 = vst [vmem:[%s3] sm:$0xff] %v90
  %99 = vst [vmem:[%s3 + $0x8] sm:$0xff] %v91
  %100 = vst [vmem:[%s3 + $0x10] sm:$0xff] %v92
  %101 = vst [vmem:[%s3 + $0x18] sm:$0xff] %v93
  %102 = vst [vmem:[%s3 + $0x20] sm:$0xff] %v94
  %103 = vst [vmem:[%s3 + $0x28] sm:$0xff] %v95
  %104 = vst [vmem:[%s3 + $0x30] sm:$0xff] %v96
  %105 = vst [vmem:[%s3 + $0x38] sm:$0xff] %v97
  // Predicated region
  $region14: #{generator_forward.16} parent=0 // pred_check
    _
  $region15: #{generator_forward.16} parent=0 // pred_check_branch
    %107 = sbr.rel (0) target = $region17
  $region16: #{generator_forward.16} parent=0 // pred_region
    _
  $region17: #{generator_forward.16} parent=0 // pred_fallthru
    _
  // Predicated region
  $region18: #{generator_forward.16} parent=0 // pred_check
    _
  $region19: #{generator_forward.16} parent=0 // pred_check_branch
    %109 = sbr.rel (0) target = $region21
  $region20: #{generator_forward.16} parent=0 // pred_region
    _
  $region21: #{generator_forward.16} parent=0 // pred_fallthru
    _

// kernel: generator_forward.15
$region0: #{generator_forward.15}
  #allocation0 [shape = 'u32[]', space=smem, size = 0x4, offset = 0x4, fixed_abs, tag = 'smem constant byte address 0x4 - core index']
  #allocation1 [shape = 'u32[72,128]{1,0:T(1,128)}', space=vmem, size = 0x9000, scoped, tag = 'internal scratch']
  %s0 = inlined_call_operand.vmem [shape: bf16[256,2048], index: 0, kind: input, shape index: {}]
  %s1 = inlined_call_operand.vmem [shape: bf16[8,256], index: 1, kind: input, shape index: {}]
  %s2 = inlined_call_operand.vmem [shape: f32[8,1], index: 2, kind: input, shape index: {}]
  %s3 = inlined_call_operand.vmem [shape: f32[8,2048], index: 3, kind: output, shape index: {0}]
  %s4 = inlined_call_operand.vmem [shape: f32[1,8,1], index: 4, kind: output, shape index: {1}]
  %s5 = inlined_call_operand.vmem [shape: f32[1,8,1], index: 5, kind: output, shape index: {2}]
  %6 = xla_tuple %s3, %s4, %s5
  %s7 = sld [smem:[#allocation0]]
  $region38: #{generator_forward.15} parent=0
    _
  %s9 = ssub.s32 1, %s7
  %s10 = scalar_select 0, %s9, %s7
  // Predicated region
  $region2: #{generator_forward.15} parent=0 // pred_check
    _
  $region3: #{generator_forward.15} parent=0 // pred_check_branch
    %12 = sbr.rel (0) target = $region5
  $region4: #{generator_forward.15} parent=0 // pred_region
    _
  $region5: #{generator_forward.15} parent=0 // pred_fallthru
    _
  // Predicated region
  $region6: #{generator_forward.15} parent=0 // pred_check
    _
  $region7: #{generator_forward.15} parent=0 // pred_check_branch
    %14 = sbr.rel (0) target = $region9
  $region8: #{generator_forward.15} parent=0 // pred_region
    _
  $region9: #{generator_forward.15} parent=0 // pred_fallthru
    _
  // Predicated region
  $region10: #{generator_forward.15} parent=0 // pred_check
    _
  $region11: #{generator_forward.15} parent=0 // pred_check_branch
    %16 = sbr.rel (0) target = $region13
  $region12: #{generator_forward.15} parent=0 // pred_region
    _
  $region13: #{generator_forward.15} parent=0 // pred_fallthru
    _
  %v17 = vld [vmem:[%s1] sm:$0xff]
  %v18 = vld [vmem:[%s0] sm:$0xff]
  %v19 = vld [vmem:[%s0 + $0x8] sm:$0xff]
  %v20 = vld [vmem:[%s0 + $0x10] sm:$0xff]
  %v21 = vld [vmem:[%s0 + $0x18] sm:$0xff]
  %v22 = vld [vmem:[%s0 + $0x20] sm:$0xff]
  %v23 = vld [vmem:[%s0 + $0x28] sm:$0xff]
  %v24 = vld [vmem:[%s0 + $0x30] sm:$0xff]
  %v25 = vld [vmem:[%s0 + $0x38] sm:$0xff]
  %v26 = vld [vmem:[%s0 + $0x40] sm:$0xff]
  %v27 = vld [vmem:[%s0 + $0x48] sm:$0xff]
  %v28 = vld [vmem:[%s0 + $0x50] sm:$0xff]
  %v29 = vld [vmem:[%s0 + $0x58] sm:$0xff]
  %v30 = vld [vmem:[%s0 + $0x60] sm:$0xff]
  %v31 = vld [vmem:[%s0 + $0x68] sm:$0xff]
  %v32 = vld [vmem:[%s0 + $0x70] sm:$0xff]
  %v33 = vld [vmem:[%s0 + $0x78] sm:$0xff]
  %v34 = vld [vmem:[%s0 + $0x80] sm:$0xff]
  %v35 = vld [vmem:[%s0 + $0x88] sm:$0xff]
  %v36 = vld [vmem:[%s0 + $0x90] sm:$0xff]
  %v37 = vld [vmem:[%s0 + $0x98] sm:$0xff]
  %v38 = vld [vmem:[%s0 + $0xa0] sm:$0xff]
  %v39 = vld [vmem:[%s0 + $0xa8] sm:$0xff]
  %v40 = vld [vmem:[%s0 + $0xb0] sm:$0xff]
  %v41 = vld [vmem:[%s0 + $0xb8] sm:$0xff]
  %v42 = vld [vmem:[%s0 + $0xc0] sm:$0xff]
  %v43 = vld [vmem:[%s0 + $0xc8] sm:$0xff]
  %v44 = vld [vmem:[%s0 + $0xd0] sm:$0xff]
  %v45 = vld [vmem:[%s0 + $0xd8] sm:$0xff]
  %v46 = vld [vmem:[%s0 + $0xe0] sm:$0xff]
  %v47 = vld [vmem:[%s0 + $0xe8] sm:$0xff]
  %v48 = vld [vmem:[%s0 + $0xf0] sm:$0xff]
  %v49 = vld [vmem:[%s0 + $0xf8] sm:$0xff]
  %v50 = vld [vmem:[%s0 + $0x100] sm:$0xff]
  %v51 = vld [vmem:[%s0 + $0x108] sm:$0xff]
  %v52 = vld [vmem:[%s0 + $0x110] sm:$0xff]
  %v53 = vld [vmem:[%s0 + $0x118] sm:$0xff]
  %v54 = vld [vmem:[%s0 + $0x120] sm:$0xff]
  %v55 = vld [vmem:[%s0 + $0x128] sm:$0xff]
  %v56 = vld [vmem:[%s0 + $0x130] sm:$0xff]
  %v57 = vld [vmem:[%s0 + $0x138] sm:$0xff]
  %v58 = vld [vmem:[%s0 + $0x140] sm:$0xff]
  %v59 = vld [vmem:[%s0 + $0x148] sm:$0xff]
  %v60 = vld [vmem:[%s0 + $0x150] sm:$0xff]
  %v61 = vld [vmem:[%s0 + $0x158] sm:$0xff]
  %v62 = vld [vmem:[%s0 + $0x160] sm:$0xff]
  %v63 = vld [vmem:[%s0 + $0x168] sm:$0xff]
  %v64 = vld [vmem:[%s0 + $0x170] sm:$0xff]
  %v65 = vld [vmem:[%s0 + $0x178] sm:$0xff]
  %v66 = vld [vmem:[%s0 + $0x180] sm:$0xff]
  %v67 = vld [vmem:[%s0 + $0x188] sm:$0xff]
  %v68 = vld [vmem:[%s0 + $0x190] sm:$0xff]
  %v69 = vld [vmem:[%s0 + $0x198] sm:$0xff]
  %v70 = vld [vmem:[%s0 + $0x1a0] sm:$0xff]
  %v71 = vld [vmem:[%s0 + $0x1a8] sm:$0xff]
  %v72 = vld [vmem:[%s0 + $0x1b0] sm:$0xff]
  %v73 = vld [vmem:[%s0 + $0x1b8] sm:$0xff]
  %v74 = vld [vmem:[%s0 + $0x1c0] sm:$0xff]
  %v75 = vld [vmem:[%s0 + $0x1c8] sm:$0xff]
  %v76 = vld [vmem:[%s0 + $0x1d0] sm:$0xff]
  %v77 = vld [vmem:[%s0 + $0x1d8] sm:$0xff]
  %v78 = vld [vmem:[%s0 + $0x1e0] sm:$0xff]
  %v79 = vld [vmem:[%s0 + $0x1e8] sm:$0xff]
  %v80 = vld [vmem:[%s0 + $0x1f0] sm:$0xff]
  %v81 = vld [vmem:[%s0 + $0x1f8] sm:$0xff]
  %v82 = vld [vmem:[%s0 + $0x200] sm:$0xff]
  %v83 = vld [vmem:[%s0 + $0x208] sm:$0xff]
  %v84 = vld [vmem:[%s0 + $0x210] sm:$0xff]
  %v85 = vld [vmem:[%s0 + $0x218] sm:$0xff]
  %v86 = vld [vmem:[%s0 + $0x220] sm:$0xff]
  %v87 = vld [vmem:[%s0 + $0x228] sm:$0xff]
  %v88 = vld [vmem:[%s0 + $0x230] sm:$0xff]
  %v89 = vld [vmem:[%s0 + $0x238] sm:$0xff]
  %v90 = vld [vmem:[%s0 + $0x240] sm:$0xff]
  %v91 = vld [vmem:[%s0 + $0x248] sm:$0xff]
  %v92 = vld [vmem:[%s0 + $0x250] sm:$0xff]
  %v93 = vld [vmem:[%s0 + $0x258] sm:$0xff]
  %v94 = vld [vmem:[%s0 + $0x260] sm:$0xff]
  %v95 = vld [vmem:[%s0 + $0x268] sm:$0xff]
  %v96 = vld [vmem:[%s0 + $0x270] sm:$0xff]
  %v97 = vld [vmem:[%s0 + $0x278] sm:$0xff]
  %v98 = vld [vmem:[%s0 + $0x280] sm:$0xff]
  %v99 = vld [vmem:[%s0 + $0x288] sm:$0xff]
  %v100 = vld [vmem:[%s0 + $0x290] sm:$0xff]
  %v101 = vld [vmem:[%s0 + $0x298] sm:$0xff]
  %v102 = vld [vmem:[%s0 + $0x2a0] sm:$0xff]
  %v103 = vld [vmem:[%s0 + $0x2a8] sm:$0xff]
  %v104 = vld [vmem:[%s0 + $0x2b0] sm:$0xff]
  %v105 = vld [vmem:[%s0 + $0x2b8] sm:$0xff]
  %v106 = vld [vmem:[%s0 + $0x2c0] sm:$0xff]
  %v107 = vld [vmem:[%s0 + $0x2c8] sm:$0xff]
  %v108 = vld [vmem:[%s0 + $0x2d0] sm:$0xff]
  %v109 = vld [vmem:[%s0 + $0x2d8] sm:$0xff]
  %v110 = vld [vmem:[%s0 + $0x2e0] sm:$0xff]
  %v111 = vld [vmem:[%s0 + $0x2e8] sm:$0xff]
  %v112 = vld [vmem:[%s0 + $0x2f0] sm:$0xff]
  %v113 = vld [vmem:[%s0 + $0x2f8] sm:$0xff]
  %v114 = vld [vmem:[%s0 + $0x300] sm:$0xff]
  %v115 = vld [vmem:[%s0 + $0x308] sm:$0xff]
  %v116 = vld [vmem:[%s0 + $0x310] sm:$0xff]
  %v117 = vld [vmem:[%s0 + $0x318] sm:$0xff]
  %v118 = vld [vmem:[%s0 + $0x320] sm:$0xff]
  %v119 = vld [vmem:[%s0 + $0x328] sm:$0xff]
  %v120 = vld [vmem:[%s0 + $0x330] sm:$0xff]
  %v121 = vld [vmem:[%s0 + $0x338] sm:$0xff]
  %v122 = vld [vmem:[%s0 + $0x340] sm:$0xff]
  %v123 = vld [vmem:[%s0 + $0x348] sm:$0xff]
  %v124 = vld [vmem:[%s0 + $0x350] sm:$0xff]
  %v125 = vld [vmem:[%s0 + $0x358] sm:$0xff]
  %v126 = vld [vmem:[%s0 + $0x360] sm:$0xff]
  %v127 = vld [vmem:[%s0 + $0x368] sm:$0xff]
  %v128 = vld [vmem:[%s0 + $0x370] sm:$0xff]
  %v129 = vld [vmem:[%s0 + $0x378] sm:$0xff]
  %v130 = vld [vmem:[%s0 + $0x380] sm:$0xff]
  %v131 = vld [vmem:[%s0 + $0x388] sm:$0xff]
  %v132 = vld [vmem:[%s0 + $0x390] sm:$0xff]
  %v133 = vld [vmem:[%s0 + $0x398] sm:$0xff]
  %v134 = vld [vmem:[%s0 + $0x3a0] sm:$0xff]
  %v135 = vld [vmem:[%s0 + $0x3a8] sm:$0xff]
  %v136 = vld [vmem:[%s0 + $0x3b0] sm:$0xff]
  %v137 = vld [vmem:[%s0 + $0x3b8] sm:$0xff]
  %v138 = vld [vmem:[%s0 + $0x3c0] sm:$0xff]
  %v139 = vld [vmem:[%s0 + $0x3c8] sm:$0xff]
  %v140 = vld [vmem:[%s0 + $0x3d0] sm:$0xff]
  %v141 = vld [vmem:[%s0 + $0x3d8] sm:$0xff]
  %v142 = vld [vmem:[%s0 + $0x3e0] sm:$0xff]
  %v143 = vld [vmem:[%s0 + $0x3e8] sm:$0xff]
  %v144 = vld [vmem:[%s0 + $0x3f0] sm:$0xff]
  %v145 = vld [vmem:[%s0 + $0x3f8] sm:$0xff]
  %v146 = vld [vmem:[%s0 + $0x400] sm:$0xff]
  %v147 = vld [vmem:[%s0 + $0x408] sm:$0xff]
  %v148 = vld [vmem:[%s0 + $0x410] sm:$0xff]
  %v149 = vld [vmem:[%s0 + $0x418] sm:$0xff]
  %v150 = vld [vmem:[%s0 + $0x420] sm:$0xff]
  %v151 = vld [vmem:[%s0 + $0x428] sm:$0xff]
  %v152 = vld [vmem:[%s0 + $0x430] sm:$0xff]
  %v153 = vld [vmem:[%s0 + $0x438] sm:$0xff]
  %v154 = vld [vmem:[%s0 + $0x440] sm:$0xff]
  %v155 = vld [vmem:[%s0 + $0x448] sm:$0xff]
  %v156 = vld [vmem:[%s0 + $0x450] sm:$0xff]
  %v157 = vld [vmem:[%s0 + $0x458] sm:$0xff]
  %v158 = vld [vmem:[%s0 + $0x460] sm:$0xff]
  %v159 = vld [vmem:[%s0 + $0x468] sm:$0xff]
  %v160 = vld [vmem:[%s0 + $0x470] sm:$0xff]
  %v161 = vld [vmem:[%s0 + $0x478] sm:$0xff]
  %v162 = vld [vmem:[%s0 + $0x480] sm:$0xff]
  %v163 = vld [vmem:[%s0 + $0x488] sm:$0xff]
  %v164 = vld [vmem:[%s0 + $0x490] sm:$0xff]
  %v165 = vld [vmem:[%s0 + $0x498] sm:$0xff]
  %v166 = vld [vmem:[%s0 + $0x4a0] sm:$0xff]
  %v167 = vld [vmem:[%s0 + $0x4a8] sm:$0xff]
  %v168 = vld [vmem:[%s0 + $0x4b0] sm:$0xff]
  %v169 = vld [vmem:[%s0 + $0x4b8] sm:$0xff]
  %v170 = vld [vmem:[%s0 + $0x4c0] sm:$0xff]
  %v171 = vld [vmem:[%s0 + $0x4c8] sm:$0xff]
  %v172 = vld [vmem:[%s0 + $0x4d0] sm:$0xff]
  %v173 = vld [vmem:[%s0 + $0x4d8] sm:$0xff]
  %v174 = vld [vmem:[%s0 + $0x4e0] sm:$0xff]
  %v175 = vld [vmem:[%s0 + $0x4e8] sm:$0xff]
  %v176 = vld [vmem:[%s0 + $0x4f0] sm:$0xff]
  %v177 = vld [vmem:[%s0 + $0x4f8] sm:$0xff]
  %v178 = vld [vmem:[%s0 + $0x500] sm:$0xff]
  %v179 = vld [vmem:[%s0 + $0x508] sm:$0xff]
  %v180 = vld [vmem:[%s0 + $0x510] sm:$0xff]
  %v181 = vld [vmem:[%s0 + $0x518] sm:$0xff]
  %v182 = vld [vmem:[%s0 + $0x520] sm:$0xff]
  %v183 = vld [vmem:[%s0 + $0x528] sm:$0xff]
  %v184 = vld [vmem:[%s0 + $0x530] sm:$0xff]
  %v185 = vld [vmem:[%s0 + $0x538] sm:$0xff]
  %v186 = vld [vmem:[%s0 + $0x540] sm:$0xff]
  %v187 = vld [vmem:[%s0 + $0x548] sm:$0xff]
  %v188 = vld [vmem:[%s0 + $0x550] sm:$0xff]
  %v189 = vld [vmem:[%s0 + $0x558] sm:$0xff]
  %v190 = vld [vmem:[%s0 + $0x560] sm:$0xff]
  %v191 = vld [vmem:[%s0 + $0x568] sm:$0xff]
  %v192 = vld [vmem:[%s0 + $0x570] sm:$0xff]
  %v193 = vld [vmem:[%s0 + $0x578] sm:$0xff]
  %v194 = vld [vmem:[%s0 + $0x580] sm:$0xff]
  %v195 = vld [vmem:[%s0 + $0x588] sm:$0xff]
  %v196 = vld [vmem:[%s0 + $0x590] sm:$0xff]
  %v197 = vld [vmem:[%s0 + $0x598] sm:$0xff]
  %v198 = vld [vmem:[%s0 + $0x5a0] sm:$0xff]
  %v199 = vld [vmem:[%s0 + $0x5a8] sm:$0xff]
  %v200 = vld [vmem:[%s0 + $0x5b0] sm:$0xff]
  %v201 = vld [vmem:[%s0 + $0x5b8] sm:$0xff]
  %v202 = vld [vmem:[%s0 + $0x5c0] sm:$0xff]
  %v203 = vld [vmem:[%s0 + $0x5c8] sm:$0xff]
  %v204 = vld [vmem:[%s0 + $0x5d0] sm:$0xff]
  %v205 = vld [vmem:[%s0 + $0x5d8] sm:$0xff]
  %v206 = vld [vmem:[%s0 + $0x5e0] sm:$0xff]
  %v207 = vld [vmem:[%s0 + $0x5e8] sm:$0xff]
  %v208 = vld [vmem:[%s0 + $0x5f0] sm:$0xff]
  %v209 = vld [vmem:[%s0 + $0x5f8] sm:$0xff]
  %v210 = vld [vmem:[%s0 + $0x600] sm:$0xff]
  %v211 = vld [vmem:[%s0 + $0x608] sm:$0xff]
  %v212 = vld [vmem:[%s0 + $0x610] sm:$0xff]
  %v213 = vld [vmem:[%s0 + $0x618] sm:$0xff]
  %v214 = vld [vmem:[%s0 + $0x620] sm:$0xff]
  %v215 = vld [vmem:[%s0 + $0x628] sm:$0xff]
  %v216 = vld [vmem:[%s0 + $0x630] sm:$0xff]
  %v217 = vld [vmem:[%s0 + $0x638] sm:$0xff]
  %v218 = vld [vmem:[%s0 + $0x640] sm:$0xff]
  %v219 = vld [vmem:[%s0 + $0x648] sm:$0xff]
  %v220 = vld [vmem:[%s0 + $0x650] sm:$0xff]
  %v221 = vld [vmem:[%s0 + $0x658] sm:$0xff]
  %v222 = vld [vmem:[%s0 + $0x660] sm:$0xff]
  %v223 = vld [vmem:[%s0 + $0x668] sm:$0xff]
  %v224 = vld [vmem:[%s0 + $0x670] sm:$0xff]
  %v225 = vld [vmem:[%s0 + $0x678] sm:$0xff]
  %v226 = vld [vmem:[%s0 + $0x680] sm:$0xff]
  %v227 = vld [vmem:[%s0 + $0x688] sm:$0xff]
  %v228 = vld [vmem:[%s0 + $0x690] sm:$0xff]
  %v229 = vld [vmem:[%s0 + $0x698] sm:$0xff]
  %v230 = vld [vmem:[%s0 + $0x6a0] sm:$0xff]
  %v231 = vld [vmem:[%s0 + $0x6a8] sm:$0xff]
  %v232 = vld [vmem:[%s0 + $0x6b0] sm:$0xff]
  %v233 = vld [vmem:[%s0 + $0x6b8] sm:$0xff]
  %v234 = vld [vmem:[%s0 + $0x6c0] sm:$0xff]
  %v235 = vld [vmem:[%s0 + $0x6c8] sm:$0xff]
  %v236 = vld [vmem:[%s0 + $0x6d0] sm:$0xff]
  %v237 = vld [vmem:[%s0 + $0x6d8] sm:$0xff]
  %v238 = vld [vmem:[%s0 + $0x6e0] sm:$0xff]
  %v239 = vld [vmem:[%s0 + $0x6e8] sm:$0xff]
  %v240 = vld [vmem:[%s0 + $0x6f0] sm:$0xff]
  %v241 = vld [vmem:[%s0 + $0x6f8] sm:$0xff]
  %v242 = vld [vmem:[%s0 + $0x700] sm:$0xff]
  %v243 = vld [vmem:[%s0 + $0x708] sm:$0xff]
  %v244 = vld [vmem:[%s0 + $0x710] sm:$0xff]
  %v245 = vld [vmem:[%s0 + $0x718] sm:$0xff]
  %v246 = vld [vmem:[%s0 + $0x720] sm:$0xff]
  %v247 = vld [vmem:[%s0 + $0x728] sm:$0xff]
  %v248 = vld [vmem:[%s0 + $0x730] sm:$0xff]
  %v249 = vld [vmem:[%s0 + $0x738] sm:$0xff]
  %v250 = vld [vmem:[%s0 + $0x740] sm:$0xff]
  %v251 = vld [vmem:[%s0 + $0x748] sm:$0xff]
  %v252 = vld [vmem:[%s0 + $0x750] sm:$0xff]
  %v253 = vld [vmem:[%s0 + $0x758] sm:$0xff]
  %v254 = vld [vmem:[%s0 + $0x760] sm:$0xff]
  %v255 = vld [vmem:[%s0 + $0x768] sm:$0xff]
  %v256 = vld [vmem:[%s0 + $0x770] sm:$0xff]
  %v257 = vld [vmem:[%s0 + $0x778] sm:$0xff]
  %v258 = vld [vmem:[%s0 + $0x780] sm:$0xff]
  %v259 = vld [vmem:[%s0 + $0x788] sm:$0xff]
  %v260 = vld [vmem:[%s0 + $0x790] sm:$0xff]
  %v261 = vld [vmem:[%s0 + $0x798] sm:$0xff]
  %v262 = vld [vmem:[%s0 + $0x7a0] sm:$0xff]
  %v263 = vld [vmem:[%s0 + $0x7a8] sm:$0xff]
  %v264 = vld [vmem:[%s0 + $0x7b0] sm:$0xff]
  %v265 = vld [vmem:[%s0 + $0x7b8] sm:$0xff]
  %v266 = vld [vmem:[%s0 + $0x7c0] sm:$0xff]
  %v267 = vld [vmem:[%s0 + $0x7c8] sm:$0xff]
  %v268 = vld [vmem:[%s0 + $0x7d0] sm:$0xff]
  %v269 = vld [vmem:[%s0 + $0x7d8] sm:$0xff]
  %v270 = vld [vmem:[%s0 + $0x7e0] sm:$0xff]
  %v271 = vld [vmem:[%s0 + $0x7e8] sm:$0xff]
  %v272 = vld [vmem:[%s0 + $0x7f0] sm:$0xff]
  %v273 = vld [vmem:[%s0 + $0x7f8] sm:$0xff]
  %v274 = vld [vmem:[%s2] sm:$0xff]
  %276 = vset.pattern.permute.xlu0 0
  %277 = vperm.xlu0 %276, %v274
  %v278 = vpop.permute.xlu0 %277
  %v281 = vunpack.c.l.b16 %v17
  %v282 = vunpack.c.h.b16 %v17
  %v283 = vpack.c.b16 %v281, %v281
  %v284 = vpack.c.b16 %v282, %v282
  %v543 = vunpack.c.l.b16 %v18
  %v544 = vunpack.c.h.b16 %v18
  %v545 = vunpack.c.l.b16 %v19
  %v546 = vunpack.c.h.b16 %v19
  %v547 = vunpack.c.l.b16 %v20
  %v548 = vunpack.c.h.b16 %v20
  %v549 = vunpack.c.l.b16 %v21
  %v550 = vunpack.c.h.b16 %v21
  %v551 = vunpack.c.l.b16 %v22
  %v552 = vunpack.c.h.b16 %v22
  %v553 = vunpack.c.l.b16 %v23
  %v554 = vunpack.c.h.b16 %v23
  %v555 = vunpack.c.l.b16 %v24
  %v556 = vunpack.c.h.b16 %v24
  %v557 = vunpack.c.l.b16 %v25
  %v558 = vunpack.c.h.b16 %v25
  %v559 = vunpack.c.l.b16 %v26
  %v560 = vunpack.c.h.b16 %v26
  %v561 = vunpack.c.l.b16 %v27
  %v562 = vunpack.c.h.b16 %v27
  %v563 = vunpack.c.l.b16 %v28
  %v564 = vunpack.c.h.b16 %v28
  %v565 = vunpack.c.l.b16 %v29
  %v566 = vunpack.c.h.b16 %v29
  %v567 = vunpack.c.l.b16 %v30
  %v568 = vunpack.c.h.b16 %v30
  %v569 = vunpack.c.l.b16 %v31
  %v570 = vunpack.c.h.b16 %v31
  %v571 = vunpack.c.l.b16 %v32
  %v572 = vunpack.c.h.b16 %v32
  %v573 = vunpack.c.l.b16 %v33
  %v574 = vunpack.c.h.b16 %v33
  %v575 = vunpack.c.l.b16 %v34
  %v576 = vunpack.c.h.b16 %v34
  %v577 = vunpack.c.l.b16 %v35
  %v578 = vunpack.c.h.b16 %v35
  %v579 = vunpack.c.l.b16 %v36
  %v580 = vunpack.c.h.b16 %v36
  %v581 = vunpack.c.l.b16 %v37
  %v582 = vunpack.c.h.b16 %v37
  %v583 = vunpack.c.l.b16 %v38
  %v584 = vunpack.c.h.b16 %v38
  %v585 = vunpack.c.l.b16 %v39
  %v586 = vunpack.c.h.b16 %v39
  %v587 = vunpack.c.l.b16 %v40
  %v588 = vunpack.c.h.b16 %v40
  %v589 = vunpack.c.l.b16 %v41
  %v590 = vunpack.c.h.b16 %v41
  %v591 = vunpack.c.l.b16 %v42
  %v592 = vunpack.c.h.b16 %v42
  %v593 = vunpack.c.l.b16 %v43
  %v594 = vunpack.c.h.b16 %v43
  %v595 = vunpack.c.l.b16 %v44
  %v596 = vunpack.c.h.b16 %v44
  %v597 = vunpack.c.l.b16 %v45
  %v598 = vunpack.c.h.b16 %v45
  %v599 = vunpack.c.l.b16 %v46
  %v600 = vunpack.c.h.b16 %v46
  %v601 = vunpack.c.l.b16 %v47
  %v602 = vunpack.c.h.b16 %v47
  %v603 = vunpack.c.l.b16 %v48
  %v604 = vunpack.c.h.b16 %v48
  %v605 = vunpack.c.l.b16 %v49
  %v606 = vunpack.c.h.b16 %v49
  %v607 = vunpack.c.l.b16 %v50
  %v608 = vunpack.c.h.b16 %v50
  %v609 = vunpack.c.l.b16 %v51
  %v610 = vunpack.c.h.b16 %v51
  %v611 = vunpack.c.l.b16 %v52
  %v612 = vunpack.c.h.b16 %v52
  %v613 = vunpack.c.l.b16 %v53
  %v614 = vunpack.c.h.b16 %v53
  %v615 = vunpack.c.l.b16 %v54
  %v616 = vunpack.c.h.b16 %v54
  %v617 = vunpack.c.l.b16 %v55
  %v618 = vunpack.c.h.b16 %v55
  %v619 = vunpack.c.l.b16 %v56
  %v620 = vunpack.c.h.b16 %v56
  %v621 = vunpack.c.l.b16 %v57
  %v622 = vunpack.c.h.b16 %v57
  %v623 = vunpack.c.l.b16 %v58
  %v624 = vunpack.c.h.b16 %v58
  %v625 = vunpack.c.l.b16 %v59
  %v626 = vunpack.c.h.b16 %v59
  %v627 = vunpack.c.l.b16 %v60
  %v628 = vunpack.c.h.b16 %v60
  %v629 = vunpack.c.l.b16 %v61
  %v630 = vunpack.c.h.b16 %v61
  %v631 = vunpack.c.l.b16 %v62
  %v632 = vunpack.c.h.b16 %v62
  %v633 = vunpack.c.l.b16 %v63
  %v634 = vunpack.c.h.b16 %v63
  %v635 = vunpack.c.l.b16 %v64
  %v636 = vunpack.c.h.b16 %v64
  %v637 = vunpack.c.l.b16 %v65
  %v638 = vunpack.c.h.b16 %v65
  %v639 = vunpack.c.l.b16 %v66
  %v640 = vunpack.c.h.b16 %v66
  %v641 = vunpack.c.l.b16 %v67
  %v642 = vunpack.c.h.b16 %v67
  %v643 = vunpack.c.l.b16 %v68
  %v644 = vunpack.c.h.b16 %v68
  %v645 = vunpack.c.l.b16 %v69
  %v646 = vunpack.c.h.b16 %v69
  %v647 = vunpack.c.l.b16 %v70
  %v648 = vunpack.c.h.b16 %v70
  %v649 = vunpack.c.l.b16 %v71
  %v650 = vunpack.c.h.b16 %v71
  %v651 = vunpack.c.l.b16 %v72
  %v652 = vunpack.c.h.b16 %v72
  %v653 = vunpack.c.l.b16 %v73
  %v654 = vunpack.c.h.b16 %v73
  %v655 = vunpack.c.l.b16 %v74
  %v656 = vunpack.c.h.b16 %v74
  %v657 = vunpack.c.l.b16 %v75
  %v658 = vunpack.c.h.b16 %v75
  %v659 = vunpack.c.l.b16 %v76
  %v660 = vunpack.c.h.b16 %v76
  %v661 = vunpack.c.l.b16 %v77
  %v662 = vunpack.c.h.b16 %v77
  %v663 = vunpack.c.l.b16 %v78
  %v664 = vunpack.c.h.b16 %v78
  %v665 = vunpack.c.l.b16 %v79
  %v666 = vunpack.c.h.b16 %v79
  %v667 = vunpack.c.l.b16 %v80
  %v668 = vunpack.c.h.b16 %v80
  %v669 = vunpack.c.l.b16 %v81
  %v670 = vunpack.c.h.b16 %v81
  %v671 = vunpack.c.l.b16 %v82
  %v672 = vunpack.c.h.b16 %v82
  %v673 = vunpack.c.l.b16 %v83
  %v674 = vunpack.c.h.b16 %v83
  %v675 = vunpack.c.l.b16 %v84
  %v676 = vunpack.c.h.b16 %v84
  %v677 = vunpack.c.l.b16 %v85
  %v678 = vunpack.c.h.b16 %v85
  %v679 = vunpack.c.l.b16 %v86
  %v680 = vunpack.c.h.b16 %v86
  %v681 = vunpack.c.l.b16 %v87
  %v682 = vunpack.c.h.b16 %v87
  %v683 = vunpack.c.l.b16 %v88
  %v684 = vunpack.c.h.b16 %v88
  %v685 = vunpack.c.l.b16 %v89
  %v686 = vunpack.c.h.b16 %v89
  %v687 = vunpack.c.l.b16 %v90
  %v688 = vunpack.c.h.b16 %v90
  %v689 = vunpack.c.l.b16 %v91
  %v690 = vunpack.c.h.b16 %v91
  %v691 = vunpack.c.l.b16 %v92
  %v692 = vunpack.c.h.b16 %v92
  %v693 = vunpack.c.l.b16 %v93
  %v694 = vunpack.c.h.b16 %v93
  %v695 = vunpack.c.l.b16 %v94
  %v696 = vunpack.c.h.b16 %v94
  %v697 = vunpack.c.l.b16 %v95
  %v698 = vunpack.c.h.b16 %v95
  %v699 = vunpack.c.l.b16 %v96
  %v700 = vunpack.c.h.b16 %v96
  %v701 = vunpack.c.l.b16 %v97
  %v702 = vunpack.c.h.b16 %v97
  %v703 = vunpack.c.l.b16 %v98
  %v704 = vunpack.c.h.b16 %v98
  %v705 = vunpack.c.l.b16 %v99
  %v706 = vunpack.c.h.b16 %v99
  %v707 = vunpack.c.l.b16 %v100
  %v708 = vunpack.c.h.b16 %v100
  %v709 = vunpack.c.l.b16 %v101
  %v710 = vunpack.c.h.b16 %v101
  %v711 = vunpack.c.l.b16 %v102
  %v712 = vunpack.c.h.b16 %v102
  %v713 = vunpack.c.l.b16 %v103
  %v714 = vunpack.c.h.b16 %v103
  %v715 = vunpack.c.l.b16 %v104
  %v716 = vunpack.c.h.b16 %v104
  %v717 = vunpack.c.l.b16 %v105
  %v718 = vunpack.c.h.b16 %v105
  %v719 = vunpack.c.l.b16 %v106
  %v720 = vunpack.c.h.b16 %v106
  %v721 = vunpack.c.l.b16 %v107
  %v722 = vunpack.c.h.b16 %v107
  %v723 = vunpack.c.l.b16 %v108
  %v724 = vunpack.c.h.b16 %v108
  %v725 = vunpack.c.l.b16 %v109
  %v726 = vunpack.c.h.b16 %v109
  %v727 = vunpack.c.l.b16 %v110
  %v728 = vunpack.c.h.b16 %v110
  %v729 = vunpack.c.l.b16 %v111
  %v730 = vunpack.c.h.b16 %v111
  %v731 = vunpack.c.l.b16 %v112
  %v732 = vunpack.c.h.b16 %v112
  %v733 = vunpack.c.l.b16 %v113
  %v734 = vunpack.c.h.b16 %v113
  %v735 = vunpack.c.l.b16 %v114
  %v736 = vunpack.c.h.b16 %v114
  %v737 = vunpack.c.l.b16 %v115
  %v738 = vunpack.c.h.b16 %v115
  %v739 = vunpack.c.l.b16 %v116
  %v740 = vunpack.c.h.b16 %v116
  %v741 = vunpack.c.l.b16 %v117
  %v742 = vunpack.c.h.b16 %v117
  %v743 = vunpack.c.l.b16 %v118
  %v744 = vunpack.c.h.b16 %v118
  %v745 = vunpack.c.l.b16 %v119
  %v746 = vunpack.c.h.b16 %v119
  %v747 = vunpack.c.l.b16 %v120
  %v748 = vunpack.c.h.b16 %v120
  %v749 = vunpack.c.l.b16 %v121
  %v750 = vunpack.c.h.b16 %v121
  %v751 = vunpack.c.l.b16 %v122
  %v752 = vunpack.c.h.b16 %v122
  %v753 = vunpack.c.l.b16 %v123
  %v754 = vunpack.c.h.b16 %v123
  %v755 = vunpack.c.l.b16 %v124
  %v756 = vunpack.c.h.b16 %v124
  %v757 = vunpack.c.l.b16 %v125
  %v758 = vunpack.c.h.b16 %v125
  %v759 = vunpack.c.l.b16 %v126
  %v760 = vunpack.c.h.b16 %v126
  %v761 = vunpack.c.l.b16 %v127
  %v762 = vunpack.c.h.b16 %v127
  %v763 = vunpack.c.l.b16 %v128
  %v764 = vunpack.c.h.b16 %v128
  %v765 = vunpack.c.l.b16 %v129
  %v766 = vunpack.c.h.b16 %v129
  %v767 = vunpack.c.l.b16 %v130
  %v768 = vunpack.c.h.b16 %v130
  %v769 = vunpack.c.l.b16 %v131
  %v770 = vunpack.c.h.b16 %v131
  %v771 = vunpack.c.l.b16 %v132
  %v772 = vunpack.c.h.b16 %v132
  %v773 = vunpack.c.l.b16 %v133
  %v774 = vunpack.c.h.b16 %v133
  %v775 = vunpack.c.l.b16 %v134
  %v776 = vunpack.c.h.b16 %v134
  %v777 = vunpack.c.l.b16 %v135
  %v778 = vunpack.c.h.b16 %v135
  %v779 = vunpack.c.l.b16 %v136
  %v780 = vunpack.c.h.b16 %v136
  %v781 = vunpack.c.l.b16 %v137
  %v782 = vunpack.c.h.b16 %v137
  %v783 = vunpack.c.l.b16 %v138
  %v784 = vunpack.c.h.b16 %v138
  %v785 = vunpack.c.l.b16 %v139
  %v786 = vunpack.c.h.b16 %v139
  %v787 = vunpack.c.l.b16 %v140
  %v788 = vunpack.c.h.b16 %v140
  %v789 = vunpack.c.l.b16 %v141
  %v790 = vunpack.c.h.b16 %v141
  %v791 = vunpack.c.l.b16 %v142
  %v792 = vunpack.c.h.b16 %v142
  %v793 = vunpack.c.l.b16 %v143
  %v794 = vunpack.c.h.b16 %v143
  %v795 = vunpack.c.l.b16 %v144
  %v796 = vunpack.c.h.b16 %v144
  %v797 = vunpack.c.l.b16 %v145
  %v798 = vunpack.c.h.b16 %v145
  %v799 = vunpack.c.l.b16 %v146
  %v800 = vunpack.c.h.b16 %v146
  %v801 = vunpack.c.l.b16 %v147
  %v802 = vunpack.c.h.b16 %v147
  %v803 = vunpack.c.l.b16 %v148
  %v804 = vunpack.c.h.b16 %v148
  %v805 = vunpack.c.l.b16 %v149
  %v806 = vunpack.c.h.b16 %v149
  %v807 = vunpack.c.l.b16 %v150
  %v808 = vunpack.c.h.b16 %v150
  %v809 = vunpack.c.l.b16 %v151
  %v810 = vunpack.c.h.b16 %v151
  %v811 = vunpack.c.l.b16 %v152
  %v812 = vunpack.c.h.b16 %v152
  %v813 = vunpack.c.l.b16 %v153
  %v814 = vunpack.c.h.b16 %v153
  %v815 = vunpack.c.l.b16 %v154
  %v816 = vunpack.c.h.b16 %v154
  %v817 = vunpack.c.l.b16 %v155
  %v818 = vunpack.c.h.b16 %v155
  %v819 = vunpack.c.l.b16 %v156
  %v820 = vunpack.c.h.b16 %v156
  %v821 = vunpack.c.l.b16 %v157
  %v822 = vunpack.c.h.b16 %v157
  %v823 = vunpack.c.l.b16 %v158
  %v824 = vunpack.c.h.b16 %v158
  %v825 = vunpack.c.l.b16 %v159
  %v826 = vunpack.c.h.b16 %v159
  %v827 = vunpack.c.l.b16 %v160
  %v828 = vunpack.c.h.b16 %v160
  %v829 = vunpack.c.l.b16 %v161
  %v830 = vunpack.c.h.b16 %v161
  %v831 = vunpack.c.l.b16 %v162
  %v832 = vunpack.c.h.b16 %v162
  %v833 = vunpack.c.l.b16 %v163
  %v834 = vunpack.c.h.b16 %v163
  %v835 = vunpack.c.l.b16 %v164
  %v836 = vunpack.c.h.b16 %v164
  %v837 = vunpack.c.l.b16 %v165
  %v838 = vunpack.c.h.b16 %v165
  %v839 = vunpack.c.l.b16 %v166
  %v840 = vunpack.c.h.b16 %v166
  %v841 = vunpack.c.l.b16 %v167
  %v842 = vunpack.c.h.b16 %v167
  %v843 = vunpack.c.l.b16 %v168
  %v844 = vunpack.c.h.b16 %v168
  %v845 = vunpack.c.l.b16 %v169
  %v846 = vunpack.c.h.b16 %v169
  %v847 = vunpack.c.l.b16 %v170
  %v848 = vunpack.c.h.b16 %v170
  %v849 = vunpack.c.l.b16 %v171
  %v850 = vunpack.c.h.b16 %v171
  %v851 = vunpack.c.l.b16 %v172
  %v852 = vunpack.c.h.b16 %v172
  %v853 = vunpack.c.l.b16 %v173
  %v854 = vunpack.c.h.b16 %v173
  %v855 = vunpack.c.l.b16 %v174
  %v856 = vunpack.c.h.b16 %v174
  %v857 = vunpack.c.l.b16 %v175
  %v858 = vunpack.c.h.b16 %v175
  %v859 = vunpack.c.l.b16 %v176
  %v860 = vunpack.c.h.b16 %v176
  %v861 = vunpack.c.l.b16 %v177
  %v862 = vunpack.c.h.b16 %v177
  %v863 = vunpack.c.l.b16 %v178
  %v864 = vunpack.c.h.b16 %v178
  %v865 = vunpack.c.l.b16 %v179
  %v866 = vunpack.c.h.b16 %v179
  %v867 = vunpack.c.l.b16 %v180
  %v868 = vunpack.c.h.b16 %v180
  %v869 = vunpack.c.l.b16 %v181
  %v870 = vunpack.c.h.b16 %v181
  %v871 = vunpack.c.l.b16 %v182
  %v872 = vunpack.c.h.b16 %v182
  %v873 = vunpack.c.l.b16 %v183
  %v874 = vunpack.c.h.b16 %v183
  %v875 = vunpack.c.l.b16 %v184
  %v876 = vunpack.c.h.b16 %v184
  %v877 = vunpack.c.l.b16 %v185
  %v878 = vunpack.c.h.b16 %v185
  %v879 = vunpack.c.l.b16 %v186
  %v880 = vunpack.c.h.b16 %v186
  %v881 = vunpack.c.l.b16 %v187
  %v882 = vunpack.c.h.b16 %v187
  %v883 = vunpack.c.l.b16 %v188
  %v884 = vunpack.c.h.b16 %v188
  %v885 = vunpack.c.l.b16 %v189
  %v886 = vunpack.c.h.b16 %v189
  %v887 = vunpack.c.l.b16 %v190
  %v888 = vunpack.c.h.b16 %v190
  %v889 = vunpack.c.l.b16 %v191
  %v890 = vunpack.c.h.b16 %v191
  %v891 = vunpack.c.l.b16 %v192
  %v892 = vunpack.c.h.b16 %v192
  %v893 = vunpack.c.l.b16 %v193
  %v894 = vunpack.c.h.b16 %v193
  %v895 = vunpack.c.l.b16 %v194
  %v896 = vunpack.c.h.b16 %v194
  %v897 = vunpack.c.l.b16 %v195
  %v898 = vunpack.c.h.b16 %v195
  %v899 = vunpack.c.l.b16 %v196
  %v900 = vunpack.c.h.b16 %v196
  %v901 = vunpack.c.l.b16 %v197
  %v902 = vunpack.c.h.b16 %v197
  %v903 = vunpack.c.l.b16 %v198
  %v904 = vunpack.c.h.b16 %v198
  %v905 = vunpack.c.l.b16 %v199
  %v906 = vunpack.c.h.b16 %v199
  %v907 = vunpack.c.l.b16 %v200
  %v908 = vunpack.c.h.b16 %v200
  %v909 = vunpack.c.l.b16 %v201
  %v910 = vunpack.c.h.b16 %v201
  %v911 = vunpack.c.l.b16 %v202
  %v912 = vunpack.c.h.b16 %v202
  %v913 = vunpack.c.l.b16 %v203
  %v914 = vunpack.c.h.b16 %v203
  %v915 = vunpack.c.l.b16 %v204
  %v916 = vunpack.c.h.b16 %v204
  %v917 = vunpack.c.l.b16 %v205
  %v918 = vunpack.c.h.b16 %v205
  %v919 = vunpack.c.l.b16 %v206
  %v920 = vunpack.c.h.b16 %v206
  %v921 = vunpack.c.l.b16 %v207
  %v922 = vunpack.c.h.b16 %v207
  %v923 = vunpack.c.l.b16 %v208
  %v924 = vunpack.c.h.b16 %v208
  %v925 = vunpack.c.l.b16 %v209
  %v926 = vunpack.c.h.b16 %v209
  %v927 = vunpack.c.l.b16 %v210
  %v928 = vunpack.c.h.b16 %v210
  %v929 = vunpack.c.l.b16 %v211
  %v930 = vunpack.c.h.b16 %v211
  %v931 = vunpack.c.l.b16 %v212
  %v932 = vunpack.c.h.b16 %v212
  %v933 = vunpack.c.l.b16 %v213
  %v934 = vunpack.c.h.b16 %v213
  %v935 = vunpack.c.l.b16 %v214
  %v936 = vunpack.c.h.b16 %v214
  %v937 = vunpack.c.l.b16 %v215
  %v938 = vunpack.c.h.b16 %v215
  %v939 = vunpack.c.l.b16 %v216
  %v940 = vunpack.c.h.b16 %v216
  %v941 = vunpack.c.l.b16 %v217
  %v942 = vunpack.c.h.b16 %v217
  %v943 = vunpack.c.l.b16 %v218
  %v944 = vunpack.c.h.b16 %v218
  %v945 = vunpack.c.l.b16 %v219
  %v946 = vunpack.c.h.b16 %v219
  %v947 = vunpack.c.l.b16 %v220
  %v948 = vunpack.c.h.b16 %v220
  %v949 = vunpack.c.l.b16 %v221
  %v950 = vunpack.c.h.b16 %v221
  %v951 = vunpack.c.l.b16 %v222
  %v952 = vunpack.c.h.b16 %v222
  %v953 = vunpack.c.l.b16 %v223
  %v954 = vunpack.c.h.b16 %v223
  %v955 = vunpack.c.l.b16 %v224
  %v956 = vunpack.c.h.b16 %v224
  %v957 = vunpack.c.l.b16 %v225
  %v958 = vunpack.c.h.b16 %v225
  %v959 = vunpack.c.l.b16 %v226
  %v960 = vunpack.c.h.b16 %v226
  %v961 = vunpack.c.l.b16 %v227
  %v962 = vunpack.c.h.b16 %v227
  %v963 = vunpack.c.l.b16 %v228
  %v964 = vunpack.c.h.b16 %v228
  %v965 = vunpack.c.l.b16 %v229
  %v966 = vunpack.c.h.b16 %v229
  %v967 = vunpack.c.l.b16 %v230
  %v968 = vunpack.c.h.b16 %v230
  %v969 = vunpack.c.l.b16 %v231
  %v970 = vunpack.c.h.b16 %v231
  %v971 = vunpack.c.l.b16 %v232
  %v972 = vunpack.c.h.b16 %v232
  %v973 = vunpack.c.l.b16 %v233
  %v974 = vunpack.c.h.b16 %v233
  %v975 = vunpack.c.l.b16 %v234
  %v976 = vunpack.c.h.b16 %v234
  %v977 = vunpack.c.l.b16 %v235
  %v978 = vunpack.c.h.b16 %v235
  %v979 = vunpack.c.l.b16 %v236
  %v980 = vunpack.c.h.b16 %v236
  %v981 = vunpack.c.l.b16 %v237
  %v982 = vunpack.c.h.b16 %v237
  %v983 = vunpack.c.l.b16 %v238
  %v984 = vunpack.c.h.b16 %v238
  %v985 = vunpack.c.l.b16 %v239
  %v986 = vunpack.c.h.b16 %v239
  %v987 = vunpack.c.l.b16 %v240
  %v988 = vunpack.c.h.b16 %v240
  %v989 = vunpack.c.l.b16 %v241
  %v990 = vunpack.c.h.b16 %v241
  %v991 = vunpack.c.l.b16 %v242
  %v992 = vunpack.c.h.b16 %v242
  %v993 = vunpack.c.l.b16 %v243
  %v994 = vunpack.c.h.b16 %v243
  %v995 = vunpack.c.l.b16 %v244
  %v996 = vunpack.c.h.b16 %v244
  %v997 = vunpack.c.l.b16 %v245
  %v998 = vunpack.c.h.b16 %v245
  %v999 = vunpack.c.l.b16 %v246
  %v1000 = vunpack.c.h.b16 %v246
  %v1001 = vunpack.c.l.b16 %v247
  %v1002 = vunpack.c.h.b16 %v247
  %v1003 = vunpack.c.l.b16 %v248
  %v1004 = vunpack.c.h.b16 %v248
  %v1005 = vunpack.c.l.b16 %v249
  %v1006 = vunpack.c.h.b16 %v249
  %v1007 = vunpack.c.l.b16 %v250
  %v1008 = vunpack.c.h.b16 %v250
  %v1009 = vunpack.c.l.b16 %v251
  %v1010 = vunpack.c.h.b16 %v251
  %v1011 = vunpack.c.l.b16 %v252
  %v1012 = vunpack.c.h.b16 %v252
  %v1013 = vunpack.c.l.b16 %v253
  %v1014 = vunpack.c.h.b16 %v253
  %v1015 = vunpack.c.l.b16 %v254
  %v1016 = vunpack.c.h.b16 %v254
  %v1017 = vunpack.c.l.b16 %v255
  %v1018 = vunpack.c.h.b16 %v255
  %v1019 = vunpack.c.l.b16 %v256
  %v1020 = vunpack.c.h.b16 %v256
  %v1021 = vunpack.c.l.b16 %v257
  %v1022 = vunpack.c.h.b16 %v257
  %v1023 = vunpack.c.l.b16 %v258
  %v1024 = vunpack.c.h.b16 %v258
  %v1025 = vunpack.c.l.b16 %v259
  %v1026 = vunpack.c.h.b16 %v259
  %v1027 = vunpack.c.l.b16 %v260
  %v1028 = vunpack.c.h.b16 %v260
  %v1029 = vunpack.c.l.b16 %v261
  %v1030 = vunpack.c.h.b16 %v261
  %v1031 = vunpack.c.l.b16 %v262
  %v1032 = vunpack.c.h.b16 %v262
  %v1033 = vunpack.c.l.b16 %v263
  %v1034 = vunpack.c.h.b16 %v263
  %v1035 = vunpack.c.l.b16 %v264
  %v1036 = vunpack.c.h.b16 %v264
  %v1037 = vunpack.c.l.b16 %v265
  %v1038 = vunpack.c.h.b16 %v265
  %v1039 = vunpack.c.l.b16 %v266
  %v1040 = vunpack.c.h.b16 %v266
  %v1041 = vunpack.c.l.b16 %v267
  %v1042 = vunpack.c.h.b16 %v267
  %v1043 = vunpack.c.l.b16 %v268
  %v1044 = vunpack.c.h.b16 %v268
  %v1045 = vunpack.c.l.b16 %v269
  %v1046 = vunpack.c.h.b16 %v269
  %v1047 = vunpack.c.l.b16 %v270
  %v1048 = vunpack.c.h.b16 %v270
  %v1049 = vunpack.c.l.b16 %v271
  %v1050 = vunpack.c.h.b16 %v271
  %v1051 = vunpack.c.l.b16 %v272
  %v1052 = vunpack.c.h.b16 %v272
  %v1053 = vunpack.c.l.b16 %v273
  %v1054 = vunpack.c.h.b16 %v273
  %v1055 = vpack.c.b16 %v559, %v543
  %v1056 = vpack.c.b16 %v560, %v544
  %v1057 = vpack.c.b16 %v561, %v545
  %v1058 = vpack.c.b16 %v562, %v546
  %v1059 = vpack.c.b16 %v563, %v547
  %v1060 = vpack.c.b16 %v564, %v548
  %v1061 = vpack.c.b16 %v565, %v549
  %v1062 = vpack.c.b16 %v566, %v550
  %v1063 = vpack.c.b16 %v567, %v551
  %v1064 = vpack.c.b16 %v568, %v552
  %v1065 = vpack.c.b16 %v569, %v553
  %v1066 = vpack.c.b16 %v570, %v554
  %v1067 = vpack.c.b16 %v571, %v555
  %v1068 = vpack.c.b16 %v572, %v556
  %v1069 = vpack.c.b16 %v573, %v557
  %v1070 = vpack.c.b16 %v574, %v558
  %v1071 = vpack.c.b16 %v591, %v575
  %v1072 = vpack.c.b16 %v592, %v576
  %v1073 = vpack.c.b16 %v593, %v577
  %v1074 = vpack.c.b16 %v594, %v578
  %v1075 = vpack.c.b16 %v595, %v579
  %v1076 = vpack.c.b16 %v596, %v580
  %v1077 = vpack.c.b16 %v597, %v581
  %v1078 = vpack.c.b16 %v598, %v582
  %v1079 = vpack.c.b16 %v599, %v583
  %v1080 = vpack.c.b16 %v600, %v584
  %v1081 = vpack.c.b16 %v601, %v585
  %v1082 = vpack.c.b16 %v602, %v586
  %v1083 = vpack.c.b16 %v603, %v587
  %v1084 = vpack.c.b16 %v604, %v588
  %v1085 = vpack.c.b16 %v605, %v589
  %v1086 = vpack.c.b16 %v606, %v590
  %v1087 = vpack.c.b16 %v623, %v607
  %v1088 = vpack.c.b16 %v624, %v608
  %v1089 = vpack.c.b16 %v625, %v609
  %v1090 = vpack.c.b16 %v626, %v610
  %v1091 = vpack.c.b16 %v627, %v611
  %v1092 = vpack.c.b16 %v628, %v612
  %v1093 = vpack.c.b16 %v629, %v613
  %v1094 = vpack.c.b16 %v630, %v614
  %v1095 = vpack.c.b16 %v631, %v615
  %v1096 = vpack.c.b16 %v632, %v616
  %v1097 = vpack.c.b16 %v633, %v617
  %v1098 = vpack.c.b16 %v634, %v618
  %v1099 = vpack.c.b16 %v635, %v619
  %v1100 = vpack.c.b16 %v636, %v620
  %v1101 = vpack.c.b16 %v637, %v621
  %v1102 = vpack.c.b16 %v638, %v622
  %v1103 = vpack.c.b16 %v655, %v639
  %v1104 = vpack.c.b16 %v656, %v640
  %v1105 = vpack.c.b16 %v657, %v641
  %v1106 = vpack.c.b16 %v658, %v642
  %v1107 = vpack.c.b16 %v659, %v643
  %v1108 = vpack.c.b16 %v660, %v644
  %v1109 = vpack.c.b16 %v661, %v645
  %v1110 = vpack.c.b16 %v662, %v646
  %v1111 = vpack.c.b16 %v663, %v647
  %v1112 = vpack.c.b16 %v664, %v648
  %v1113 = vpack.c.b16 %v665, %v649
  %v1114 = vpack.c.b16 %v666, %v650
  %v1115 = vpack.c.b16 %v667, %v651
  %v1116 = vpack.c.b16 %v668, %v652
  %v1117 = vpack.c.b16 %v669, %v653
  %v1118 = vpack.c.b16 %v670, %v654
  %v1119 = vpack.c.b16 %v687, %v671
  %v1120 = vpack.c.b16 %v688, %v672
  %v1121 = vpack.c.b16 %v689, %v673
  %v1122 = vpack.c.b16 %v690, %v674
  %v1123 = vpack.c.b16 %v691, %v675
  %v1124 = vpack.c.b16 %v692, %v676
  %v1125 = vpack.c.b16 %v693, %v677
  %v1126 = vpack.c.b16 %v694, %v678
  %v1127 = vpack.c.b16 %v695, %v679
  %v1128 = vpack.c.b16 %v696, %v680
  %v1129 = vpack.c.b16 %v697, %v681
  %v1130 = vpack.c.b16 %v698, %v682
  %v1131 = vpack.c.b16 %v699, %v683
  %v1132 = vpack.c.b16 %v700, %v684
  %v1133 = vpack.c.b16 %v701, %v685
  %v1134 = vpack.c.b16 %v702, %v686
  %v1135 = vpack.c.b16 %v719, %v703
  %v1136 = vpack.c.b16 %v720, %v704
  %v1137 = vpack.c.b16 %v721, %v705
  %v1138 = vpack.c.b16 %v722, %v706
  %v1139 = vpack.c.b16 %v723, %v707
  %v1140 = vpack.c.b16 %v724, %v708
  %v1141 = vpack.c.b16 %v725, %v709
  %v1142 = vpack.c.b16 %v726, %v710
  %v1143 = vpack.c.b16 %v727, %v711
  %v1144 = vpack.c.b16 %v728, %v712
  %v1145 = vpack.c.b16 %v729, %v713
  %v1146 = vpack.c.b16 %v730, %v714
  %v1147 = vpack.c.b16 %v731, %v715
  %v1148 = vpack.c.b16 %v732, %v716
  %v1149 = vpack.c.b16 %v733, %v717
  %v1150 = vpack.c.b16 %v734, %v718
  %v1151 = vpack.c.b16 %v751, %v735
  %v1152 = vpack.c.b16 %v752, %v736
  %v1153 = vpack.c.b16 %v753, %v737
  %v1154 = vpack.c.b16 %v754, %v738
  %v1155 = vpack.c.b16 %v755, %v739
  %v1156 = vpack.c.b16 %v756, %v740
  %v1157 = vpack.c.b16 %v757, %v741
  %v1158 = vpack.c.b16 %v758, %v742
  %v1159 = vpack.c.b16 %v759, %v743
  %v1160 = vpack.c.b16 %v760, %v744
  %v1161 = vpack.c.b16 %v761, %v745
  %v1162 = vpack.c.b16 %v762, %v746
  %v1163 = vpack.c.b16 %v763, %v747
  %v1164 = vpack.c.b16 %v764, %v748
  %v1165 = vpack.c.b16 %v765, %v749
  %v1166 = vpack.c.b16 %v766, %v750
  %v1167 = vpack.c.b16 %v783, %v767
  %v1168 = vpack.c.b16 %v784, %v768
  %v1169 = vpack.c.b16 %v785, %v769
  %v1170 = vpack.c.b16 %v786, %v770
  %v1171 = vpack.c.b16 %v787, %v771
  %v1172 = vpack.c.b16 %v788, %v772
  %v1173 = vpack.c.b16 %v789, %v773
  %v1174 = vpack.c.b16 %v790, %v774
  %v1175 = vpack.c.b16 %v791, %v775
  %v1176 = vpack.c.b16 %v792, %v776
  %v1177 = vpack.c.b16 %v793, %v777
  %v1178 = vpack.c.b16 %v794, %v778
  %v1179 = vpack.c.b16 %v795, %v779
  %v1180 = vpack.c.b16 %v796, %v780
  %v1181 = vpack.c.b16 %v797, %v781
  %v1182 = vpack.c.b16 %v798, %v782
  %v1183 = vpack.c.b16 %v815, %v799
  %v1184 = vpack.c.b16 %v816, %v800
  %v1185 = vpack.c.b16 %v817, %v801
  %v1186 = vpack.c.b16 %v818, %v802
  %v1187 = vpack.c.b16 %v819, %v803
  %v1188 = vpack.c.b16 %v820, %v804
  %v1189 = vpack.c.b16 %v821, %v805
  %v1190 = vpack.c.b16 %v822, %v806
  %v1191 = vpack.c.b16 %v823, %v807
  %v1192 = vpack.c.b16 %v824, %v808
  %v1193 = vpack.c.b16 %v825, %v809
  %v1194 = vpack.c.b16 %v826, %v810
  %v1195 = vpack.c.b16 %v827, %v811
  %v1196 = vpack.c.b16 %v828, %v812
  %v1197 = vpack.c.b16 %v829, %v813
  %v1198 = vpack.c.b16 %v830, %v814
  %v1199 = vpack.c.b16 %v847, %v831
  %v1200 = vpack.c.b16 %v848, %v832
  %v1201 = vpack.c.b16 %v849, %v833
  %v1202 = vpack.c.b16 %v850, %v834
  %v1203 = vpack.c.b16 %v851, %v835
  %v1204 = vpack.c.b16 %v852, %v836
  %v1205 = vpack.c.b16 %v853, %v837
  %v1206 = vpack.c.b16 %v854, %v838
  %v1207 = vpack.c.b16 %v855, %v839
  %v1208 = vpack.c.b16 %v856, %v840
  %v1209 = vpack.c.b16 %v857, %v841
  %v1210 = vpack.c.b16 %v858, %v842
  %v1211 = vpack.c.b16 %v859, %v843
  %v1212 = vpack.c.b16 %v860, %v844
  %v1213 = vpack.c.b16 %v861, %v845
  %v1214 = vpack.c.b16 %v862, %v846
  %v1215 = vpack.c.b16 %v879, %v863
  %v1216 = vpack.c.b16 %v880, %v864
  %v1217 = vpack.c.b16 %v881, %v865
  %v1218 = vpack.c.b16 %v882, %v866
  %v1219 = vpack.c.b16 %v883, %v867
  %v1220 = vpack.c.b16 %v884, %v868
  %v1221 = vpack.c.b16 %v885, %v869
  %v1222 = vpack.c.b16 %v886, %v870
  %v1223 = vpack.c.b16 %v887, %v871
  %v1224 = vpack.c.b16 %v888, %v872
  %v1225 = vpack.c.b16 %v889, %v873
  %v1226 = vpack.c.b16 %v890, %v874
  %v1227 = vpack.c.b16 %v891, %v875
  %v1228 = vpack.c.b16 %v892, %v876
  %v1229 = vpack.c.b16 %v893, %v877
  %v1230 = vpack.c.b16 %v894, %v878
  %v1231 = vpack.c.b16 %v911, %v895
  %v1232 = vpack.c.b16 %v912, %v896
  %v1233 = vpack.c.b16 %v913, %v897
  %v1234 = vpack.c.b16 %v914, %v898
  %v1235 = vpack.c.b16 %v915, %v899
  %v1236 = vpack.c.b16 %v916, %v900
  %v1237 = vpack.c.b16 %v917, %v901
  %v1238 = vpack.c.b16 %v918, %v902
  %v1239 = vpack.c.b16 %v919, %v903
  %v1240 = vpack.c.b16 %v920, %v904
  %v1241 = vpack.c.b16 %v921, %v905
  %v1242 = vpack.c.b16 %v922, %v906
  %v1243 = vpack.c.b16 %v923, %v907
  %v1244 = vpack.c.b16 %v924, %v908
  %v1245 = vpack.c.b16 %v925, %v909
  %v1246 = vpack.c.b16 %v926, %v910
  %v1247 = vpack.c.b16 %v943, %v927
  %v1248 = vpack.c.b16 %v944, %v928
  %v1249 = vpack.c.b16 %v945, %v929
  %v1250 = vpack.c.b16 %v946, %v930
  %v1251 = vpack.c.b16 %v947, %v931
  %v1252 = vpack.c.b16 %v948, %v932
  %v1253 = vpack.c.b16 %v949, %v933
  %v1254 = vpack.c.b16 %v950, %v934
  %v1255 = vpack.c.b16 %v951, %v935
  %v1256 = vpack.c.b16 %v952, %v936
  %v1257 = vpack.c.b16 %v953, %v937
  %v1258 = vpack.c.b16 %v954, %v938
  %v1259 = vpack.c.b16 %v955, %v939
  %v1260 = vpack.c.b16 %v956, %v940
  %v1261 = vpack.c.b16 %v957, %v941
  %v1262 = vpack.c.b16 %v958, %v942
  %v1263 = vpack.c.b16 %v975, %v959
  %v1264 = vpack.c.b16 %v976, %v960
  %v1265 = vpack.c.b16 %v977, %v961
  %v1266 = vpack.c.b16 %v978, %v962
  %v1267 = vpack.c.b16 %v979, %v963
  %v1268 = vpack.c.b16 %v980, %v964
  %v1269 = vpack.c.b16 %v981, %v965
  %v1270 = vpack.c.b16 %v982, %v966
  %v1271 = vpack.c.b16 %v983, %v967
  %v1272 = vpack.c.b16 %v984, %v968
  %v1273 = vpack.c.b16 %v985, %v969
  %v1274 = vpack.c.b16 %v986, %v970
  %v1275 = vpack.c.b16 %v987, %v971
  %v1276 = vpack.c.b16 %v988, %v972
  %v1277 = vpack.c.b16 %v989, %v973
  %v1278 = vpack.c.b16 %v990, %v974
  %v1279 = vpack.c.b16 %v1007, %v991
  %v1280 = vpack.c.b16 %v1008, %v992
  %v1281 = vpack.c.b16 %v1009, %v993
  %v1282 = vpack.c.b16 %v1010, %v994
  %v1283 = vpack.c.b16 %v1011, %v995
  %v1284 = vpack.c.b16 %v1012, %v996
  %v1285 = vpack.c.b16 %v1013, %v997
  %v1286 = vpack.c.b16 %v1014, %v998
  %v1287 = vpack.c.b16 %v1015, %v999
  %v1288 = vpack.c.b16 %v1016, %v1000
  %v1289 = vpack.c.b16 %v1017, %v1001
  %v1290 = vpack.c.b16 %v1018, %v1002
  %v1291 = vpack.c.b16 %v1019, %v1003
  %v1292 = vpack.c.b16 %v1020, %v1004
  %v1293 = vpack.c.b16 %v1021, %v1005
  %v1294 = vpack.c.b16 %v1022, %v1006
  %v1295 = vpack.c.b16 %v1039, %v1023
  %v1296 = vpack.c.b16 %v1040, %v1024
  %v1297 = vpack.c.b16 %v1041, %v1025
  %v1298 = vpack.c.b16 %v1042, %v1026
  %v1299 = vpack.c.b16 %v1043, %v1027
  %v1300 = vpack.c.b16 %v1044, %v1028
  %v1301 = vpack.c.b16 %v1045, %v1029
  %v1302 = vpack.c.b16 %v1046, %v1030
  %v1303 = vpack.c.b16 %v1047, %v1031
  %v1304 = vpack.c.b16 %v1048, %v1032
  %v1305 = vpack.c.b16 %v1049, %v1033
  %v1306 = vpack.c.b16 %v1050, %v1034
  %v1307 = vpack.c.b16 %v1051, %v1035
  %v1308 = vpack.c.b16 %v1052, %v1036
  %v1309 = vpack.c.b16 %v1053, %v1037
  %v1310 = vpack.c.b16 %v1054, %v1038
  %1567 = vmatpush.bf16.msra.mxu0 %v1167
  %1568 = vmatpush.bf16.msra.mxu0 %v1151
  %1569 = vmatpush.bf16.msra.mxu0 %v1135
  %1570 = vmatpush.bf16.msra.mxu0 %v1119
  %1571 = vmatpush.bf16.msra.mxu0 %v1103
  %1572 = vmatpush.bf16.msra.mxu0 %v1087
  %1573 = vmatpush.bf16.msra.mxu0 %v1071
  %1574 = vmatpush.bf16.msra.mxu0 %v1055
  %1575 = vmatmul.bf16.gmra.mxu0 %v283
  %v1576 = vpop.f32.mrf.mxu0
  %v1577 = vadd.f32 %v278, %v1576
  %v1578 = vpop.f32.mrf.mxu0
  %1579 = vdwg.mxu0
  %1580 = vmatpush.bf16.msra.mxu0 %v1295
  %1581 = vmatpush.bf16.msra.mxu0 %v1279
  %1582 = vmatpush.bf16.msra.mxu0 %v1263
  %1583 = vmatpush.bf16.msra.mxu0 %v1247
  %1584 = vmatpush.bf16.msra.mxu0 %v1231
  %1585 = vmatpush.bf16.msra.mxu0 %v1215
  %1586 = vmatpush.bf16.msra.mxu0 %v1199
  %1587 = vmatpush.bf16.msra.mxu0 %v1183
  %1588 = vmatmul.bf16.gmra.mxu0 %v284
  %v1589 = vpop.f32.mrf.mxu0
  %v1590 = vadd.f32 %v1577, %v1589
  %v1591 = vpop.f32.mrf.mxu0
  %1592 = vdwg.mxu0
  %1593 = vmatpush.bf16.msra.mxu0 %v1168
  %1594 = vmatpush.bf16.msra.mxu0 %v1152
  %1595 = vmatpush.bf16.msra.mxu0 %v1136
  %1596 = vmatpush.bf16.msra.mxu0 %v1120
  %1597 = vmatpush.bf16.msra.mxu0 %v1104
  %1598 = vmatpush.bf16.msra.mxu0 %v1088
  %1599 = vmatpush.bf16.msra.mxu0 %v1072
  %1600 = vmatpush.bf16.msra.mxu0 %v1056
  %1601 = vmatmul.bf16.gmra.mxu0 %v283
  %v1602 = vpop.f32.mrf.mxu0
  %v1603 = vadd.f32 %v278, %v1602
  %v1604 = vpop.f32.mrf.mxu0
  %1605 = vdwg.mxu0
  %1606 = vmatpush.bf16.msra.mxu0 %v1296
  %1607 = vmatpush.bf16.msra.mxu0 %v1280
  %1608 = vmatpush.bf16.msra.mxu0 %v1264
  %1609 = vmatpush.bf16.msra.mxu0 %v1248
  %1610 = vmatpush.bf16.msra.mxu0 %v1232
  %1611 = vmatpush.bf16.msra.mxu0 %v1216
  %1612 = vmatpush.bf16.msra.mxu0 %v1200
  %1613 = vmatpush.bf16.msra.mxu0 %v1184
  %1614 = vmatmul.bf16.gmra.mxu0 %v284
  %v1615 = vpop.f32.mrf.mxu0
  %v1616 = vadd.f32 %v1603, %v1615
  %v1617 = vpop.f32.mrf.mxu0
  %1618 = vdwg.mxu0
  %1619 = vmatpush.bf16.msra.mxu0 %v1169
  %1620 = vmatpush.bf16.msra.mxu0 %v1153
  %1621 = vmatpush.bf16.msra.mxu0 %v1137
  %1622 = vmatpush.bf16.msra.mxu0 %v1121
  %1623 = vmatpush.bf16.msra.mxu0 %v1105
  %1624 = vmatpush.bf16.msra.mxu0 %v1089
  %1625 = vmatpush.bf16.msra.mxu0 %v1073
  %1626 = vmatpush.bf16.msra.mxu0 %v1057
  %1627 = vmatmul.bf16.gmra.mxu0 %v283
  %v1628 = vpop.f32.mrf.mxu0
  %v1629 = vadd.f32 %v278, %v1628
  %v1630 = vpop.f32.mrf.mxu0
  %1631 = vdwg.mxu0
  %1632 = vmatpush.bf16.msra.mxu0 %v1297
  %1633 = vmatpush.bf16.msra.mxu0 %v1281
  %1634 = vmatpush.bf16.msra.mxu0 %v1265
  %1635 = vmatpush.bf16.msra.mxu0 %v1249
  %1636 = vmatpush.bf16.msra.mxu0 %v1233
  %1637 = vmatpush.bf16.msra.mxu0 %v1217
  %1638 = vmatpush.bf16.msra.mxu0 %v1201
  %1639 = vmatpush.bf16.msra.mxu0 %v1185
  %1640 = vmatmul.bf16.gmra.mxu0 %v284
  %v1641 = vpop.f32.mrf.mxu0
  %v1642 = vadd.f32 %v1629, %v1641
  %v1643 = vpop.f32.mrf.mxu0
  %1644 = vdwg.mxu0
  %1645 = vmatpush.bf16.msra.mxu0 %v1170
  %1646 = vmatpush.bf16.msra.mxu0 %v1154
  %1647 = vmatpush.bf16.msra.mxu0 %v1138
  %1648 = vmatpush.bf16.msra.mxu0 %v1122
  %1649 = vmatpush.bf16.msra.mxu0 %v1106
  %1650 = vmatpush.bf16.msra.mxu0 %v1090
  %1651 = vmatpush.bf16.msra.mxu0 %v1074
  %1652 = vmatpush.bf16.msra.mxu0 %v1058
  %1653 = vmatmul.bf16.gmra.mxu0 %v283
  %v1654 = vpop.f32.mrf.mxu0
  %v1655 = vadd.f32 %v278, %v1654
  %v1656 = vpop.f32.mrf.mxu0
  %1657 = vdwg.mxu0
  %1658 = vmatpush.bf16.msra.mxu0 %v1298
  %1659 = vmatpush.bf16.msra.mxu0 %v1282
  %1660 = vmatpush.bf16.msra.mxu0 %v1266
  %1661 = vmatpush.bf16.msra.mxu0 %v1250
  %1662 = vmatpush.bf16.msra.mxu0 %v1234
  %1663 = vmatpush.bf16.msra.mxu0 %v1218
  %1664 = vmatpush.bf16.msra.mxu0 %v1202
  %1665 = vmatpush.bf16.msra.mxu0 %v1186
  %1666 = vmatmul.bf16.gmra.mxu0 %v284
  %v1667 = vpop.f32.mrf.mxu0
  %v1668 = vadd.f32 %v1655, %v1667
  %v1669 = vpop.f32.mrf.mxu0
  %1670 = vdwg.mxu0
  %1671 = vmatpush.bf16.msra.mxu0 %v1171
  %1672 = vmatpush.bf16.msra.mxu0 %v1155
  %1673 = vmatpush.bf16.msra.mxu0 %v1139
  %1674 = vmatpush.bf16.msra.mxu0 %v1123
  %1675 = vmatpush.bf16.msra.mxu0 %v1107
  %1676 = vmatpush.bf16.msra.mxu0 %v1091
  %1677 = vmatpush.bf16.msra.mxu0 %v1075
  %1678 = vmatpush.bf16.msra.mxu0 %v1059
  %1679 = vmatmul.bf16.gmra.mxu0 %v283
  %v1680 = vpop.f32.mrf.mxu0
  %v1681 = vadd.f32 %v278, %v1680
  %v1682 = vpop.f32.mrf.mxu0
  %1683 = vdwg.mxu0
  %1684 = vmatpush.bf16.msra.mxu0 %v1299
  %1685 = vmatpush.bf16.msra.mxu0 %v1283
  %1686 = vmatpush.bf16.msra.mxu0 %v1267
  %1687 = vmatpush.bf16.msra.mxu0 %v1251
  %1688 = vmatpush.bf16.msra.mxu0 %v1235
  %1689 = vmatpush.bf16.msra.mxu0 %v1219
  %1690 = vmatpush.bf16.msra.mxu0 %v1203
  %1691 = vmatpush.bf16.msra.mxu0 %v1187
  %1692 = vmatmul.bf16.gmra.mxu0 %v284
  %v1693 = vpop.f32.mrf.mxu0
  %v1694 = vadd.f32 %v1681, %v1693
  %v1695 = vpop.f32.mrf.mxu0
  %1696 = vdwg.mxu0
  %1697 = vmatpush.bf16.msra.mxu0 %v1172
  %1698 = vmatpush.bf16.msra.mxu0 %v1156
  %1699 = vmatpush.bf16.msra.mxu0 %v1140
  %1700 = vmatpush.bf16.msra.mxu0 %v1124
  %1701 = vmatpush.bf16.msra.mxu0 %v1108
  %1702 = vmatpush.bf16.msra.mxu0 %v1092
  %1703 = vmatpush.bf16.msra.mxu0 %v1076
  %1704 = vmatpush.bf16.msra.mxu0 %v1060
  %1705 = vmatmul.bf16.gmra.mxu0 %v283
  %v1706 = vpop.f32.mrf.mxu0
  %v1707 = vadd.f32 %v278, %v1706
  %v1708 = vpop.f32.mrf.mxu0
  %1709 = vdwg.mxu0
  %1710 = vmatpush.bf16.msra.mxu0 %v1300
  %1711 = vmatpush.bf16.msra.mxu0 %v1284
  %1712 = vmatpush.bf16.msra.mxu0 %v1268
  %1713 = vmatpush.bf16.msra.mxu0 %v1252
  %1714 = vmatpush.bf16.msra.mxu0 %v1236
  %1715 = vmatpush.bf16.msra.mxu0 %v1220
  %1716 = vmatpush.bf16.msra.mxu0 %v1204
  %1717 = vmatpush.bf16.msra.mxu0 %v1188
  %1718 = vmatmul.bf16.gmra.mxu0 %v284
  %v1719 = vpop.f32.mrf.mxu0
  %v1720 = vadd.f32 %v1707, %v1719
  %v1721 = vpop.f32.mrf.mxu0
  %1722 = vdwg.mxu0
  %1723 = vmatpush.bf16.msra.mxu0 %v1173
  %1724 = vmatpush.bf16.msra.mxu0 %v1157
  %1725 = vmatpush.bf16.msra.mxu0 %v1141
  %1726 = vmatpush.bf16.msra.mxu0 %v1125
  %1727 = vmatpush.bf16.msra.mxu0 %v1109
  %1728 = vmatpush.bf16.msra.mxu0 %v1093
  %1729 = vmatpush.bf16.msra.mxu0 %v1077
  %1730 = vmatpush.bf16.msra.mxu0 %v1061
  %1731 = vmatmul.bf16.gmra.mxu0 %v283
  %v1732 = vpop.f32.mrf.mxu0
  %v1733 = vadd.f32 %v278, %v1732
  %v1734 = vpop.f32.mrf.mxu0
  %1735 = vdwg.mxu0
  %1736 = vmatpush.bf16.msra.mxu0 %v1301
  %1737 = vmatpush.bf16.msra.mxu0 %v1285
  %1738 = vmatpush.bf16.msra.mxu0 %v1269
  %1739 = vmatpush.bf16.msra.mxu0 %v1253
  %1740 = vmatpush.bf16.msra.mxu0 %v1237
  %1741 = vmatpush.bf16.msra.mxu0 %v1221
  %1742 = vmatpush.bf16.msra.mxu0 %v1205
  %1743 = vmatpush.bf16.msra.mxu0 %v1189
  %1744 = vmatmul.bf16.gmra.mxu0 %v284
  %v1745 = vpop.f32.mrf.mxu0
  %v1746 = vadd.f32 %v1733, %v1745
  %v1747 = vpop.f32.mrf.mxu0
  %1748 = vdwg.mxu0
  %1749 = vmatpush.bf16.msra.mxu0 %v1174
  %1750 = vmatpush.bf16.msra.mxu0 %v1158
  %1751 = vmatpush.bf16.msra.mxu0 %v1142
  %1752 = vmatpush.bf16.msra.mxu0 %v1126
  %1753 = vmatpush.bf16.msra.mxu0 %v1110
  %1754 = vmatpush.bf16.msra.mxu0 %v1094
  %1755 = vmatpush.bf16.msra.mxu0 %v1078
  %1756 = vmatpush.bf16.msra.mxu0 %v1062
  %1757 = vmatmul.bf16.gmra.mxu0 %v283
  %v1758 = vpop.f32.mrf.mxu0
  %v1759 = vadd.f32 %v278, %v1758
  %v1760 = vpop.f32.mrf.mxu0
  %1761 = vdwg.mxu0
  %1762 = vmatpush.bf16.msra.mxu0 %v1302
  %1763 = vmatpush.bf16.msra.mxu0 %v1286
  %1764 = vmatpush.bf16.msra.mxu0 %v1270
  %1765 = vmatpush.bf16.msra.mxu0 %v1254
  %1766 = vmatpush.bf16.msra.mxu0 %v1238
  %1767 = vmatpush.bf16.msra.mxu0 %v1222
  %1768 = vmatpush.bf16.msra.mxu0 %v1206
  %1769 = vmatpush.bf16.msra.mxu0 %v1190
  %1770 = vmatmul.bf16.gmra.mxu0 %v284
  %v1771 = vpop.f32.mrf.mxu0
  %v1772 = vadd.f32 %v1759, %v1771
  %v1773 = vpop.f32.mrf.mxu0
  %1774 = vdwg.mxu0
  %1775 = vmatpush.bf16.msra.mxu0 %v1175
  %1776 = vmatpush.bf16.msra.mxu0 %v1159
  %1777 = vmatpush.bf16.msra.mxu0 %v1143
  %1778 = vmatpush.bf16.msra.mxu0 %v1127
  %1779 = vmatpush.bf16.msra.mxu0 %v1111
  %1780 = vmatpush.bf16.msra.mxu0 %v1095
  %1781 = vmatpush.bf16.msra.mxu0 %v1079
  %1782 = vmatpush.bf16.msra.mxu0 %v1063
  %1783 = vmatmul.bf16.gmra.mxu0 %v283
  %v1784 = vpop.f32.mrf.mxu0
  %v1785 = vadd.f32 %v278, %v1784
  %v1786 = vpop.f32.mrf.mxu0
  %1787 = vdwg.mxu0
  %1788 = vmatpush.bf16.msra.mxu0 %v1303
  %1789 = vmatpush.bf16.msra.mxu0 %v1287
  %1790 = vmatpush.bf16.msra.mxu0 %v1271
  %1791 = vmatpush.bf16.msra.mxu0 %v1255
  %1792 = vmatpush.bf16.msra.mxu0 %v1239
  %1793 = vmatpush.bf16.msra.mxu0 %v1223
  %1794 = vmatpush.bf16.msra.mxu0 %v1207
  %1795 = vmatpush.bf16.msra.mxu0 %v1191
  %1796 = vmatmul.bf16.gmra.mxu0 %v284
  %v1797 = vpop.f32.mrf.mxu0
  %v1798 = vadd.f32 %v1785, %v1797
  %v1799 = vpop.f32.mrf.mxu0
  %1800 = vdwg.mxu0
  %1801 = vmatpush.bf16.msra.mxu0 %v1176
  %1802 = vmatpush.bf16.msra.mxu0 %v1160
  %1803 = vmatpush.bf16.msra.mxu0 %v1144
  %1804 = vmatpush.bf16.msra.mxu0 %v1128
  %1805 = vmatpush.bf16.msra.mxu0 %v1112
  %1806 = vmatpush.bf16.msra.mxu0 %v1096
  %1807 = vmatpush.bf16.msra.mxu0 %v1080
  %1808 = vmatpush.bf16.msra.mxu0 %v1064
  %1809 = vmatmul.bf16.gmra.mxu0 %v283
  %v1810 = vpop.f32.mrf.mxu0
  %v1811 = vadd.f32 %v278, %v1810
  %v1812 = vpop.f32.mrf.mxu0
  %1813 = vdwg.mxu0
  %1814 = vmatpush.bf16.msra.mxu0 %v1304
  %1815 = vmatpush.bf16.msra.mxu0 %v1288
  %1816 = vmatpush.bf16.msra.mxu0 %v1272
  %1817 = vmatpush.bf16.msra.mxu0 %v1256
  %1818 = vmatpush.bf16.msra.mxu0 %v1240
  %1819 = vmatpush.bf16.msra.mxu0 %v1224
  %1820 = vmatpush.bf16.msra.mxu0 %v1208
  %1821 = vmatpush.bf16.msra.mxu0 %v1192
  %1822 = vmatmul.bf16.gmra.mxu0 %v284
  %v1823 = vpop.f32.mrf.mxu0
  %v1824 = vadd.f32 %v1811, %v1823
  %v1825 = vpop.f32.mrf.mxu0
  %1826 = vdwg.mxu0
  %1827 = vmatpush.bf16.msra.mxu0 %v1177
  %1828 = vmatpush.bf16.msra.mxu0 %v1161
  %1829 = vmatpush.bf16.msra.mxu0 %v1145
  %1830 = vmatpush.bf16.msra.mxu0 %v1129
  %1831 = vmatpush.bf16.msra.mxu0 %v1113
  %1832 = vmatpush.bf16.msra.mxu0 %v1097
  %1833 = vmatpush.bf16.msra.mxu0 %v1081
  %1834 = vmatpush.bf16.msra.mxu0 %v1065
  %1835 = vmatmul.bf16.gmra.mxu0 %v283
  %v1836 = vpop.f32.mrf.mxu0
  %v1837 = vadd.f32 %v278, %v1836
  %v1838 = vpop.f32.mrf.mxu0
  %1839 = vdwg.mxu0
  %1840 = vmatpush.bf16.msra.mxu0 %v1305
  %1841 = vmatpush.bf16.msra.mxu0 %v1289
  %1842 = vmatpush.bf16.msra.mxu0 %v1273
  %1843 = vmatpush.bf16.msra.mxu0 %v1257
  %1844 = vmatpush.bf16.msra.mxu0 %v1241
  %1845 = vmatpush.bf16.msra.mxu0 %v1225
  %1846 = vmatpush.bf16.msra.mxu0 %v1209
  %1847 = vmatpush.bf16.msra.mxu0 %v1193
  %1848 = vmatmul.bf16.gmra.mxu0 %v284
  %v1849 = vpop.f32.mrf.mxu0
  %v1850 = vadd.f32 %v1837, %v1849
  %v1851 = vpop.f32.mrf.mxu0
  %1852 = vdwg.mxu0
  %1853 = vmatpush.bf16.msra.mxu0 %v1178
  %1854 = vmatpush.bf16.msra.mxu0 %v1162
  %1855 = vmatpush.bf16.msra.mxu0 %v1146
  %1856 = vmatpush.bf16.msra.mxu0 %v1130
  %1857 = vmatpush.bf16.msra.mxu0 %v1114
  %1858 = vmatpush.bf16.msra.mxu0 %v1098
  %1859 = vmatpush.bf16.msra.mxu0 %v1082
  %1860 = vmatpush.bf16.msra.mxu0 %v1066
  %1861 = vmatmul.bf16.gmra.mxu0 %v283
  %v1862 = vpop.f32.mrf.mxu0
  %v1863 = vadd.f32 %v278, %v1862
  %v1864 = vpop.f32.mrf.mxu0
  %1865 = vdwg.mxu0
  %1866 = vmatpush.bf16.msra.mxu0 %v1306
  %1867 = vmatpush.bf16.msra.mxu0 %v1290
  %1868 = vmatpush.bf16.msra.mxu0 %v1274
  %1869 = vmatpush.bf16.msra.mxu0 %v1258
  %1870 = vmatpush.bf16.msra.mxu0 %v1242
  %1871 = vmatpush.bf16.msra.mxu0 %v1226
  %1872 = vmatpush.bf16.msra.mxu0 %v1210
  %1873 = vmatpush.bf16.msra.mxu0 %v1194
  %1874 = vmatmul.bf16.gmra.mxu0 %v284
  %v1875 = vpop.f32.mrf.mxu0
  %v1876 = vadd.f32 %v1863, %v1875
  %v1877 = vpop.f32.mrf.mxu0
  %1878 = vdwg.mxu0
  %1879 = vmatpush.bf16.msra.mxu0 %v1179
  %1880 = vmatpush.bf16.msra.mxu0 %v1163
  %1881 = vmatpush.bf16.msra.mxu0 %v1147
  %1882 = vmatpush.bf16.msra.mxu0 %v1131
  %1883 = vmatpush.bf16.msra.mxu0 %v1115
  %1884 = vmatpush.bf16.msra.mxu0 %v1099
  %1885 = vmatpush.bf16.msra.mxu0 %v1083
  %1886 = vmatpush.bf16.msra.mxu0 %v1067
  %1887 = vmatmul.bf16.gmra.mxu0 %v283
  %v1888 = vpop.f32.mrf.mxu0
  %v1889 = vadd.f32 %v278, %v1888
  %v1890 = vpop.f32.mrf.mxu0
  %1891 = vdwg.mxu0
  %1892 = vmatpush.bf16.msra.mxu0 %v1307
  %1893 = vmatpush.bf16.msra.mxu0 %v1291
  %1894 = vmatpush.bf16.msra.mxu0 %v1275
  %1895 = vmatpush.bf16.msra.mxu0 %v1259
  %1896 = vmatpush.bf16.msra.mxu0 %v1243
  %1897 = vmatpush.bf16.msra.mxu0 %v1227
  %1898 = vmatpush.bf16.msra.mxu0 %v1211
  %1899 = vmatpush.bf16.msra.mxu0 %v1195
  %1900 = vmatmul.bf16.gmra.mxu0 %v284
  %v1901 = vpop.f32.mrf.mxu0
  %v1902 = vadd.f32 %v1889, %v1901
  %v1903 = vpop.f32.mrf.mxu0
  %1904 = vdwg.mxu0
  %1905 = vmatpush.bf16.msra.mxu0 %v1180
  %1906 = vmatpush.bf16.msra.mxu0 %v1164
  %1907 = vmatpush.bf16.msra.mxu0 %v1148
  %1908 = vmatpush.bf16.msra.mxu0 %v1132
  %1909 = vmatpush.bf16.msra.mxu0 %v1116
  %1910 = vmatpush.bf16.msra.mxu0 %v1100
  %1911 = vmatpush.bf16.msra.mxu0 %v1084
  %1912 = vmatpush.bf16.msra.mxu0 %v1068
  %1913 = vmatmul.bf16.gmra.mxu0 %v283
  %v1914 = vpop.f32.mrf.mxu0
  %v1915 = vadd.f32 %v278, %v1914
  %v1916 = vpop.f32.mrf.mxu0
  %1917 = vdwg.mxu0
  %1918 = vmatpush.bf16.msra.mxu0 %v1308
  %1919 = vmatpush.bf16.msra.mxu0 %v1292
  %1920 = vmatpush.bf16.msra.mxu0 %v1276
  %1921 = vmatpush.bf16.msra.mxu0 %v1260
  %1922 = vmatpush.bf16.msra.mxu0 %v1244
  %1923 = vmatpush.bf16.msra.mxu0 %v1228
  %1924 = vmatpush.bf16.msra.mxu0 %v1212
  %1925 = vmatpush.bf16.msra.mxu0 %v1196
  %1926 = vmatmul.bf16.gmra.mxu0 %v284
  %v1927 = vpop.f32.mrf.mxu0
  %v1928 = vadd.f32 %v1915, %v1927
  %v1929 = vpop.f32.mrf.mxu0
  %1930 = vdwg.mxu0
  %1931 = vmatpush.bf16.msra.mxu0 %v1181
  %1932 = vmatpush.bf16.msra.mxu0 %v1165
  %1933 = vmatpush.bf16.msra.mxu0 %v1149
  %1934 = vmatpush.bf16.msra.mxu0 %v1133
  %1935 = vmatpush.bf16.msra.mxu0 %v1117
  %1936 = vmatpush.bf16.msra.mxu0 %v1101
  %1937 = vmatpush.bf16.msra.mxu0 %v1085
  %1938 = vmatpush.bf16.msra.mxu0 %v1069
  %1939 = vmatmul.bf16.gmra.mxu0 %v283
  %v1940 = vpop.f32.mrf.mxu0
  %v1941 = vadd.f32 %v278, %v1940
  %v1942 = vpop.f32.mrf.mxu0
  %1943 = vdwg.mxu0
  %1944 = vmatpush.bf16.msra.mxu0 %v1309
  %1945 = vmatpush.bf16.msra.mxu0 %v1293
  %1946 = vmatpush.bf16.msra.mxu0 %v1277
  %1947 = vmatpush.bf16.msra.mxu0 %v1261
  %1948 = vmatpush.bf16.msra.mxu0 %v1245
  %1949 = vmatpush.bf16.msra.mxu0 %v1229
  %1950 = vmatpush.bf16.msra.mxu0 %v1213
  %1951 = vmatpush.bf16.msra.mxu0 %v1197
  %1952 = vmatmul.bf16.gmra.mxu0 %v284
  %v1953 = vpop.f32.mrf.mxu0
  %v1954 = vadd.f32 %v1941, %v1953
  %v1955 = vpop.f32.mrf.mxu0
  %1956 = vdwg.mxu0
  %1957 = vmatpush.bf16.msra.mxu0 %v1182
  %1958 = vmatpush.bf16.msra.mxu0 %v1166
  %1959 = vmatpush.bf16.msra.mxu0 %v1150
  %1960 = vmatpush.bf16.msra.mxu0 %v1134
  %1961 = vmatpush.bf16.msra.mxu0 %v1118
  %1962 = vmatpush.bf16.msra.mxu0 %v1102
  %1963 = vmatpush.bf16.msra.mxu0 %v1086
  %1964 = vmatpush.bf16.msra.mxu0 %v1070
  %1965 = vmatmul.bf16.gmra.mxu0 %v283
  %v1966 = vpop.f32.mrf.mxu0
  %v1967 = vadd.f32 %v278, %v1966
  %v1968 = vpop.f32.mrf.mxu0
  %1969 = vdwg.mxu0
  %1970 = vmatpush.bf16.msra.mxu0 %v1310
  %1971 = vmatpush.bf16.msra.mxu0 %v1294
  %1972 = vmatpush.bf16.msra.mxu0 %v1278
  %1973 = vmatpush.bf16.msra.mxu0 %v1262
  %1974 = vmatpush.bf16.msra.mxu0 %v1246
  %1975 = vmatpush.bf16.msra.mxu0 %v1230
  %1976 = vmatpush.bf16.msra.mxu0 %v1214
  %1977 = vmatpush.bf16.msra.mxu0 %v1198
  %1978 = vmatmul.bf16.gmra.mxu0 %v284
  %v1979 = vpop.f32.mrf.mxu0
  %v1980 = vadd.f32 %v1967, %v1979
  %v1981 = vpop.f32.mrf.mxu0
  %1982 = vdwg.mxu0
  %1983 = vst [vmem:[%s3] sm:$0xff] %v1590
  %1984 = vst [vmem:[%s3 + $0x8] sm:$0xff] %v1616
  %1985 = vst [vmem:[%s3 + $0x10] sm:$0xff] %v1642
  %1986 = vst [vmem:[%s3 + $0x18] sm:$0xff] %v1668
  %1987 = vst [vmem:[%s3 + $0x20] sm:$0xff] %v1694
  %1988 = vst [vmem:[%s3 + $0x28] sm:$0xff] %v1720
  %1989 = vst [vmem:[%s3 + $0x30] sm:$0xff] %v1746
  %1990 = vst [vmem:[%s3 + $0x38] sm:$0xff] %v1772
  %1991 = vst [vmem:[%s3 + $0x40] sm:$0xff] %v1798
  %1992 = vst [vmem:[%s3 + $0x48] sm:$0xff] %v1824
  %1993 = vst [vmem:[%s3 + $0x50] sm:$0xff] %v1850
  %1994 = vst [vmem:[%s3 + $0x58] sm:$0xff] %v1876
  %1995 = vst [vmem:[%s3 + $0x60] sm:$0xff] %v1902
  %1996 = vst [vmem:[%s3 + $0x68] sm:$0xff] %v1928
  %1997 = vst [vmem:[%s3 + $0x70] sm:$0xff] %v1954
  %1998 = vst [vmem:[%s3 + $0x78] sm:$0xff] %v1980
  %v1999 = vadd.f32 %v1590, %v1616
  %v2000 = vadd.f32 %v1999, %v1642
  %v2001 = vadd.f32 %v2000, %v1668
  %v2002 = vadd.f32 %v2001, %v1694
  %v2003 = vadd.f32 %v2002, %v1720
  %v2004 = vadd.f32 %v2003, %v1746
  %v2005 = vadd.f32 %v2004, %v1772
  %v2006 = vadd.f32 %v2005, %v1798
  %v2007 = vadd.f32 %v2006, %v1824
  %v2008 = vadd.f32 %v2007, %v1850
  %v2009 = vadd.f32 %v2008, %v1876
  %v2010 = vadd.f32 %v2009, %v1902
  %v2011 = vadd.f32 %v2010, %v1928
  %v2012 = vadd.f32 %v2011, %v1954
  %v2013 = vadd.f32 %v2012, %v1980
  %2014 = vadd.xlane.f32.xlu0 %v2013
  %v2015 = vpop.xlane.xlu0 %2014
  %vm2016 = vcmask 7168
  %2017 = vst.msk [vmem:[%s4] sm:$0xff] %vm2016, %v2015
  %v2018 = vmul.f32 %v1590, %v1590
  %v2019 = vmul.f32 %v1616, %v1616
  %v2020 = vmul.f32 %v1642, %v1642
  %v2021 = vmul.f32 %v1668, %v1668
  %v2022 = vmul.f32 %v1694, %v1694
  %v2023 = vmul.f32 %v1720, %v1720
  %v2024 = vmul.f32 %v1746, %v1746
  %v2025 = vmul.f32 %v1772, %v1772
  %v2026 = vmul.f32 %v1798, %v1798
  %v2027 = vmul.f32 %v1824, %v1824
  %v2028 = vmul.f32 %v1850, %v1850
  %v2029 = vmul.f32 %v1876, %v1876
  %v2030 = vmul.f32 %v1902, %v1902
  %v2031 = vmul.f32 %v1928, %v1928
  %v2032 = vmul.f32 %v1954, %v1954
  %v2033 = vmul.f32 %v1980, %v1980
  %v2034 = vadd.f32 %v2018, %v2019
  %v2035 = vadd.f32 %v2034, %v2020
  %v2036 = vadd.f32 %v2035, %v2021
  %v2037 = vadd.f32 %v2036, %v2022
  %v2038 = vadd.f32 %v2037, %v2023
  %v2039 = vadd.f32 %v2038, %v2024
  %v2040 = vadd.f32 %v2039, %v2025
  %v2041 = vadd.f32 %v2040, %v2026
  %v2042 = vadd.f32 %v2041, %v2027
  %v2043 = vadd.f32 %v2042, %v2028
  %v2044 = vadd.f32 %v2043, %v2029
  %v2045 = vadd.f32 %v2044, %v2030
  %v2046 = vadd.f32 %v2045, %v2031
  %v2047 = vadd.f32 %v2046, %v2032
  %v2048 = vadd.f32 %v2047, %v2033
  %2049 = vadd.xlane.f32.xlu0 %v2048
  %v2050 = vpop.xlane.xlu0 %2049
  %2051 = vst.msk [vmem:[%s5] sm:$0xff] %vm2016, %v2050
  // Predicated region
  $region14: #{generator_forward.15} parent=0 // pred_check
    _
  $region15: #{generator_forward.15} parent=0 // pred_check_branch
    %2053 = sbr.rel (0) target = $region17
  $region16: #{generator_forward.15} parent=0 // pred_region
    _
  $region17: #{generator_forward.15} parent=0 // pred_fallthru
    _
  // Predicated region
  $region18: #{generator_forward.15} parent=0 // pred_check
    _
  $region19: #{generator_forward.15} parent=0 // pred_check_branch
    %2055 = sbr.rel (0) target = $region21
  $region20: #{generator_forward.15} parent=0 // pred_region
    _
  $region21: #{generator_forward.15} parent=0 // pred_fallthru
    _
  // Predicated region
  $region22: #{generator_forward.15} parent=0 // pred_check
    _
  $region23: #{generator_forward.15} parent=0 // pred_check_branch
    %2057 = sbr.rel (0) target = $region25
  $region24: #{generator_forward.15} parent=0 // pred_region
    _
  $region25: #{generator_forward.15} parent=0 // pred_fallthru
    _
  // Predicated region
  $region26: #{generator_forward.15} parent=0 // pred_check
    _
  $region27: #{generator_forward.15} parent=0 // pred_check_branch
    %2059 = sbr.rel (0) target = $region29
  $region28: #{generator_forward.15} parent=0 // pred_region
    _
  $region29: #{generator_forward.15} parent=0 // pred_fallthru
    _
  // Predicated region
  $region30: #{generator_forward.15} parent=0 // pred_check
    _
  $region31: #{generator_forward.15} parent=0 // pred_check_branch
    %2061 = sbr.rel (0) target = $region33
  $region32: #{generator_forward.15} parent=0 // pred_region
    _
  $region33: #{generator_forward.15} parent=0 // pred_fallthru
    _
  // Predicated region
  $region34: #{generator_forward.15} parent=0 // pred_check
    _
  $region35: #{generator_forward.15} parent=0 // pred_check_branch
    %2063 = sbr.rel (0) target = $region37
  $region36: #{generator_forward.15} parent=0 // pred_region
    _
  $region37: #{generator_forward.15} parent=0 // pred_fallthru
    _

// kernel: generator_forward.17
$region0: #{generator_forward.17}
  #allocation0 [shape = 'u32[]', space=smem, size = 0x4, offset = 0x4, fixed_abs, tag = 'smem constant byte address 0x4 - core index']
  #allocation1 [shape = 'u32[72,128]{1,0:T(1,128)}', space=vmem, size = 0x9000, scoped, tag = 'internal scratch']
  %s0 = inlined_call_operand.vmem [shape: bf16[128,8192], index: 0, kind: input, shape index: {}]
  %s1 = inlined_call_operand.vmem [shape: bf16[3,128], index: 1, kind: input, shape index: {}]
  %s2 = inlined_call_operand.vmem [shape: f32[3,1], index: 2, kind: input, shape index: {}]
  %s3 = inlined_call_operand.vmem [shape: f32[3,8192], index: 3, kind: output, shape index: {}]
  %s4 = sld [smem:[#allocation0]]
  $region68: #{generator_forward.17} parent=0
    _
  %s6 = ssub.s32 1, %s4
  %s7 = scalar_select 0, %s6, %s4
  $region1: #{generator_forward.17} parent=0
    #allocation2 [shape = 'u8[1048576]{0}', space=vmem, size = 0x100000, scoped, tag = 'input window, operand 0']
    loop: start=0, step=1, limit=6
    $region2: #{generator_forward.17} parent=1 // loop_pre_header
      _
    $region3: #{generator_forward.17} parent=1 // loop_header
      %s9 = sphi 0, %s13
      %p10 = scmp.ge.s32.totalorder %s9, 6
      %s19 = sphi 0, %s21
      %s22 = sphi 0, %s19
      %s23 = sphi 0, %s22
      %s39 = sphi 0, %s23
      %s43 = sphi 0, %s43
      %s45 = sphi 0, %s43
      %s46 = sphi 0, %s45
      %s60 = sphi 0, %s46
      %s64 = sphi 0, %s64
      %s66 = sphi 0, %s64
      %s67 = sphi 0, %s66
      %s81 = sphi 0, %s67
      %s87 = sphi 0, %s89
      %s90 = sphi 0, %s87
      %s91 = sphi 0, %s90
      %s107 = sphi 0, %s91
    $region4: #{generator_forward.17} parent=1 // loop_header_branch
      %12 = sbr.rel (%p10) target = $region8
    $region5: #{generator_forward.17} parent=1 // loop_body
      %s14 = ssub.s32 %s9, 1
      %s15 = ssub.s32 %s9, 2
      %s16 = sadd.s32 %s9, 1
      %s17 = ssub.s32 %s9, %s16
      %p18 = scmp.eq.s32.totalorder %s17, 0
      %s20 = sadd.s32 %s19, 1
      %s21 = scalar_select %p18, %s19, %s20
      %p24 = pneg %p18
      %p25 = scmp.eq.s32.totalorder %s9, 3
      %p26 = por %p24, %p25
      %p27 = scmp.ne.s32.totalorder %s19, %s22
      %p28 = scmp.eq.s32.totalorder %s9, 0
      %p29 = por %p27, %p28
      %p30 = scmp.ne.s32.totalorder %s19, %s22
      %p31 = scmp.eq.s32.totalorder %s14, 3
      %p32 = por %p30, %p31
      %p33 = scmp.ne.s32.totalorder %s22, %s23
      %p34 = scmp.eq.s32.totalorder %s14, 0
      %p35 = por %p33, %p34
      %p36 = scmp.ne.s32.totalorder %s22, %s23
      %p37 = scmp.eq.s32.totalorder %s15, 3
      %p38 = por %p36, %p37
      %p40 = scmp.ne.s32.totalorder %s23, %s39
      %p41 = scmp.eq.s32.totalorder %s15, 0
      %p42 = por %p40, %p41
      %s44 = sadd.s32 %s43, 1
      %p47 = scmp.eq.s32.totalorder %s9, 3
      %p48 = scmp.ne.s32.totalorder %s43, %s45
      %p49 = scmp.eq.s32.totalorder %s9, 0
      %p50 = por %p48, %p49
      %p51 = scmp.ne.s32.totalorder %s43, %s45
      %p52 = scmp.eq.s32.totalorder %s14, 3
      %p53 = por %p51, %p52
      %p54 = scmp.ne.s32.totalorder %s45, %s46
      %p55 = scmp.eq.s32.totalorder %s14, 0
      %p56 = por %p54, %p55
      %p57 = scmp.ne.s32.totalorder %s45, %s46
      %p58 = scmp.eq.s32.totalorder %s15, 3
      %p59 = por %p57, %p58
      %p61 = scmp.ne.s32.totalorder %s46, %s60
      %p62 = scmp.eq.s32.totalorder %s15, 0
      %p63 = por %p61, %p62
      %s65 = sadd.s32 %s64, 1
      %p68 = scmp.eq.s32.totalorder %s9, 3
      %p69 = scmp.ne.s32.totalorder %s64, %s66
      %p70 = scmp.eq.s32.totalorder %s9, 0
      %p71 = por %p69, %p70
      %p72 = scmp.ne.s32.totalorder %s64, %s66
      %p73 = scmp.eq.s32.totalorder %s14, 3
      %p74 = por %p72, %p73
      %p75 = scmp.ne.s32.totalorder %s66, %s67
      %p76 = scmp.eq.s32.totalorder %s14, 0
      %p77 = por %p75, %p76
      %p78 = scmp.ne.s32.totalorder %s66, %s67
      %p79 = scmp.eq.s32.totalorder %s15, 3
      %p80 = por %p78, %p79
      %p82 = scmp.ne.s32.totalorder %s67, %s81
      %p83 = scmp.eq.s32.totalorder %s15, 0
      %p84 = por %p82, %p83
      %s85 = ssub.s32 %s9, %s16
      %p86 = scmp.eq.s32.totalorder %s85, 0
      %s88 = sadd.s32 %s87, 1
      %s89 = scalar_select %p86, %s87, %s88
      %p92 = pneg %p86
      %p93 = scmp.eq.s32.totalorder %s9, 3
      %p94 = por %p92, %p93
      %p95 = scmp.ne.s32.totalorder %s87, %s90
      %p96 = scmp.eq.s32.totalorder %s9, 0
      %p97 = por %p95, %p96
      %p98 = scmp.ne.s32.totalorder %s87, %s90
      %p99 = scmp.eq.s32.totalorder %s14, 3
      %p100 = por %p98, %p99
      %p101 = scmp.ne.s32.totalorder %s90, %s91
      %p102 = scmp.eq.s32.totalorder %s14, 0
      %p103 = por %p101, %p102
      %p104 = scmp.ne.s32.totalorder %s90, %s91
      %p105 = scmp.eq.s32.totalorder %s15, 3
      %p106 = por %p104, %p105
      %p108 = scmp.ne.s32.totalorder %s91, %s107
      %p109 = scmp.eq.s32.totalorder %s15, 0
      %p110 = por %p108, %p109
      %p111 = scmp.le.s32.totalorder 1, %s9
      %p112 = scmp.lt.s32.totalorder %s9, 5
      %p113 = pnand %p111, %p112
      %p114 = pneg %p113
      // Predicated region
      $region9: #{generator_forward.17} parent=5 // pred_check
        _
      $region10: #{generator_forward.17} parent=5 // pred_check_branch
        %116 = sbr.rel (%p113) target = $region12
      $region11: #{generator_forward.17} parent=5 // pred_region
        %s117 = ssub.s32 %s9, 1
        // Predicated region
        $region13: #{generator_forward.17} parent=11 // pred_check
          %p118 = pneg %p56
        $region14: #{generator_forward.17} parent=11 // pred_check_branch
          %120 = sbr.rel (%p118) target = $region16
        $region15: #{generator_forward.17} parent=11 // pred_region
          _
        $region16: #{generator_forward.17} parent=11 // pred_fallthru
          _
        // Predicated region
        $region17: #{generator_forward.17} parent=11 // pred_check
          %p121 = pneg %p77
        $region18: #{generator_forward.17} parent=11 // pred_check_branch
          %123 = sbr.rel (%p121) target = $region20
        $region19: #{generator_forward.17} parent=11 // pred_region
          _
        $region20: #{generator_forward.17} parent=11 // pred_fallthru
          _
      $region12: #{generator_forward.17} parent=5 // pred_fallthru
        _
      %p124 = scmp.lt.s32.totalorder %s9, 4
      // Predicated region
      $region21: #{generator_forward.17} parent=5 // pred_check
        %p125 = pneg %p124
      $region22: #{generator_forward.17} parent=5 // pred_check_branch
        %127 = sbr.rel (%p125) target = $region24
      $region23: #{generator_forward.17} parent=5 // pred_region
        // Predicated region
        $region25: #{generator_forward.17} parent=23 // pred_check
          %p128 = pneg %p29
        $region26: #{generator_forward.17} parent=23 // pred_check_branch
          %130 = sbr.rel (%p128) target = $region28
        $region27: #{generator_forward.17} parent=23 // pred_region
          %s131 = sand.u32 %s19, 1
          %s132 = sand.u32 %s19, 1
          %s133 = smul.addr %s132, 1024
          %s134 = scalar_lea.vmem [#allocation2], %s133
          %s135 = smul.u32 16, %s9
          %s136 = smul.addr %s135, 4
          %s137 = scalar_lea.vmem %s0, %s136
          // Predicated region
          $region29: #{generator_forward.17} parent=27 // pred_check
            _
          $region30: #{generator_forward.17} parent=27 // pred_check_branch
            %139 = sbr.rel (0) target = $region32
          $region31: #{generator_forward.17} parent=27 // pred_region
            // Predicated region
            $region33: #{generator_forward.17} parent=31 // pred_check
              _
            $region34: #{generator_forward.17} parent=31 // pred_check_branch
              %141 = sbr.rel (0) target = $region36
            $region35: #{generator_forward.17} parent=31 // pred_region
              loop: start=0, step=1, limit=1
              $region37: #{generator_forward.17} parent=35 // loop_pre_header
                _
              $region38: #{generator_forward.17} parent=35 // loop_header
                %s143 = sphi 0, %s147
                %p144 = scmp.ge.s32.totalorder %s143, 1
                %s148 = sphi %s137, %s137
                %s149 = sphi %s134, %s134
              $region39: #{generator_forward.17} parent=35 // loop_header_branch
                %146 = sbr.rel (%p144) target = $region43
              $region40: #{generator_forward.17} parent=35 // loop_body
                %v150 = vld [vmem:[%s148] sm:$0xff]
                %151 = vst [vmem:[%s149] sm:$0xff] %v150
                %v152 = vld [vmem:[%s148 + $0x8] sm:$0xff]
                %153 = vst [vmem:[%s149 + $0x8] sm:$0xff] %v152
                %v154 = vld [vmem:[%s148 + $0x10] sm:$0xff]
                %155 = vst [vmem:[%s149 + $0x10] sm:$0xff] %v154
                %v156 = vld [vmem:[%s148 + $0x18] sm:$0xff]
                %157 = vst [vmem:[%s149 + $0x18] sm:$0xff] %v156
                %v158 = vld [vmem:[%s148 + $0x20] sm:$0xff]
                %159 = vst [vmem:[%s149 + $0x20] sm:$0xff] %v158
                %v160 = vld [vmem:[%s148 + $0x28] sm:$0xff]
                %161 = vst [vmem:[%s149 + $0x28] sm:$0xff] %v160
                %v162 = vld [vmem:[%s148 + $0x30] sm:$0xff]
                %163 = vst [vmem:[%s149 + $0x30] sm:$0xff] %v162
                %v164 = vld [vmem:[%s148 + $0x38] sm:$0xff]
                %165 = vst [vmem:[%s149 + $0x38] sm:$0xff] %v164
                %v166 = vld [vmem:[%s148 + $0x100] sm:$0xff]
                %167 = vst [vmem:[%s149 + $0x40] sm:$0xff] %v166
                %v168 = vld [vmem:[%s148 + $0x108] sm:$0xff]
                %169 = vst [vmem:[%s149 + $0x48] sm:$0xff] %v168
                %v170 = vld [vmem:[%s148 + $0x110] sm:$0xff]
                %171 = vst [vmem:[%s149 + $0x50] sm:$0xff] %v170
                %v172 = vld [vmem:[%s148 + $0x118] sm:$0xff]
                %173 = vst [vmem:[%s149 + $0x58] sm:$0xff] %v172
                %v174 = vld [vmem:[%s148 + $0x120] sm:$0xff]
                %175 = vst [vmem:[%s149 + $0x60] sm:$0xff] %v174
                %v176 = vld [vmem:[%s148 + $0x128] sm:$0xff]
                %177 = vst [vmem:[%s149 + $0x68] sm:$0xff] %v176
                %v178 = vld [vmem:[%s148 + $0x130] sm:$0xff]
                %179 = vst [vmem:[%s149 + $0x70] sm:$0xff] %v178
                %v180 = vld [vmem:[%s148 + $0x138] sm:$0xff]
                %181 = vst [vmem:[%s149 + $0x78] sm:$0xff] %v180
                %v182 = vld [vmem:[%s148 + $0x200] sm:$0xff]
                %183 = vst [vmem:[%s149 + $0x80] sm:$0xff] %v182
                %v184 = vld [vmem:[%s148 + $0x208] sm:$0xff]
                %185 = vst [vmem:[%s149 + $0x88] sm:$0xff] %v184
                %v186 = vld [vmem:[%s148 + $0x210] sm:$0xff]
                %187 = vst [vmem:[%s149 + $0x90] sm:$0xff] %v186
                %v188 = vld [vmem:[%s148 + $0x218] sm:$0xff]
                %189 = vst [vmem:[%s149 + $0x98] sm:$0xff] %v188
                %v190 = vld [vmem:[%s148 + $0x220] sm:$0xff]
                %191 = vst [vmem:[%s149 + $0xa0] sm:$0xff] %v190
                %v192 = vld [vmem:[%s148 + $0x228] sm:$0xff]
                %193 = vst [vmem:[%s149 + $0xa8] sm:$0xff] %v192
                %v194 = vld [vmem:[%s148 + $0x230] sm:$0xff]
                %195 = vst [vmem:[%s149 + $0xb0] sm:$0xff] %v194
                %v196 = vld [vmem:[%s148 + $0x238] sm:$0xff]
                %197 = vst [vmem:[%s149 + $0xb8] sm:$0xff] %v196
                %v198 = vld [vmem:[%s148 + $0x300] sm:$0xff]
                %199 = vst [vmem:[%s149 + $0xc0] sm:$0xff] %v198
                %v200 = vld [vmem:[%s148 + $0x308] sm:$0xff]
                %201 = vst [vmem:[%s149 + $0xc8] sm:$0xff] %v200
                %v202 = vld [vmem:[%s148 + $0x310] sm:$0xff]
                %203 = vst [vmem:[%s149 + $0xd0] sm:$0xff] %v202
                %v204 = vld [vmem:[%s148 + $0x318] sm:$0xff]
                %205 = vst [vmem:[%s149 + $0xd8] sm:$0xff] %v204
                %v206 = vld [vmem:[%s148 + $0x320] sm:$0xff]
                %207 = vst [vmem:[%s149 + $0xe0] sm:$0xff] %v206
                %v208 = vld [vmem:[%s148 + $0x328] sm:$0xff]
                %209 = vst [vmem:[%s149 + $0xe8] sm:$0xff] %v208
                %v210 = vld [vmem:[%s148 + $0x330] sm:$0xff]
                %211 = vst [vmem:[%s149 + $0xf0] sm:$0xff] %v210
                %v212 = vld [vmem:[%s148 + $0x338] sm:$0xff]
                %213 = vst [vmem:[%s149 + $0xf8] sm:$0xff] %v212
                %v214 = vld [vmem:[%s148 + $0x400] sm:$0xff]
                %215 = vst [vmem:[%s149 + $0x100] sm:$0xff] %v214
                %v216 = vld [vmem:[%s148 + $0x408] sm:$0xff]
                %217 = vst [vmem:[%s149 + $0x108] sm:$0xff] %v216
                %v218 = vld [vmem:[%s148 + $0x410] sm:$0xff]
                %219 = vst [vmem:[%s149 + $0x110] sm:$0xff] %v218
                %v220 = vld [vmem:[%s148 + $0x418] sm:$0xff]
                %221 = vst [vmem:[%s149 + $0x118] sm:$0xff] %v220
                %v222 = vld [vmem:[%s148 + $0x420] sm:$0xff]
                %223 = vst [vmem:[%s149 + $0x120] sm:$0xff] %v222
                %v224 = vld [vmem:[%s148 + $0x428] sm:$0xff]
                %225 = vst [vmem:[%s149 + $0x128] sm:$0xff] %v224
                %v226 = vld [vmem:[%s148 + $0x430] sm:$0xff]
                %227 = vst [vmem:[%s149 + $0x130] sm:$0xff] %v226
                %v228 = vld [vmem:[%s148 + $0x438] sm:$0xff]
                %229 = vst [vmem:[%s149 + $0x138] sm:$0xff] %v228
                %v230 = vld [vmem:[%s148 + $0x500] sm:$0xff]
                %231 = vst [vmem:[%s149 + $0x140] sm:$0xff] %v230
                %v232 = vld [vmem:[%s148 + $0x508] sm:$0xff]
                %233 = vst [vmem:[%s149 + $0x148] sm:$0xff] %v232
                %v234 = vld [vmem:[%s148 + $0x510] sm:$0xff]
                %235 = vst [vmem:[%s149 + $0x150] sm:$0xff] %v234
                %v236 = vld [vmem:[%s148 + $0x518] sm:$0xff]
                %237 = vst [vmem:[%s149 + $0x158] sm:$0xff] %v236
                %v238 = vld [vmem:[%s148 + $0x520] sm:$0xff]
                %239 = vst [vmem:[%s149 + $0x160] sm:$0xff] %v238
                %v240 = vld [vmem:[%s148 + $0x528] sm:$0xff]
                %241 = vst [vmem:[%s149 + $0x168] sm:$0xff] %v240
                %v242 = vld [vmem:[%s148 + $0x530] sm:$0xff]
                %243 = vst [vmem:[%s149 + $0x170] sm:$0xff] %v242
                %v244 = vld [vmem:[%s148 + $0x538] sm:$0xff]
                %245 = vst [vmem:[%s149 + $0x178] sm:$0xff] %v244
                %v246 = vld [vmem:[%s148 + $0x600] sm:$0xff]
                %247 = vst [vmem:[%s149 + $0x180] sm:$0xff] %v246
                %v248 = vld [vmem:[%s148 + $0x608] sm:$0xff]
                %249 = vst [vmem:[%s149 + $0x188] sm:$0xff] %v248
                %v250 = vld [vmem:[%s148 + $0x610] sm:$0xff]
                %251 = vst [vmem:[%s149 + $0x190] sm:$0xff] %v250
                %v252 = vld [vmem:[%s148 + $0x618] sm:$0xff]
                %253 = vst [vmem:[%s149 + $0x198] sm:$0xff] %v252
                %v254 = vld [vmem:[%s148 + $0x620] sm:$0xff]
                %255 = vst [vmem:[%s149 + $0x1a0] sm:$0xff] %v254
                %v256 = vld [vmem:[%s148 + $0x628] sm:$0xff]
                %257 = vst [vmem:[%s149 + $0x1a8] sm:$0xff] %v256
                %v258 = vld [vmem:[%s148 + $0x630] sm:$0xff]
                %259 = vst [vmem:[%s149 + $0x1b0] sm:$0xff] %v258
                %v260 = vld [vmem:[%s148 + $0x638] sm:$0xff]
                %261 = vst [vmem:[%s149 + $0x1b8] sm:$0xff] %v260
                %v262 = vld [vmem:[%s148 + $0x700] sm:$0xff]
                %263 = vst [vmem:[%s149 + $0x1c0] sm:$0xff] %v262
                %v264 = vld [vmem:[%s148 + $0x708] sm:$0xff]
                %265 = vst [vmem:[%s149 + $0x1c8] sm:$0xff] %v264
                %v266 = vld [vmem:[%s148 + $0x710] sm:$0xff]
                %267 = vst [vmem:[%s149 + $0x1d0] sm:$0xff] %v266
                %v268 = vld [vmem:[%s148 + $0x718] sm:$0xff]
                %269 = vst [vmem:[%s149 + $0x1d8] sm:$0xff] %v268
                %v270 = vld [vmem:[%s148 + $0x720] sm:$0xff]
                %271 = vst [vmem:[%s149 + $0x1e0] sm:$0xff] %v270
                %v272 = vld [vmem:[%s148 + $0x728] sm:$0xff]
                %273 = vst [vmem:[%s149 + $0x1e8] sm:$0xff] %v272
                %v274 = vld [vmem:[%s148 + $0x730] sm:$0xff]
                %275 = vst [vmem:[%s149 + $0x1f0] sm:$0xff] %v274
                %v276 = vld [vmem:[%s148 + $0x738] sm:$0xff]
                %277 = vst [vmem:[%s149 + $0x1f8] sm:$0xff] %v276
                %v278 = vld [vmem:[%s148 + $0x800] sm:$0xff]
                %279 = vst [vmem:[%s149 + $0x200] sm:$0xff] %v278
                %v280 = vld [vmem:[%s148 + $0x808] sm:$0xff]
                %281 = vst [vmem:[%s149 + $0x208] sm:$0xff] %v280
                %v282 = vld [vmem:[%s148 + $0x810] sm:$0xff]
                %283 = vst [vmem:[%s149 + $0x210] sm:$0xff] %v282
                %v284 = vld [vmem:[%s148 + $0x818] sm:$0xff]
                %285 = vst [vmem:[%s149 + $0x218] sm:$0xff] %v284
                %v286 = vld [vmem:[%s148 + $0x820] sm:$0xff]
                %287 = vst [vmem:[%s149 + $0x220] sm:$0xff] %v286
                %v288 = vld [vmem:[%s148 + $0x828] sm:$0xff]
                %289 = vst [vmem:[%s149 + $0x228] sm:$0xff] %v288
                %v290 = vld [vmem:[%s148 + $0x830] sm:$0xff]
                %291 = vst [vmem:[%s149 + $0x230] sm:$0xff] %v290
                %v292 = vld [vmem:[%s148 + $0x838] sm:$0xff]
                %293 = vst [vmem:[%s149 + $0x238] sm:$0xff] %v292
                %v294 = vld [vmem:[%s148 + $0x900] sm:$0xff]
                %295 = vst [vmem:[%s149 + $0x240] sm:$0xff] %v294
                %v296 = vld [vmem:[%s148 + $0x908] sm:$0xff]
                %297 = vst [vmem:[%s149 + $0x248] sm:$0xff] %v296
                %v298 = vld [vmem:[%s148 + $0x910] sm:$0xff]
                %299 = vst [vmem:[%s149 + $0x250] sm:$0xff] %v298
                %v300 = vld [vmem:[%s148 + $0x918] sm:$0xff]
                %301 = vst [vmem:[%s149 + $0x258] sm:$0xff] %v300
                %v302 = vld [vmem:[%s148 + $0x920] sm:$0xff]
                %303 = vst [vmem:[%s149 + $0x260] sm:$0xff] %v302
                %v304 = vld [vmem:[%s148 + $0x928] sm:$0xff]
                %305 = vst [vmem:[%s149 + $0x268] sm:$0xff] %v304
                %v306 = vld [vmem:[%s148 + $0x930] sm:$0xff]
                %307 = vst [vmem:[%s149 + $0x270] sm:$0xff] %v306
                %v308 = vld [vmem:[%s148 + $0x938] sm:$0xff]
                %309 = vst [vmem:[%s149 + $0x278] sm:$0xff] %v308
                %v310 = vld [vmem:[%s148 + $0xa00] sm:$0xff]
                %311 = vst [vmem:[%s149 + $0x280] sm:$0xff] %v310
                %v312 = vld [vmem:[%s148 + $0xa08] sm:$0xff]
                %313 = vst [vmem:[%s149 + $0x288] sm:$0xff] %v312
                %v314 = vld [vmem:[%s148 + $0xa10] sm:$0xff]
                %315 = vst [vmem:[%s149 + $0x290] sm:$0xff] %v314
                %v316 = vld [vmem:[%s148 + $0xa18] sm:$0xff]
                %317 = vst [vmem:[%s149 + $0x298] sm:$0xff] %v316
                %v318 = vld [vmem:[%s148 + $0xa20] sm:$0xff]
                %319 = vst [vmem:[%s149 + $0x2a0] sm:$0xff] %v318
                %v320 = vld [vmem:[%s148 + $0xa28] sm:$0xff]
                %321 = vst [vmem:[%s149 + $0x2a8] sm:$0xff] %v320
                %v322 = vld [vmem:[%s148 + $0xa30] sm:$0xff]
                %323 = vst [vmem:[%s149 + $0x2b0] sm:$0xff] %v322
                %v324 = vld [vmem:[%s148 + $0xa38] sm:$0xff]
                %325 = vst [vmem:[%s149 + $0x2b8] sm:$0xff] %v324
                %v326 = vld [vmem:[%s148 + $0xb00] sm:$0xff]
                %327 = vst [vmem:[%s149 + $0x2c0] sm:$0xff] %v326
                %v328 = vld [vmem:[%s148 + $0xb08] sm:$0xff]
                %329 = vst [vmem:[%s149 + $0x2c8] sm:$0xff] %v328
                %v330 = vld [vmem:[%s148 + $0xb10] sm:$0xff]
                %331 = vst [vmem:[%s149 + $0x2d0] sm:$0xff] %v330
                %v332 = vld [vmem:[%s148 + $0xb18] sm:$0xff]
                %333 = vst [vmem:[%s149 + $0x2d8] sm:$0xff] %v332
                %v334 = vld [vmem:[%s148 + $0xb20] sm:$0xff]
                %335 = vst [vmem:[%s149 + $0x2e0] sm:$0xff] %v334
                %v336 = vld [vmem:[%s148 + $0xb28] sm:$0xff]
                %337 = vst [vmem:[%s149 + $0x2e8] sm:$0xff] %v336
                %v338 = vld [vmem:[%s148 + $0xb30] sm:$0xff]
                %339 = vst [vmem:[%s149 + $0x2f0] sm:$0xff] %v338
                %v340 = vld [vmem:[%s148 + $0xb38] sm:$0xff]
                %341 = vst [vmem:[%s149 + $0x2f8] sm:$0xff] %v340
                %v342 = vld [vmem:[%s148 + $0xc00] sm:$0xff]
                %343 = vst [vmem:[%s149 + $0x300] sm:$0xff] %v342
                %v344 = vld [vmem:[%s148 + $0xc08] sm:$0xff]
                %345 = vst [vmem:[%s149 + $0x308] sm:$0xff] %v344
                %v346 = vld [vmem:[%s148 + $0xc10] sm:$0xff]
                %347 = vst [vmem:[%s149 + $0x310] sm:$0xff] %v346
                %v348 = vld [vmem:[%s148 + $0xc18] sm:$0xff]
                %349 = vst [vmem:[%s149 + $0x318] sm:$0xff] %v348
                %v350 = vld [vmem:[%s148 + $0xc20] sm:$0xff]
                %351 = vst [vmem:[%s149 + $0x320] sm:$0xff] %v350
                %v352 = vld [vmem:[%s148 + $0xc28] sm:$0xff]
                %353 = vst [vmem:[%s149 + $0x328] sm:$0xff] %v352
                %v354 = vld [vmem:[%s148 + $0xc30] sm:$0xff]
                %355 = vst [vmem:[%s149 + $0x330] sm:$0xff] %v354
                %v356 = vld [vmem:[%s148 + $0xc38] sm:$0xff]
                %357 = vst [vmem:[%s149 + $0x338] sm:$0xff] %v356
                %v358 = vld [vmem:[%s148 + $0xd00] sm:$0xff]
                %359 = vst [vmem:[%s149 + $0x340] sm:$0xff] %v358
                %v360 = vld [vmem:[%s148 + $0xd08] sm:$0xff]
                %361 = vst [vmem:[%s149 + $0x348] sm:$0xff] %v360
                %v362 = vld [vmem:[%s148 + $0xd10] sm:$0xff]
                %363 = vst [vmem:[%s149 + $0x350] sm:$0xff] %v362
                %v364 = vld [vmem:[%s148 + $0xd18] sm:$0xff]
                %365 = vst [vmem:[%s149 + $0x358] sm:$0xff] %v364
                %v366 = vld [vmem:[%s148 + $0xd20] sm:$0xff]
                %367 = vst [vmem:[%s149 + $0x360] sm:$0xff] %v366
                %v368 = vld [vmem:[%s148 + $0xd28] sm:$0xff]
                %369 = vst [vmem:[%s149 + $0x368] sm:$0xff] %v368
                %v370 = vld [vmem:[%s148 + $0xd30] sm:$0xff]
                %371 = vst [vmem:[%s149 + $0x370] sm:$0xff] %v370
                %v372 = vld [vmem:[%s148 + $0xd38] sm:$0xff]
                %373 = vst [vmem:[%s149 + $0x378] sm:$0xff] %v372
                %v374 = vld [vmem:[%s148 + $0xe00] sm:$0xff]
                %375 = vst [vmem:[%s149 + $0x380] sm:$0xff] %v374
                %v376 = vld [vmem:[%s148 + $0xe08] sm:$0xff]
                %377 = vst [vmem:[%s149 + $0x388] sm:$0xff] %v376
                %v378 = vld [vmem:[%s148 + $0xe10] sm:$0xff]
                %379 = vst [vmem:[%s149 + $0x390] sm:$0xff] %v378
                %v380 = vld [vmem:[%s148 + $0xe18] sm:$0xff]
                %381 = vst [vmem:[%s149 + $0x398] sm:$0xff] %v380
                %v382 = vld [vmem:[%s148 + $0xe20] sm:$0xff]
                %383 = vst [vmem:[%s149 + $0x3a0] sm:$0xff] %v382
                %v384 = vld [vmem:[%s148 + $0xe28] sm:$0xff]
                %385 = vst [vmem:[%s149 + $0x3a8] sm:$0xff] %v384
                %v386 = vld [vmem:[%s148 + $0xe30] sm:$0xff]
                %387 = vst [vmem:[%s149 + $0x3b0] sm:$0xff] %v386
                %v388 = vld [vmem:[%s148 + $0xe38] sm:$0xff]
                %389 = vst [vmem:[%s149 + $0x3b8] sm:$0xff] %v388
                %v390 = vld [vmem:[%s148 + $0xf00] sm:$0xff]
                %391 = vst [vmem:[%s149 + $0x3c0] sm:$0xff] %v390
                %v392 = vld [vmem:[%s148 + $0xf08] sm:$0xff]
                %393 = vst [vmem:[%s149 + $0x3c8] sm:$0xff] %v392
                %v394 = vld [vmem:[%s148 + $0xf10] sm:$0xff]
                %395 = vst [vmem:[%s149 + $0x3d0] sm:$0xff] %v394
                %v396 = vld [vmem:[%s148 + $0xf18] sm:$0xff]
                %397 = vst [vmem:[%s149 + $0x3d8] sm:$0xff] %v396
                %v398 = vld [vmem:[%s148 + $0xf20] sm:$0xff]
                %399 = vst [vmem:[%s149 + $0x3e0] sm:$0xff] %v398
                %v400 = vld [vmem:[%s148 + $0xf28] sm:$0xff]
                %401 = vst [vmem:[%s149 + $0x3e8] sm:$0xff] %v400
                %v402 = vld [vmem:[%s148 + $0xf30] sm:$0xff]
                %403 = vst [vmem:[%s149 + $0x3f0] sm:$0xff] %v402
                %v404 = vld [vmem:[%s148 + $0xf38] sm:$0xff]
                %405 = vst [vmem:[%s149 + $0x3f8] sm:$0xff] %v404
              $region41: #{generator_forward.17} parent=35 // loop_footer
                %s147 = sadd.s32 1, %s143
              $region42: #{generator_forward.17} parent=35 // loop_footer_branch
                %142 = sbr.rel target = $region38
              $region43: #{generator_forward.17} parent=35 // loop_exit
                _
            $region36: #{generator_forward.17} parent=31 // pred_fallthru
              _
            // Predicated region
            $region44: #{generator_forward.17} parent=31 // pred_check
              _
            $region45: #{generator_forward.17} parent=31 // pred_check_branch
              %407 = sbr.rel target = $region47
            $region46: #{generator_forward.17} parent=31 // pred_region
              _
            $region47: #{generator_forward.17} parent=31 // pred_fallthru
              _
          $region32: #{generator_forward.17} parent=27 // pred_fallthru
            _
          %408 = vnop
        $region28: #{generator_forward.17} parent=23 // pred_fallthru
          _
      $region24: #{generator_forward.17} parent=5 // pred_fallthru
        _
      %p409 = scmp.le.s32.totalorder 1, %s9
      %p410 = scmp.lt.s32.totalorder %s9, 5
      %p411 = pnand %p409, %p410
      %p412 = pneg %p411
      // Predicated region
      $region48: #{generator_forward.17} parent=5 // pred_check
        _
      $region49: #{generator_forward.17} parent=5 // pred_check_branch
        %414 = sbr.rel (%p411) target = $region51
      $region50: #{generator_forward.17} parent=5 // pred_region
        %s415 = ssub.s32 %s9, 1
        %s416 = sand.u32 %s22, 1
        %s417 = sand.u32 %s22, 1
        %s418 = smul.addr %s417, 1024
        %s419 = scalar_lea.vmem [#allocation2], %s418
        // Predicated region
        $region52: #{generator_forward.17} parent=50 // pred_check
          %p420 = pneg %p35
        $region53: #{generator_forward.17} parent=50 // pred_check_branch
          %422 = sbr.rel (%p420) target = $region55
        $region54: #{generator_forward.17} parent=50 // pred_region
          _
        $region55: #{generator_forward.17} parent=50 // pred_fallthru
          _
        %s423 = sand.u32 %s22, 1
        %s424 = sand.u32 %s22, 1
        %s425 = smul.addr %s424, 1024
        %s426 = scalar_lea.vmem [#allocation2], %s425
        %p427 = pneg %p35
        %p428 = pneg %p32
        %p429 = pneg %p56
        %p430 = pneg %p53
        %p431 = pneg %p77
        %p432 = pneg %p74
        %p433 = pneg %p103
        %p434 = pneg %p100
        %s435 = smul.u32 16, %s14
        %p436 = scmp.lt.s32.totalorder %s435, 63
        %s437 = scalar_select %p436, %s435, 63
        %s438 = smul.addr %s437, 4
        %s439 = scalar_lea.vmem %s3, %s438
        %s440 = smul.u32 16, %s14
        %s441 = smul.u32 16, %s14
        %p442 = scmp.lt.s32.totalorder %s441, 63
        %s443 = scalar_select %p442, %s441, 63
        %s444 = smul.addr %s443, 4
        %s445 = scalar_lea.vmem %s3, %s444
        %s446 = smul.u32 16, %s14
        %v447 = vld [vmem:[%s1] sm:$0x3]
        %v448 = vld [vmem:[%s419] sm:$0xff]
        %v449 = vld [vmem:[%s419 + $0x8] sm:$0xff]
        %v450 = vld [vmem:[%s419 + $0x10] sm:$0xff]
        %v451 = vld [vmem:[%s419 + $0x18] sm:$0xff]
        %v452 = vld [vmem:[%s419 + $0x20] sm:$0xff]
        %v453 = vld [vmem:[%s419 + $0x28] sm:$0xff]
        %v454 = vld [vmem:[%s419 + $0x30] sm:$0xff]
        %v455 = vld [vmem:[%s419 + $0x38] sm:$0xff]
        %v456 = vld [vmem:[%s419 + $0x40] sm:$0xff]
        %v457 = vld [vmem:[%s419 + $0x48] sm:$0xff]
        %v458 = vld [vmem:[%s419 + $0x50] sm:$0xff]
        %v459 = vld [vmem:[%s419 + $0x58] sm:$0xff]
        %v460 = vld [vmem:[%s419 + $0x60] sm:$0xff]
        %v461 = vld [vmem:[%s419 + $0x68] sm:$0xff]
        %v462 = vld [vmem:[%s419 + $0x70] sm:$0xff]
        %v463 = vld [vmem:[%s419 + $0x78] sm:$0xff]
        %v464 = vld [vmem:[%s419 + $0x80] sm:$0xff]
        %v465 = vld [vmem:[%s419 + $0x88] sm:$0xff]
        %v466 = vld [vmem:[%s419 + $0x90] sm:$0xff]
        %v467 = vld [vmem:[%s419 + $0x98] sm:$0xff]
        %v468 = vld [vmem:[%s419 + $0xa0] sm:$0xff]
        %v469 = vld [vmem:[%s419 + $0xa8] sm:$0xff]
        %v470 = vld [vmem:[%s419 + $0xb0] sm:$0xff]
        %v471 = vld [vmem:[%s419 + $0xb8] sm:$0xff]
        %v472 = vld [vmem:[%s419 + $0xc0] sm:$0xff]
        %v473 = vld [vmem:[%s419 + $0xc8] sm:$0xff]
        %v474 = vld [vmem:[%s419 + $0xd0] sm:$0xff]
        %v475 = vld [vmem:[%s419 + $0xd8] sm:$0xff]
        %v476 = vld [vmem:[%s419 + $0xe0] sm:$0xff]
        %v477 = vld [vmem:[%s419 + $0xe8] sm:$0xff]
        %v478 = vld [vmem:[%s419 + $0xf0] sm:$0xff]
        %v479 = vld [vmem:[%s419 + $0xf8] sm:$0xff]
        %v480 = vld [vmem:[%s419 + $0x100] sm:$0xff]
        %v481 = vld [vmem:[%s419 + $0x108] sm:$0xff]
        %v482 = vld [vmem:[%s419 + $0x110] sm:$0xff]
        %v483 = vld [vmem:[%s419 + $0x118] sm:$0xff]
        %v484 = vld [vmem:[%s419 + $0x120] sm:$0xff]
        %v485 = vld [vmem:[%s419 + $0x128] sm:$0xff]
        %v486 = vld [vmem:[%s419 + $0x130] sm:$0xff]
        %v487 = vld [vmem:[%s419 + $0x138] sm:$0xff]
        %v488 = vld [vmem:[%s419 + $0x140] sm:$0xff]
        %v489 = vld [vmem:[%s419 + $0x148] sm:$0xff]
        %v490 = vld [vmem:[%s419 + $0x150] sm:$0xff]
        %v491 = vld [vmem:[%s419 + $0x158] sm:$0xff]
        %v492 = vld [vmem:[%s419 + $0x160] sm:$0xff]
        %v493 = vld [vmem:[%s419 + $0x168] sm:$0xff]
        %v494 = vld [vmem:[%s419 + $0x170] sm:$0xff]
        %v495 = vld [vmem:[%s419 + $0x178] sm:$0xff]
        %v496 = vld [vmem:[%s419 + $0x180] sm:$0xff]
        %v497 = vld [vmem:[%s419 + $0x188] sm:$0xff]
        %v498 = vld [vmem:[%s419 + $0x190] sm:$0xff]
        %v499 = vld [vmem:[%s419 + $0x198] sm:$0xff]
        %v500 = vld [vmem:[%s419 + $0x1a0] sm:$0xff]
        %v501 = vld [vmem:[%s419 + $0x1a8] sm:$0xff]
        %v502 = vld [vmem:[%s419 + $0x1b0] sm:$0xff]
        %v503 = vld [vmem:[%s419 + $0x1b8] sm:$0xff]
        %v504 = vld [vmem:[%s419 + $0x1c0] sm:$0xff]
        %v505 = vld [vmem:[%s419 + $0x1c8] sm:$0xff]
        %v506 = vld [vmem:[%s419 + $0x1d0] sm:$0xff]
        %v507 = vld [vmem:[%s419 + $0x1d8] sm:$0xff]
        %v508 = vld [vmem:[%s419 + $0x1e0] sm:$0xff]
        %v509 = vld [vmem:[%s419 + $0x1e8] sm:$0xff]
        %v510 = vld [vmem:[%s419 + $0x1f0] sm:$0xff]
        %v511 = vld [vmem:[%s419 + $0x1f8] sm:$0xff]
        %v512 = vld [vmem:[%s419 + $0x200] sm:$0xff]
        %v513 = vld [vmem:[%s419 + $0x208] sm:$0xff]
        %v514 = vld [vmem:[%s419 + $0x210] sm:$0xff]
        %v515 = vld [vmem:[%s419 + $0x218] sm:$0xff]
        %v516 = vld [vmem:[%s419 + $0x220] sm:$0xff]
        %v517 = vld [vmem:[%s419 + $0x228] sm:$0xff]
        %v518 = vld [vmem:[%s419 + $0x230] sm:$0xff]
        %v519 = vld [vmem:[%s419 + $0x238] sm:$0xff]
        %v520 = vld [vmem:[%s419 + $0x240] sm:$0xff]
        %v521 = vld [vmem:[%s419 + $0x248] sm:$0xff]
        %v522 = vld [vmem:[%s419 + $0x250] sm:$0xff]
        %v523 = vld [vmem:[%s419 + $0x258] sm:$0xff]
        %v524 = vld [vmem:[%s419 + $0x260] sm:$0xff]
        %v525 = vld [vmem:[%s419 + $0x268] sm:$0xff]
        %v526 = vld [vmem:[%s419 + $0x270] sm:$0xff]
        %v527 = vld [vmem:[%s419 + $0x278] sm:$0xff]
        %v528 = vld [vmem:[%s419 + $0x280] sm:$0xff]
        %v529 = vld [vmem:[%s419 + $0x288] sm:$0xff]
        %v530 = vld [vmem:[%s419 + $0x290] sm:$0xff]
        %v531 = vld [vmem:[%s419 + $0x298] sm:$0xff]
        %v532 = vld [vmem:[%s419 + $0x2a0] sm:$0xff]
        %v533 = vld [vmem:[%s419 + $0x2a8] sm:$0xff]
        %v534 = vld [vmem:[%s419 + $0x2b0] sm:$0xff]
        %v535 = vld [vmem:[%s419 + $0x2b8] sm:$0xff]
        %v536 = vld [vmem:[%s419 + $0x2c0] sm:$0xff]
        %v537 = vld [vmem:[%s419 + $0x2c8] sm:$0xff]
        %v538 = vld [vmem:[%s419 + $0x2d0] sm:$0xff]
        %v539 = vld [vmem:[%s419 + $0x2d8] sm:$0xff]
        %v540 = vld [vmem:[%s419 + $0x2e0] sm:$0xff]
        %v541 = vld [vmem:[%s419 + $0x2e8] sm:$0xff]
        %v542 = vld [vmem:[%s419 + $0x2f0] sm:$0xff]
        %v543 = vld [vmem:[%s419 + $0x2f8] sm:$0xff]
        %v544 = vld [vmem:[%s419 + $0x300] sm:$0xff]
        %v545 = vld [vmem:[%s419 + $0x308] sm:$0xff]
        %v546 = vld [vmem:[%s419 + $0x310] sm:$0xff]
        %v547 = vld [vmem:[%s419 + $0x318] sm:$0xff]
        %v548 = vld [vmem:[%s419 + $0x320] sm:$0xff]
        %v549 = vld [vmem:[%s419 + $0x328] sm:$0xff]
        %v550 = vld [vmem:[%s419 + $0x330] sm:$0xff]
        %v551 = vld [vmem:[%s419 + $0x338] sm:$0xff]
        %v552 = vld [vmem:[%s419 + $0x340] sm:$0xff]
        %v553 = vld [vmem:[%s419 + $0x348] sm:$0xff]
        %v554 = vld [vmem:[%s419 + $0x350] sm:$0xff]
        %v555 = vld [vmem:[%s419 + $0x358] sm:$0xff]
        %v556 = vld [vmem:[%s419 + $0x360] sm:$0xff]
        %v557 = vld [vmem:[%s419 + $0x368] sm:$0xff]
        %v558 = vld [vmem:[%s419 + $0x370] sm:$0xff]
        %v559 = vld [vmem:[%s419 + $0x378] sm:$0xff]
        %v560 = vld [vmem:[%s419 + $0x380] sm:$0xff]
        %v561 = vld [vmem:[%s419 + $0x388] sm:$0xff]
        %v562 = vld [vmem:[%s419 + $0x390] sm:$0xff]
        %v563 = vld [vmem:[%s419 + $0x398] sm:$0xff]
        %v564 = vld [vmem:[%s419 + $0x3a0] sm:$0xff]
        %v565 = vld [vmem:[%s419 + $0x3a8] sm:$0xff]
        %v566 = vld [vmem:[%s419 + $0x3b0] sm:$0xff]
        %v567 = vld [vmem:[%s419 + $0x3b8] sm:$0xff]
        %v568 = vld [vmem:[%s419 + $0x3c0] sm:$0xff]
        %v569 = vld [vmem:[%s419 + $0x3c8] sm:$0xff]
        %v570 = vld [vmem:[%s419 + $0x3d0] sm:$0xff]
        %v571 = vld [vmem:[%s419 + $0x3d8] sm:$0xff]
        %v572 = vld [vmem:[%s419 + $0x3e0] sm:$0xff]
        %v573 = vld [vmem:[%s419 + $0x3e8] sm:$0xff]
        %v574 = vld [vmem:[%s419 + $0x3f0] sm:$0xff]
        %v575 = vld [vmem:[%s419 + $0x3f8] sm:$0xff]
        %v576 = vld [vmem:[%s2] sm:$0x7]
        %578 = vset.pattern.permute.xlu0 0
        %579 = vperm.xlu0 %578, %v576
        %v580 = vpop.permute.xlu0 %579
        %v710 = vunpack.c.l.b16 %v448
        %v711 = vunpack.c.h.b16 %v448
        %v712 = vunpack.c.l.b16 %v449
        %v713 = vunpack.c.h.b16 %v449
        %v714 = vunpack.c.l.b16 %v450
        %v715 = vunpack.c.h.b16 %v450
        %v716 = vunpack.c.l.b16 %v451
        %v717 = vunpack.c.h.b16 %v451
        %v718 = vunpack.c.l.b16 %v452
        %v719 = vunpack.c.h.b16 %v452
        %v720 = vunpack.c.l.b16 %v453
        %v721 = vunpack.c.h.b16 %v453
        %v722 = vunpack.c.l.b16 %v454
        %v723 = vunpack.c.h.b16 %v454
        %v724 = vunpack.c.l.b16 %v455
        %v725 = vunpack.c.h.b16 %v455
        %v726 = vunpack.c.l.b16 %v456
        %v727 = vunpack.c.h.b16 %v456
        %v728 = vunpack.c.l.b16 %v457
        %v729 = vunpack.c.h.b16 %v457
        %v730 = vunpack.c.l.b16 %v458
        %v731 = vunpack.c.h.b16 %v458
        %v732 = vunpack.c.l.b16 %v459
        %v733 = vunpack.c.h.b16 %v459
        %v734 = vunpack.c.l.b16 %v460
        %v735 = vunpack.c.h.b16 %v460
        %v736 = vunpack.c.l.b16 %v461
        %v737 = vunpack.c.h.b16 %v461
        %v738 = vunpack.c.l.b16 %v462
        %v739 = vunpack.c.h.b16 %v462
        %v740 = vunpack.c.l.b16 %v463
        %v741 = vunpack.c.h.b16 %v463
        %v742 = vunpack.c.l.b16 %v464
        %v743 = vunpack.c.h.b16 %v464
        %v744 = vunpack.c.l.b16 %v465
        %v745 = vunpack.c.h.b16 %v465
        %v746 = vunpack.c.l.b16 %v466
        %v747 = vunpack.c.h.b16 %v466
        %v748 = vunpack.c.l.b16 %v467
        %v749 = vunpack.c.h.b16 %v467
        %v750 = vunpack.c.l.b16 %v468
        %v751 = vunpack.c.h.b16 %v468
        %v752 = vunpack.c.l.b16 %v469
        %v753 = vunpack.c.h.b16 %v469
        %v754 = vunpack.c.l.b16 %v470
        %v755 = vunpack.c.h.b16 %v470
        %v756 = vunpack.c.l.b16 %v471
        %v757 = vunpack.c.h.b16 %v471
        %v758 = vunpack.c.l.b16 %v472
        %v759 = vunpack.c.h.b16 %v472
        %v760 = vunpack.c.l.b16 %v473
        %v761 = vunpack.c.h.b16 %v473
        %v762 = vunpack.c.l.b16 %v474
        %v763 = vunpack.c.h.b16 %v474
        %v764 = vunpack.c.l.b16 %v475
        %v765 = vunpack.c.h.b16 %v475
        %v766 = vunpack.c.l.b16 %v476
        %v767 = vunpack.c.h.b16 %v476
        %v768 = vunpack.c.l.b16 %v477
        %v769 = vunpack.c.h.b16 %v477
        %v770 = vunpack.c.l.b16 %v478
        %v771 = vunpack.c.h.b16 %v478
        %v772 = vunpack.c.l.b16 %v479
        %v773 = vunpack.c.h.b16 %v479
        %v774 = vunpack.c.l.b16 %v480
        %v775 = vunpack.c.h.b16 %v480
        %v776 = vunpack.c.l.b16 %v481
        %v777 = vunpack.c.h.b16 %v481
        %v778 = vunpack.c.l.b16 %v482
        %v779 = vunpack.c.h.b16 %v482
        %v780 = vunpack.c.l.b16 %v483
        %v781 = vunpack.c.h.b16 %v483
        %v782 = vunpack.c.l.b16 %v484
        %v783 = vunpack.c.h.b16 %v484
        %v784 = vunpack.c.l.b16 %v485
        %v785 = vunpack.c.h.b16 %v485
        %v786 = vunpack.c.l.b16 %v486
        %v787 = vunpack.c.h.b16 %v486
        %v788 = vunpack.c.l.b16 %v487
        %v789 = vunpack.c.h.b16 %v487
        %v790 = vunpack.c.l.b16 %v488
        %v791 = vunpack.c.h.b16 %v488
        %v792 = vunpack.c.l.b16 %v489
        %v793 = vunpack.c.h.b16 %v489
        %v794 = vunpack.c.l.b16 %v490
        %v795 = vunpack.c.h.b16 %v490
        %v796 = vunpack.c.l.b16 %v491
        %v797 = vunpack.c.h.b16 %v491
        %v798 = vunpack.c.l.b16 %v492
        %v799 = vunpack.c.h.b16 %v492
        %v800 = vunpack.c.l.b16 %v493
        %v801 = vunpack.c.h.b16 %v493
        %v802 = vunpack.c.l.b16 %v494
        %v803 = vunpack.c.h.b16 %v494
        %v804 = vunpack.c.l.b16 %v495
        %v805 = vunpack.c.h.b16 %v495
        %v806 = vunpack.c.l.b16 %v496
        %v807 = vunpack.c.h.b16 %v496
        %v808 = vunpack.c.l.b16 %v497
        %v809 = vunpack.c.h.b16 %v497
        %v810 = vunpack.c.l.b16 %v498
        %v811 = vunpack.c.h.b16 %v498
        %v812 = vunpack.c.l.b16 %v499
        %v813 = vunpack.c.h.b16 %v499
        %v814 = vunpack.c.l.b16 %v500
        %v815 = vunpack.c.h.b16 %v500
        %v816 = vunpack.c.l.b16 %v501
        %v817 = vunpack.c.h.b16 %v501
        %v818 = vunpack.c.l.b16 %v502
        %v819 = vunpack.c.h.b16 %v502
        %v820 = vunpack.c.l.b16 %v503
        %v821 = vunpack.c.h.b16 %v503
        %v822 = vunpack.c.l.b16 %v504
        %v823 = vunpack.c.h.b16 %v504
        %v824 = vunpack.c.l.b16 %v505
        %v825 = vunpack.c.h.b16 %v505
        %v826 = vunpack.c.l.b16 %v506
        %v827 = vunpack.c.h.b16 %v506
        %v828 = vunpack.c.l.b16 %v507
        %v829 = vunpack.c.h.b16 %v507
        %v830 = vunpack.c.l.b16 %v508
        %v831 = vunpack.c.h.b16 %v508
        %v832 = vunpack.c.l.b16 %v509
        %v833 = vunpack.c.h.b16 %v509
        %v834 = vunpack.c.l.b16 %v510
        %v835 = vunpack.c.h.b16 %v510
        %v836 = vunpack.c.l.b16 %v511
        %v837 = vunpack.c.h.b16 %v511
        %v838 = vunpack.c.l.b16 %v512
        %v839 = vunpack.c.h.b16 %v512
        %v840 = vunpack.c.l.b16 %v513
        %v841 = vunpack.c.h.b16 %v513
        %v842 = vunpack.c.l.b16 %v514
        %v843 = vunpack.c.h.b16 %v514
        %v844 = vunpack.c.l.b16 %v515
        %v845 = vunpack.c.h.b16 %v515
        %v846 = vunpack.c.l.b16 %v516
        %v847 = vunpack.c.h.b16 %v516
        %v848 = vunpack.c.l.b16 %v517
        %v849 = vunpack.c.h.b16 %v517
        %v850 = vunpack.c.l.b16 %v518
        %v851 = vunpack.c.h.b16 %v518
        %v852 = vunpack.c.l.b16 %v519
        %v853 = vunpack.c.h.b16 %v519
        %v854 = vunpack.c.l.b16 %v520
        %v855 = vunpack.c.h.b16 %v520
        %v856 = vunpack.c.l.b16 %v521
        %v857 = vunpack.c.h.b16 %v521
        %v858 = vunpack.c.l.b16 %v522
        %v859 = vunpack.c.h.b16 %v522
        %v860 = vunpack.c.l.b16 %v523
        %v861 = vunpack.c.h.b16 %v523
        %v862 = vunpack.c.l.b16 %v524
        %v863 = vunpack.c.h.b16 %v524
        %v864 = vunpack.c.l.b16 %v525
        %v865 = vunpack.c.h.b16 %v525
        %v866 = vunpack.c.l.b16 %v526
        %v867 = vunpack.c.h.b16 %v526
        %v868 = vunpack.c.l.b16 %v527
        %v869 = vunpack.c.h.b16 %v527
        %v870 = vunpack.c.l.b16 %v528
        %v871 = vunpack.c.h.b16 %v528
        %v872 = vunpack.c.l.b16 %v529
        %v873 = vunpack.c.h.b16 %v529
        %v874 = vunpack.c.l.b16 %v530
        %v875 = vunpack.c.h.b16 %v530
        %v876 = vunpack.c.l.b16 %v531
        %v877 = vunpack.c.h.b16 %v531
        %v878 = vunpack.c.l.b16 %v532
        %v879 = vunpack.c.h.b16 %v532
        %v880 = vunpack.c.l.b16 %v533
        %v881 = vunpack.c.h.b16 %v533
        %v882 = vunpack.c.l.b16 %v534
        %v883 = vunpack.c.h.b16 %v534
        %v884 = vunpack.c.l.b16 %v535
        %v885 = vunpack.c.h.b16 %v535
        %v886 = vunpack.c.l.b16 %v536
        %v887 = vunpack.c.h.b16 %v536
        %v888 = vunpack.c.l.b16 %v537
        %v889 = vunpack.c.h.b16 %v537
        %v890 = vunpack.c.l.b16 %v538
        %v891 = vunpack.c.h.b16 %v538
        %v892 = vunpack.c.l.b16 %v539
        %v893 = vunpack.c.h.b16 %v539
        %v894 = vunpack.c.l.b16 %v540
        %v895 = vunpack.c.h.b16 %v540
        %v896 = vunpack.c.l.b16 %v541
        %v897 = vunpack.c.h.b16 %v541
        %v898 = vunpack.c.l.b16 %v542
        %v899 = vunpack.c.h.b16 %v542
        %v900 = vunpack.c.l.b16 %v543
        %v901 = vunpack.c.h.b16 %v543
        %v902 = vunpack.c.l.b16 %v544
        %v903 = vunpack.c.h.b16 %v544
        %v904 = vunpack.c.l.b16 %v545
        %v905 = vunpack.c.h.b16 %v545
        %v906 = vunpack.c.l.b16 %v546
        %v907 = vunpack.c.h.b16 %v546
        %v908 = vunpack.c.l.b16 %v547
        %v909 = vunpack.c.h.b16 %v547
        %v910 = vunpack.c.l.b16 %v548
        %v911 = vunpack.c.h.b16 %v548
        %v912 = vunpack.c.l.b16 %v549
        %v913 = vunpack.c.h.b16 %v549
        %v914 = vunpack.c.l.b16 %v550
        %v915 = vunpack.c.h.b16 %v550
        %v916 = vunpack.c.l.b16 %v551
        %v917 = vunpack.c.h.b16 %v551
        %v918 = vunpack.c.l.b16 %v552
        %v919 = vunpack.c.h.b16 %v552
        %v920 = vunpack.c.l.b16 %v553
        %v921 = vunpack.c.h.b16 %v553
        %v922 = vunpack.c.l.b16 %v554
        %v923 = vunpack.c.h.b16 %v554
        %v924 = vunpack.c.l.b16 %v555
        %v925 = vunpack.c.h.b16 %v555
        %v926 = vunpack.c.l.b16 %v556
        %v927 = vunpack.c.h.b16 %v556
        %v928 = vunpack.c.l.b16 %v557
        %v929 = vunpack.c.h.b16 %v557
        %v930 = vunpack.c.l.b16 %v558
        %v931 = vunpack.c.h.b16 %v558
        %v932 = vunpack.c.l.b16 %v559
        %v933 = vunpack.c.h.b16 %v559
        %v934 = vunpack.c.l.b16 %v560
        %v935 = vunpack.c.h.b16 %v560
        %v936 = vunpack.c.l.b16 %v561
        %v937 = vunpack.c.h.b16 %v561
        %v938 = vunpack.c.l.b16 %v562
        %v939 = vunpack.c.h.b16 %v562
        %v940 = vunpack.c.l.b16 %v563
        %v941 = vunpack.c.h.b16 %v563
        %v942 = vunpack.c.l.b16 %v564
        %v943 = vunpack.c.h.b16 %v564
        %v944 = vunpack.c.l.b16 %v565
        %v945 = vunpack.c.h.b16 %v565
        %v946 = vunpack.c.l.b16 %v566
        %v947 = vunpack.c.h.b16 %v566
        %v948 = vunpack.c.l.b16 %v567
        %v949 = vunpack.c.h.b16 %v567
        %v950 = vunpack.c.l.b16 %v568
        %v951 = vunpack.c.h.b16 %v568
        %v952 = vunpack.c.l.b16 %v569
        %v953 = vunpack.c.h.b16 %v569
        %v954 = vunpack.c.l.b16 %v570
        %v955 = vunpack.c.h.b16 %v570
        %v956 = vunpack.c.l.b16 %v571
        %v957 = vunpack.c.h.b16 %v571
        %v958 = vunpack.c.l.b16 %v572
        %v959 = vunpack.c.h.b16 %v572
        %v960 = vunpack.c.l.b16 %v573
        %v961 = vunpack.c.h.b16 %v573
        %v962 = vunpack.c.l.b16 %v574
        %v963 = vunpack.c.h.b16 %v574
        %v964 = vunpack.c.l.b16 %v575
        %v965 = vunpack.c.h.b16 %v575
        %v966 = vpack.c.b16 %v726, %v710
        %v967 = vpack.c.b16 %v727, %v711
        %v968 = vpack.c.b16 %v728, %v712
        %v969 = vpack.c.b16 %v729, %v713
        %v970 = vpack.c.b16 %v730, %v714
        %v971 = vpack.c.b16 %v731, %v715
        %v972 = vpack.c.b16 %v732, %v716
        %v973 = vpack.c.b16 %v733, %v717
        %v974 = vpack.c.b16 %v734, %v718
        %v975 = vpack.c.b16 %v735, %v719
        %v976 = vpack.c.b16 %v736, %v720
        %v977 = vpack.c.b16 %v737, %v721
        %v978 = vpack.c.b16 %v738, %v722
        %v979 = vpack.c.b16 %v739, %v723
        %v980 = vpack.c.b16 %v740, %v724
        %v981 = vpack.c.b16 %v741, %v725
        %v982 = vpack.c.b16 %v758, %v742
        %v983 = vpack.c.b16 %v759, %v743
        %v984 = vpack.c.b16 %v760, %v744
        %v985 = vpack.c.b16 %v761, %v745
        %v986 = vpack.c.b16 %v762, %v746
        %v987 = vpack.c.b16 %v763, %v747
        %v988 = vpack.c.b16 %v764, %v748
        %v989 = vpack.c.b16 %v765, %v749
        %v990 = vpack.c.b16 %v766, %v750
        %v991 = vpack.c.b16 %v767, %v751
        %v992 = vpack.c.b16 %v768, %v752
        %v993 = vpack.c.b16 %v769, %v753
        %v994 = vpack.c.b16 %v770, %v754
        %v995 = vpack.c.b16 %v771, %v755
        %v996 = vpack.c.b16 %v772, %v756
        %v997 = vpack.c.b16 %v773, %v757
        %v998 = vpack.c.b16 %v790, %v774
        %v999 = vpack.c.b16 %v791, %v775
        %v1000 = vpack.c.b16 %v792, %v776
        %v1001 = vpack.c.b16 %v793, %v777
        %v1002 = vpack.c.b16 %v794, %v778
        %v1003 = vpack.c.b16 %v795, %v779
        %v1004 = vpack.c.b16 %v796, %v780
        %v1005 = vpack.c.b16 %v797, %v781
        %v1006 = vpack.c.b16 %v798, %v782
        %v1007 = vpack.c.b16 %v799, %v783
        %v1008 = vpack.c.b16 %v800, %v784
        %v1009 = vpack.c.b16 %v801, %v785
        %v1010 = vpack.c.b16 %v802, %v786
        %v1011 = vpack.c.b16 %v803, %v787
        %v1012 = vpack.c.b16 %v804, %v788
        %v1013 = vpack.c.b16 %v805, %v789
        %v1014 = vpack.c.b16 %v822, %v806
        %v1015 = vpack.c.b16 %v823, %v807
        %v1016 = vpack.c.b16 %v824, %v808
        %v1017 = vpack.c.b16 %v825, %v809
        %v1018 = vpack.c.b16 %v826, %v810
        %v1019 = vpack.c.b16 %v827, %v811
        %v1020 = vpack.c.b16 %v828, %v812
        %v1021 = vpack.c.b16 %v829, %v813
        %v1022 = vpack.c.b16 %v830, %v814
        %v1023 = vpack.c.b16 %v831, %v815
        %v1024 = vpack.c.b16 %v832, %v816
        %v1025 = vpack.c.b16 %v833, %v817
        %v1026 = vpack.c.b16 %v834, %v818
        %v1027 = vpack.c.b16 %v835, %v819
        %v1028 = vpack.c.b16 %v836, %v820
        %v1029 = vpack.c.b16 %v837, %v821
        %v1030 = vpack.c.b16 %v854, %v838
        %v1031 = vpack.c.b16 %v855, %v839
        %v1032 = vpack.c.b16 %v856, %v840
        %v1033 = vpack.c.b16 %v857, %v841
        %v1034 = vpack.c.b16 %v858, %v842
        %v1035 = vpack.c.b16 %v859, %v843
        %v1036 = vpack.c.b16 %v860, %v844
        %v1037 = vpack.c.b16 %v861, %v845
        %v1038 = vpack.c.b16 %v862, %v846
        %v1039 = vpack.c.b16 %v863, %v847
        %v1040 = vpack.c.b16 %v864, %v848
        %v1041 = vpack.c.b16 %v865, %v849
        %v1042 = vpack.c.b16 %v866, %v850
        %v1043 = vpack.c.b16 %v867, %v851
        %v1044 = vpack.c.b16 %v868, %v852
        %v1045 = vpack.c.b16 %v869, %v853
        %v1046 = vpack.c.b16 %v886, %v870
        %v1047 = vpack.c.b16 %v887, %v871
        %v1048 = vpack.c.b16 %v888, %v872
        %v1049 = vpack.c.b16 %v889, %v873
        %v1050 = vpack.c.b16 %v890, %v874
        %v1051 = vpack.c.b16 %v891, %v875
        %v1052 = vpack.c.b16 %v892, %v876
        %v1053 = vpack.c.b16 %v893, %v877
        %v1054 = vpack.c.b16 %v894, %v878
        %v1055 = vpack.c.b16 %v895, %v879
        %v1056 = vpack.c.b16 %v896, %v880
        %v1057 = vpack.c.b16 %v897, %v881
        %v1058 = vpack.c.b16 %v898, %v882
        %v1059 = vpack.c.b16 %v899, %v883
        %v1060 = vpack.c.b16 %v900, %v884
        %v1061 = vpack.c.b16 %v901, %v885
        %v1062 = vpack.c.b16 %v918, %v902
        %v1063 = vpack.c.b16 %v919, %v903
        %v1064 = vpack.c.b16 %v920, %v904
        %v1065 = vpack.c.b16 %v921, %v905
        %v1066 = vpack.c.b16 %v922, %v906
        %v1067 = vpack.c.b16 %v923, %v907
        %v1068 = vpack.c.b16 %v924, %v908
        %v1069 = vpack.c.b16 %v925, %v909
        %v1070 = vpack.c.b16 %v926, %v910
        %v1071 = vpack.c.b16 %v927, %v911
        %v1072 = vpack.c.b16 %v928, %v912
        %v1073 = vpack.c.b16 %v929, %v913
        %v1074 = vpack.c.b16 %v930, %v914
        %v1075 = vpack.c.b16 %v931, %v915
        %v1076 = vpack.c.b16 %v932, %v916
        %v1077 = vpack.c.b16 %v933, %v917
        %v1078 = vpack.c.b16 %v950, %v934
        %v1079 = vpack.c.b16 %v951, %v935
        %v1080 = vpack.c.b16 %v952, %v936
        %v1081 = vpack.c.b16 %v953, %v937
        %v1082 = vpack.c.b16 %v954, %v938
        %v1083 = vpack.c.b16 %v955, %v939
        %v1084 = vpack.c.b16 %v956, %v940
        %v1085 = vpack.c.b16 %v957, %v941
        %v1086 = vpack.c.b16 %v958, %v942
        %v1087 = vpack.c.b16 %v959, %v943
        %v1088 = vpack.c.b16 %v960, %v944
        %v1089 = vpack.c.b16 %v961, %v945
        %v1090 = vpack.c.b16 %v962, %v946
        %v1091 = vpack.c.b16 %v963, %v947
        %v1092 = vpack.c.b16 %v964, %v948
        %v1093 = vpack.c.b16 %v965, %v949
        %1222 = vmatpush.bf16.msra.mxu0 %v1078
        %1223 = vmatpush.bf16.msra.mxu0 %v1062
        %1224 = vmatpush.bf16.msra.mxu0 %v1046
        %1225 = vmatpush.bf16.msra.mxu0 %v1030
        %1226 = vmatpush.bf16.msra.mxu0 %v1014
        %1227 = vmatpush.bf16.msra.mxu0 %v998
        %1228 = vmatpush.bf16.msra.mxu0 %v982
        %1229 = vmatpush.bf16.msra.mxu0 %v966
        %1230 = vmatmul.bf16.gmra.mxu0 %v447
        %v1231 = vpop.f32.mrf.mxu0
        %v1232 = vadd.f32 %v580, %v1231
        %v1233 = vpop.f32.mrf.mxu0
        %1234 = vdwg.mxu0
        %1235 = vmatpush.bf16.msra.mxu0 %v1079
        %1236 = vmatpush.bf16.msra.mxu0 %v1063
        %1237 = vmatpush.bf16.msra.mxu0 %v1047
        %1238 = vmatpush.bf16.msra.mxu0 %v1031
        %1239 = vmatpush.bf16.msra.mxu0 %v1015
        %1240 = vmatpush.bf16.msra.mxu0 %v999
        %1241 = vmatpush.bf16.msra.mxu0 %v983
        %1242 = vmatpush.bf16.msra.mxu0 %v967
        %1243 = vmatmul.bf16.gmra.mxu0 %v447
        %v1244 = vpop.f32.mrf.mxu0
        %v1245 = vadd.f32 %v580, %v1244
        %v1246 = vpop.f32.mrf.mxu0
        %1247 = vdwg.mxu0
        %1248 = vmatpush.bf16.msra.mxu0 %v1080
        %1249 = vmatpush.bf16.msra.mxu0 %v1064
        %1250 = vmatpush.bf16.msra.mxu0 %v1048
        %1251 = vmatpush.bf16.msra.mxu0 %v1032
        %1252 = vmatpush.bf16.msra.mxu0 %v1016
        %1253 = vmatpush.bf16.msra.mxu0 %v1000
        %1254 = vmatpush.bf16.msra.mxu0 %v984
        %1255 = vmatpush.bf16.msra.mxu0 %v968
        %1256 = vmatmul.bf16.gmra.mxu0 %v447
        %v1257 = vpop.f32.mrf.mxu0
        %v1258 = vadd.f32 %v580, %v1257
        %v1259 = vpop.f32.mrf.mxu0
        %1260 = vdwg.mxu0
        %1261 = vmatpush.bf16.msra.mxu0 %v1081
        %1262 = vmatpush.bf16.msra.mxu0 %v1065
        %1263 = vmatpush.bf16.msra.mxu0 %v1049
        %1264 = vmatpush.bf16.msra.mxu0 %v1033
        %1265 = vmatpush.bf16.msra.mxu0 %v1017
        %1266 = vmatpush.bf16.msra.mxu0 %v1001
        %1267 = vmatpush.bf16.msra.mxu0 %v985
        %1268 = vmatpush.bf16.msra.mxu0 %v969
        %1269 = vmatmul.bf16.gmra.mxu0 %v447
        %v1270 = vpop.f32.mrf.mxu0
        %v1271 = vadd.f32 %v580, %v1270
        %v1272 = vpop.f32.mrf.mxu0
        %1273 = vdwg.mxu0
        %1274 = vmatpush.bf16.msra.mxu0 %v1082
        %1275 = vmatpush.bf16.msra.mxu0 %v1066
        %1276 = vmatpush.bf16.msra.mxu0 %v1050
        %1277 = vmatpush.bf16.msra.mxu0 %v1034
        %1278 = vmatpush.bf16.msra.mxu0 %v1018
        %1279 = vmatpush.bf16.msra.mxu0 %v1002
        %1280 = vmatpush.bf16.msra.mxu0 %v986
        %1281 = vmatpush.bf16.msra.mxu0 %v970
        %1282 = vmatmul.bf16.gmra.mxu0 %v447
        %v1283 = vpop.f32.mrf.mxu0
        %v1284 = vadd.f32 %v580, %v1283
        %v1285 = vpop.f32.mrf.mxu0
        %1286 = vdwg.mxu0
        %1287 = vmatpush.bf16.msra.mxu0 %v1083
        %1288 = vmatpush.bf16.msra.mxu0 %v1067
        %1289 = vmatpush.bf16.msra.mxu0 %v1051
        %1290 = vmatpush.bf16.msra.mxu0 %v1035
        %1291 = vmatpush.bf16.msra.mxu0 %v1019
        %1292 = vmatpush.bf16.msra.mxu0 %v1003
        %1293 = vmatpush.bf16.msra.mxu0 %v987
        %1294 = vmatpush.bf16.msra.mxu0 %v971
        %1295 = vmatmul.bf16.gmra.mxu0 %v447
        %v1296 = vpop.f32.mrf.mxu0
        %v1297 = vadd.f32 %v580, %v1296
        %v1298 = vpop.f32.mrf.mxu0
        %1299 = vdwg.mxu0
        %1300 = vmatpush.bf16.msra.mxu0 %v1084
        %1301 = vmatpush.bf16.msra.mxu0 %v1068
        %1302 = vmatpush.bf16.msra.mxu0 %v1052
        %1303 = vmatpush.bf16.msra.mxu0 %v1036
        %1304 = vmatpush.bf16.msra.mxu0 %v1020
        %1305 = vmatpush.bf16.msra.mxu0 %v1004
        %1306 = vmatpush.bf16.msra.mxu0 %v988
        %1307 = vmatpush.bf16.msra.mxu0 %v972
        %1308 = vmatmul.bf16.gmra.mxu0 %v447
        %v1309 = vpop.f32.mrf.mxu0
        %v1310 = vadd.f32 %v580, %v1309
        %v1311 = vpop.f32.mrf.mxu0
        %1312 = vdwg.mxu0
        %1313 = vmatpush.bf16.msra.mxu0 %v1085
        %1314 = vmatpush.bf16.msra.mxu0 %v1069
        %1315 = vmatpush.bf16.msra.mxu0 %v1053
        %1316 = vmatpush.bf16.msra.mxu0 %v1037
        %1317 = vmatpush.bf16.msra.mxu0 %v1021
        %1318 = vmatpush.bf16.msra.mxu0 %v1005
        %1319 = vmatpush.bf16.msra.mxu0 %v989
        %1320 = vmatpush.bf16.msra.mxu0 %v973
        %1321 = vmatmul.bf16.gmra.mxu0 %v447
        %v1322 = vpop.f32.mrf.mxu0
        %v1323 = vadd.f32 %v580, %v1322
        %v1324 = vpop.f32.mrf.mxu0
        %1325 = vdwg.mxu0
        %1326 = vmatpush.bf16.msra.mxu0 %v1086
        %1327 = vmatpush.bf16.msra.mxu0 %v1070
        %1328 = vmatpush.bf16.msra.mxu0 %v1054
        %1329 = vmatpush.bf16.msra.mxu0 %v1038
        %1330 = vmatpush.bf16.msra.mxu0 %v1022
        %1331 = vmatpush.bf16.msra.mxu0 %v1006
        %1332 = vmatpush.bf16.msra.mxu0 %v990
        %1333 = vmatpush.bf16.msra.mxu0 %v974
        %1334 = vmatmul.bf16.gmra.mxu0 %v447
        %v1335 = vpop.f32.mrf.mxu0
        %v1336 = vadd.f32 %v580, %v1335
        %v1337 = vpop.f32.mrf.mxu0
        %1338 = vdwg.mxu0
        %1339 = vmatpush.bf16.msra.mxu0 %v1087
        %1340 = vmatpush.bf16.msra.mxu0 %v1071
        %1341 = vmatpush.bf16.msra.mxu0 %v1055
        %1342 = vmatpush.bf16.msra.mxu0 %v1039
        %1343 = vmatpush.bf16.msra.mxu0 %v1023
        %1344 = vmatpush.bf16.msra.mxu0 %v1007
        %1345 = vmatpush.bf16.msra.mxu0 %v991
        %1346 = vmatpush.bf16.msra.mxu0 %v975
        %1347 = vmatmul.bf16.gmra.mxu0 %v447
        %v1348 = vpop.f32.mrf.mxu0
        %v1349 = vadd.f32 %v580, %v1348
        %v1350 = vpop.f32.mrf.mxu0
        %1351 = vdwg.mxu0
        %1352 = vmatpush.bf16.msra.mxu0 %v1088
        %1353 = vmatpush.bf16.msra.mxu0 %v1072
        %1354 = vmatpush.bf16.msra.mxu0 %v1056
        %1355 = vmatpush.bf16.msra.mxu0 %v1040
        %1356 = vmatpush.bf16.msra.mxu0 %v1024
        %1357 = vmatpush.bf16.msra.mxu0 %v1008
        %1358 = vmatpush.bf16.msra.mxu0 %v992
        %1359 = vmatpush.bf16.msra.mxu0 %v976
        %1360 = vmatmul.bf16.gmra.mxu0 %v447
        %v1361 = vpop.f32.mrf.mxu0
        %v1362 = vadd.f32 %v580, %v1361
        %v1363 = vpop.f32.mrf.mxu0
        %1364 = vdwg.mxu0
        %1365 = vmatpush.bf16.msra.mxu0 %v1089
        %1366 = vmatpush.bf16.msra.mxu0 %v1073
        %1367 = vmatpush.bf16.msra.mxu0 %v1057
        %1368 = vmatpush.bf16.msra.mxu0 %v1041
        %1369 = vmatpush.bf16.msra.mxu0 %v1025
        %1370 = vmatpush.bf16.msra.mxu0 %v1009
        %1371 = vmatpush.bf16.msra.mxu0 %v993
        %1372 = vmatpush.bf16.msra.mxu0 %v977
        %1373 = vmatmul.bf16.gmra.mxu0 %v447
        %v1374 = vpop.f32.mrf.mxu0
        %v1375 = vadd.f32 %v580, %v1374
        %v1376 = vpop.f32.mrf.mxu0
        %1377 = vdwg.mxu0
        %1378 = vmatpush.bf16.msra.mxu0 %v1090
        %1379 = vmatpush.bf16.msra.mxu0 %v1074
        %1380 = vmatpush.bf16.msra.mxu0 %v1058
        %1381 = vmatpush.bf16.msra.mxu0 %v1042
        %1382 = vmatpush.bf16.msra.mxu0 %v1026
        %1383 = vmatpush.bf16.msra.mxu0 %v1010
        %1384 = vmatpush.bf16.msra.mxu0 %v994
        %1385 = vmatpush.bf16.msra.mxu0 %v978
        %1386 = vmatmul.bf16.gmra.mxu0 %v447
        %v1387 = vpop.f32.mrf.mxu0
        %v1388 = vadd.f32 %v580, %v1387
        %v1389 = vpop.f32.mrf.mxu0
        %1390 = vdwg.mxu0
        %1391 = vmatpush.bf16.msra.mxu0 %v1091
        %1392 = vmatpush.bf16.msra.mxu0 %v1075
        %1393 = vmatpush.bf16.msra.mxu0 %v1059
        %1394 = vmatpush.bf16.msra.mxu0 %v1043
        %1395 = vmatpush.bf16.msra.mxu0 %v1027
        %1396 = vmatpush.bf16.msra.mxu0 %v1011
        %1397 = vmatpush.bf16.msra.mxu0 %v995
        %1398 = vmatpush.bf16.msra.mxu0 %v979
        %1399 = vmatmul.bf16.gmra.mxu0 %v447
        %v1400 = vpop.f32.mrf.mxu0
        %v1401 = vadd.f32 %v580, %v1400
        %v1402 = vpop.f32.mrf.mxu0
        %1403 = vdwg.mxu0
        %1404 = vmatpush.bf16.msra.mxu0 %v1092
        %1405 = vmatpush.bf16.msra.mxu0 %v1076
        %1406 = vmatpush.bf16.msra.mxu0 %v1060
        %1407 = vmatpush.bf16.msra.mxu0 %v1044
        %1408 = vmatpush.bf16.msra.mxu0 %v1028
        %1409 = vmatpush.bf16.msra.mxu0 %v1012
        %1410 = vmatpush.bf16.msra.mxu0 %v996
        %1411 = vmatpush.bf16.msra.mxu0 %v980
        %1412 = vmatmul.bf16.gmra.mxu0 %v447
        %v1413 = vpop.f32.mrf.mxu0
        %v1414 = vadd.f32 %v580, %v1413
        %v1415 = vpop.f32.mrf.mxu0
        %1416 = vdwg.mxu0
        %1417 = vmatpush.bf16.msra.mxu0 %v1093
        %1418 = vmatpush.bf16.msra.mxu0 %v1077
        %1419 = vmatpush.bf16.msra.mxu0 %v1061
        %1420 = vmatpush.bf16.msra.mxu0 %v1045
        %1421 = vmatpush.bf16.msra.mxu0 %v1029
        %1422 = vmatpush.bf16.msra.mxu0 %v1013
        %1423 = vmatpush.bf16.msra.mxu0 %v997
        %1424 = vmatpush.bf16.msra.mxu0 %v981
        %1425 = vmatmul.bf16.gmra.mxu0 %v447
        %v1426 = vpop.f32.mrf.mxu0
        %v1427 = vadd.f32 %v580, %v1426
        %v1428 = vpop.f32.mrf.mxu0
        %1429 = vdwg.mxu0
        %v1430 = vtanh.pop %v1232
        %v1431 = vtanh.pop %v1245
        %v1432 = vtanh.pop %v1258
        %v1433 = vtanh.pop %v1271
        %v1434 = vtanh.pop %v1284
        %v1435 = vtanh.pop %v1297
        %v1436 = vtanh.pop %v1310
        %v1437 = vtanh.pop %v1323
        %v1438 = vtanh.pop %v1336
        %v1439 = vtanh.pop %v1349
        %v1440 = vtanh.pop %v1362
        %v1441 = vtanh.pop %v1375
        %v1442 = vtanh.pop %v1388
        %v1443 = vtanh.pop %v1401
        %v1444 = vtanh.pop %v1414
        %v1445 = vtanh.pop %v1427
        %v1462 = vrot.slane %v1431, 4
        %v1463 = vrot.slane %v1433, 4
        %v1464 = vrot.slane %v1435, 4
        %v1465 = vrot.slane %v1437, 4
        %v1466 = vrot.slane %v1439, 4
        %v1467 = vrot.slane %v1441, 4
        %v1468 = vrot.slane %v1443, 4
        %v1469 = vrot.slane %v1445, 4
        %vm1470 = vcmask 1043456
        %v1471 = vsel %vm1470, %v1430, %v1462
        %v1472 = vsel %vm1470, %v1432, %v1463
        %v1473 = vsel %vm1470, %v1434, %v1464
        %v1474 = vsel %vm1470, %v1436, %v1465
        %v1475 = vsel %vm1470, %v1438, %v1466
        %v1476 = vsel %vm1470, %v1440, %v1467
        %v1477 = vsel %vm1470, %v1442, %v1468
        %v1478 = vsel %vm1470, %v1444, %v1469
        %1487 = vst [vmem:[%s445] sm:$0x77] %v1471
        %1488 = vst [vmem:[%s445 + $0x8] sm:$0x77] %v1472
        %1489 = vst [vmem:[%s445 + $0x10] sm:$0x77] %v1473
        %1490 = vst [vmem:[%s445 + $0x18] sm:$0x77] %v1474
        %1491 = vst [vmem:[%s445 + $0x20] sm:$0x77] %v1475
        %1492 = vst [vmem:[%s445 + $0x28] sm:$0x77] %v1476
        %1493 = vst [vmem:[%s445 + $0x30] sm:$0x77] %v1477
        %1494 = vst [vmem:[%s445 + $0x38] sm:$0x77] %v1478
        %s1495 = smul.u32 16, %s14
        %p1496 = scmp.lt.s32.totalorder %s1495, 63
        %s1497 = scalar_select %p1496, %s1495, 63
        %s1498 = smul.addr %s1497, 4
        %s1499 = scalar_lea.vmem %s3, %s1498
        // Predicated region
        $region56: #{generator_forward.17} parent=50 // pred_check
          %p1500 = pneg %p100
        $region57: #{generator_forward.17} parent=50 // pred_check_branch
          %1502 = sbr.rel (%p1500) target = $region59
        $region58: #{generator_forward.17} parent=50 // pred_region
          %s1503 = smul.u32 16, %s14
        $region59: #{generator_forward.17} parent=50 // pred_fallthru
          _
      $region51: #{generator_forward.17} parent=5 // pred_fallthru
        _
      %p1504 = scmp.le.s32.totalorder 2, %s9
      // Predicated region
      $region60: #{generator_forward.17} parent=5 // pred_check
        %p1505 = pneg %p1504
      $region61: #{generator_forward.17} parent=5 // pred_check_branch
        %1507 = sbr.rel (%p1505) target = $region63
      $region62: #{generator_forward.17} parent=5 // pred_region
        %s1508 = ssub.s32 %s9, 2
        // Predicated region
        $region64: #{generator_forward.17} parent=62 // pred_check
          %p1509 = pneg %p106
        $region65: #{generator_forward.17} parent=62 // pred_check_branch
          %1511 = sbr.rel (%p1509) target = $region67
        $region66: #{generator_forward.17} parent=62 // pred_region
          %s1512 = smul.u32 16, %s15
          %p1513 = scmp.lt.s32.totalorder %s1512, 63
          %s1514 = scalar_select %p1513, %s1512, 63
          %s1515 = smul.addr %s1514, 4
          %s1516 = scalar_lea.vmem %s3, %s1515
        $region67: #{generator_forward.17} parent=62 // pred_fallthru
          _
      $region63: #{generator_forward.17} parent=5 // pred_fallthru
        _
    $region6: #{generator_forward.17} parent=1 // loop_footer
      %s13 = sadd.s32 1, %s9
    $region7: #{generator_forward.17} parent=1 // loop_footer_branch
      %8 = sbr.rel target = $region3
    $region8: #{generator_forward.17} parent=1 // loop_exit
      _

</llo_original>
